<compile_context>
chip_gen: v7x
topology: tpu7x:2x2x1
jax: 0.10.0
libtpu: 0.0.40
codegen_flags: <defaults>
</compile_context>

<pallas_src>
import jax
import jax.numpy as jnp
import numpy as np
from jax.experimental import pallas as pl
from jax.experimental.pallas import tpu as pltpu

KSIZE = 4
NUM_LAYERS = 5
STRIDES = (2, 2, 2, 2, 1)
PADS = (1, 1, 1, 1, 0)


def _round_up(x, m):
    return ((x + m - 1) // m) * m


# --------------------------------------------------------------------------
# Fused kernel: all 5 conv+LeakyReLU layers for one image per grid step.
# --------------------------------------------------------------------------
def _fused_discriminator_kernel(x_ref, *refs):
    """refs = (F1, Q1, b1, ..., F4, Q4, b4, W5, b5, out_ref)."""
    out_ref = refs[-1]
    op = refs[:-1]

    a = x_ref[0]                                   # (W, CHp); lanes = CHp >= 256
    for l in range(NUM_LAYERS - 1):
        f_ref, q_ref, b_ref = op[3 * l], op[3 * l + 1], op[3 * l + 2]
        wo = f_ref.shape[0] // KSIZE               # F_all: (k*Wo, W)

        # Width-window gather for all k taps in one dot: (k*Wo, W) @ (W, CHp).
        g = jnp.dot(f_ref[...], a, preferred_element_type=jnp.float32)
        # Re-block taps from sublanes to lanes: (Wo, k*CHp). CHp is a multiple
        # of 128, so every concat offset is lane-tile aligned.
        ghat = jnp.concatenate(
            [g[kx * wo:(kx + 1) * wo, :] for kx in range(KSIZE)], axis=-1)
        # Row-window x channel contraction for all taps in one dot:
        # (Wo, k*CHp) @ (k*CHp, O*Ho); tap-sum accumulates inside the MXU.
        acc = jnp.dot(ghat, q_ref[...], preferred_element_type=jnp.float32)
        acc = acc + b_ref[...]                     # bias, broadcast over Wo rows
        a = jnp.maximum(acc, 0.2 * acc)            # LeakyReLU(0.2)

    # Final 4x4 "valid" conv producing a single scalar: weighted sum on the
    # VPU/XLU (avoids degenerate M=1 / N=1 matmuls), then bias + LeakyReLU.
    w5_ref, b5_ref = op[-2], op[-1]
    s = jnp.sum(a * w5_ref[...], axis=1, keepdims=True)     # (W5, 1)
    s = jnp.sum(s, axis=0, keepdims=True) + b5_ref[...]     # (1, 1)
    out_ref[0] = jnp.maximum(s, 0.2 * s).astype(out_ref.dtype)


# --------------------------------------------------------------------------
# Host-side precomputation of the structured matrices (once per param set).
# --------------------------------------------------------------------------
def _conv_layer_operands(weight, bias, h, w_in, stride, pad, chp_in):
    """Builds (F_all, Q_big, bias_row) for one strided Conv2d(k=4) layer.

    With activation layout A[s, c*H + r] = act[c, r, s] (columns zero-padded to
    chp_in), the kernel computes
        conv_out[o, y, x] = (concat_kx(F_kx @ A) @ Q_big)[x, o*Ho + y].
    Zero padding is absorbed into zero rows/entries of F and Q.
    """
    o_ch, c_ch, k, _ = weight.shape
    weight = np.asarray(weight, np.float32)
    bias = np.asarray(bias, np.float32)
    ho = (h + 2 * pad - k) // stride + 1
    wo = (w_in + 2 * pad - k) // stride + 1

    # F_all[kx*Wo + x, s] = 1  iff  s == stride*x + kx - pad  (0 <= s < W)
    f_mat = np.zeros((k * wo, w_in), np.float32)
    xs = np.arange(wo)
    for kx in range(k):
        s = stride * xs + kx - pad
        m = (s >= 0) & (s < w_in)
        f_mat[kx * wo + xs[m], s[m]] = 1.0

    # Q_big[kx*CHp + c*H + r, o*Ho + y] = weight[o, c, r - stride*y + pad, kx]
    q_mat = np.zeros((k * chp_in, o_ch * ho), np.float32)
    ys = np.arange(ho)
    for kx in range(k):
        for ky in range(k):
            r = stride * ys + ky - pad
            m = (r >= 0) & (r < h)
            yv, rv = ys[m], r[m]
            if yv.size == 0:
                continue
            rows = kx * chp_in + (np.arange(c_ch)[:, None] * h + rv[None, :])  # (C, Y)
            cols = np.arange(o_ch)[:, None] * ho + yv[None, :]                 # (O, Y)
            q_mat[rows[None, :, :], cols[:, None, :]] = \
                weight[:, :, ky, kx][:, :, None]

    bias_row = np.repeat(bias, ho)[None, :].astype(np.float32)                 # (1, O*Ho)
    return f_mat, q_mat, bias_row, ho, wo, o_ch


def build_operands(params, nc=3, imsize=64):
    """Precompute the per-layer operands for the fused kernel."""
    ops = []
    h = w = imsize
    c = nc
    chp = _round_up(c * h, 128)        # layer-1 activations are padded to this
    for li, ((weight, bias), stride, pad) in enumerate(zip(params, STRIDES, PADS)):
        weight = np.asarray(weight, np.float32)
        bias = np.asarray(bias, np.float32)
        if li < NUM_LAYERS - 1:
            f_mat, q_mat, b_row, ho, wo, o_ch = _conv_layer_operands(
                weight, bias, h, w, stride, pad, chp)
            ops += [jnp.asarray(f_mat), jnp.asarray(q_mat), jnp.asarray(b_row)]
            h, w, c = ho, wo, o_ch
            chp = c * h                # == O*Ho of this layer (256 here)
        else:
            # Final 4x4 "valid" conv with a 1x1 output map: plain weighted sum.
            o_ch, c_ch, k, _ = weight.shape
            assert (h, w) == (k, k) and stride == 1 and pad == 0 and o_ch == 1
            assert c_ch * h == chp
            w_mat = np.transpose(weight[0], (2, 0, 1)).reshape(k, c_ch * h)  # (W, C*H)
            ops += [jnp.asarray(w_mat), jnp.asarray(bias.reshape(1, 1))]
            h, w, c = 1, 1, 1
    assert (h, w, c) == (1, 1, 1), (h, w, c)
    return tuple(ops)


# --------------------------------------------------------------------------
# Forward pass (conditional=False, policy=None path of the PyTorch module).
# --------------------------------------------------------------------------
@jax.jit
def discriminator_forward(x, operands):
    """x: (N, 3, H, W) NCHW float32 -> (N, 1, 1, 1)."""
    n, c, h, w = x.shape
    chp0 = operands[1].shape[0] // KSIZE            # padded C*H expected by layer 1
    # Single layout change at the input: NCHW -> per-image (W, C*H) matrix with
    # a0[n, s, c*H + r] = x[n, c, r, s]; columns zero-padded to a 128 multiple.
    a0 = x.transpose(0, 3, 1, 2).reshape(n, w, c * h)
    if chp0 > c * h:
        a0 = jnp.pad(a0, ((0, 0), (0, 0), (0, chp0 - c * h)))

    in_specs = [pl.BlockSpec((1, w, chp0), lambda i: (i, 0, 0))]
    bytes_accessed = a0.size * 4 + n * 4
    for arr in operands:
        in_specs.append(pl.BlockSpec(arr.shape, lambda i: (0, 0)))
        bytes_accessed += arr.size * 4

    flops = 0
    for l in range(NUM_LAYERS - 1):
        f_mat, q_mat = operands[3 * l], operands[3 * l + 1]
        k_wo, w_l = f_mat.shape
        k_chp, oho = q_mat.shape
        wo = k_wo // KSIZE
        flops += 2 * n * (k_wo * w_l * (k_chp // KSIZE) + wo * k_chp * oho)
    flops += 2 * n * operands[-2].size              # final weighted sum

    out = pl.pallas_call(
        _fused_discriminator_kernel,
        out_shape=jax.ShapeDtypeStruct((n, 1, 1), jnp.float32),
        grid=(n,),
        in_specs=in_specs,
        out_specs=pl.BlockSpec((1, 1, 1), lambda i: (i, 0, 0)),
        compiler_params=pltpu.CompilerParams(
            dimension_semantics=("parallel",),
            vmem_limit_bytes=32 * 1024 * 1024),
        cost_estimate=pl.CostEstimate(
            flops=int(flops), transcendentals=0,
            bytes_accessed=int(bytes_accessed)),
    )(a0, *operands)
    return out.reshape(n, 1, 1, 1)


# --------------------------------------------------------------------------
# Parameter init (DCGAN-style N(0, 0.02)) and pure-JAX reference for checking.
# --------------------------------------------------------------------------
def init_params(key, ndf=8, nc=3):
    specs = [
        (ndf,     nc,      4),
        (ndf * 2, ndf,     4),
        (ndf * 4, ndf * 2, 4),
        (ndf * 8, ndf * 4, 4),
        (1,       ndf * 8, 4),   # conditional=False -> out_channels = 1
    ]
    params = []
    for (o, c, k) in specs:
        key, wk, bk = jax.random.split(key, 3)
        w = 0.02 * jax.random.normal(wk, (o, c, k, k), jnp.float32)
        b = 0.02 * jax.random.normal(bk, (o,), jnp.float32)
        params.append((w, b))
    return params


def _reference_forward(x, params):
    out = x
    for (w, b), s, p in zip(params, STRIDES, PADS):
        out = jax.lax.conv_general_dilated(
            out, w, window_strides=(s, s), padding=[(p, p), (p, p)],
            dimension_numbers=("NCHW", "OIHW", "NCHW"),
            precision=jax.lax.Precision.HIGHEST)
        out = out + b.reshape(1, -1, 1, 1)
        out = jnp.maximum(out, 0.2 * out)
    return out


if __name__ == "__main__":
    key = jax.random.PRNGKey(0)
    kx_key, kp_key = jax.random.split(key)
    # imsize must be 64 so the final 4x4 valid conv sees a 4x4 map; keep ndf small.
    batch, nc, imsize, ndf = 2, 3, 64, 8
    x = jax.random.normal(kx_key, (batch, nc, imsize, imsize), jnp.float32)
    params = init_params(kp_key, ndf=ndf, nc=nc)
    operands = build_operands(params, nc=nc, imsize=imsize)

    out = jax.block_until_ready(discriminator_forward(x, operands))
    assert out.shape == (batch, 1, 1, 1), out.shape
    assert bool(jnp.all(jnp.isfinite(out)))

    ref = jax.block_until_ready(_reference_forward(x, params))
    assert bool(jnp.allclose(out, ref, atol=1e-4, rtol=1e-2)), (out, ref)
    print("KERNEL_OK")
</pallas_src>

<mosaic_0001>
module attributes {stable_mosaic.version = 11 : i64} {
  func.func @_fused_discriminator_kernel(%arg0: i32, %arg1: memref<1x64x256xf32, #tpu.memory_space<vmem>>, %arg2: memref<128x64xf32, #tpu.memory_space<vmem>>, %arg3: memref<1024x256xf32, #tpu.memory_space<vmem>>, %arg4: memref<1x256xf32, #tpu.memory_space<vmem>>, %arg5: memref<64x32xf32, #tpu.memory_space<vmem>>, %arg6: memref<1024x256xf32, #tpu.memory_space<vmem>>, %arg7: memref<1x256xf32, #tpu.memory_space<vmem>>, %arg8: memref<32x16xf32, #tpu.memory_space<vmem>>, %arg9: memref<1024x256xf32, #tpu.memory_space<vmem>>, %arg10: memref<1x256xf32, #tpu.memory_space<vmem>>, %arg11: memref<16x8xf32, #tpu.memory_space<vmem>>, %arg12: memref<1024x256xf32, #tpu.memory_space<vmem>>, %arg13: memref<1x256xf32, #tpu.memory_space<vmem>>, %arg14: memref<4x256xf32, #tpu.memory_space<vmem>>, %arg15: memref<1x1xf32, #tpu.memory_space<vmem>>, %arg16: memref<1x1x1xf32, #tpu.memory_space<vmem>>) attributes {dimension_semantics = [#tpu.dimension_semantics<parallel>], iteration_bounds = array<i64: 2>, scalar_prefetch = 0 : i64, scratch_operands = 0 : i64, tpu.core_type = #tpu.core_type<tc>, window_params = [{transform_indices = @transform_0, window_bounds = array<i64: 1, 64, 256>}, {pipeline_mode = #tpu.pipeline_mode<synchronous>, transform_indices = @transform_1, window_bounds = array<i64: 128, 64>}, {pipeline_mode = #tpu.pipeline_mode<synchronous>, transform_indices = @transform_2, window_bounds = array<i64: 1024, 256>}, {pipeline_mode = #tpu.pipeline_mode<synchronous>, transform_indices = @transform_3, window_bounds = array<i64: 1, 256>}, {pipeline_mode = #tpu.pipeline_mode<synchronous>, transform_indices = @transform_4, window_bounds = array<i64: 64, 32>}, {pipeline_mode = #tpu.pipeline_mode<synchronous>, transform_indices = @transform_5, window_bounds = array<i64: 1024, 256>}, {pipeline_mode = #tpu.pipeline_mode<synchronous>, transform_indices = @transform_6, window_bounds = array<i64: 1, 256>}, {pipeline_mode = #tpu.pipeline_mode<synchronous>, transform_indices = @transform_7, window_bounds = array<i64: 32, 16>}, {pipeline_mode = #tpu.pipeline_mode<synchronous>, transform_indices = @transform_8, window_bounds = array<i64: 1024, 256>}, {pipeline_mode = #tpu.pipeline_mode<synchronous>, transform_indices = @transform_9, window_bounds = array<i64: 1, 256>}, {pipeline_mode = #tpu.pipeline_mode<synchronous>, transform_indices = @transform_10, window_bounds = array<i64: 16, 8>}, {pipeline_mode = #tpu.pipeline_mode<synchronous>, transform_indices = @transform_11, window_bounds = array<i64: 1024, 256>}, {pipeline_mode = #tpu.pipeline_mode<synchronous>, transform_indices = @transform_12, window_bounds = array<i64: 1, 256>}, {pipeline_mode = #tpu.pipeline_mode<synchronous>, transform_indices = @transform_13, window_bounds = array<i64: 4, 256>}, {pipeline_mode = #tpu.pipeline_mode<synchronous>, transform_indices = @transform_14, window_bounds = array<i64: 1, 1>}, {transform_indices = @transform_15, window_bounds = array<i64: 1, 1, 1>}]} {
    %c0 = arith.constant 0 : index
    %c0_0 = arith.constant 0 : index
    %c0_1 = arith.constant 0 : index
    %0 = vector.load %arg1[%c0, %c0_0, %c0_1] : memref<1x64x256xf32, #tpu.memory_space<vmem>>, vector<1x64x256xf32>
    %1 = vector.shape_cast %0 : vector<1x64x256xf32> to vector<64x256xf32>
    %c0_2 = arith.constant 0 : index
    %c0_3 = arith.constant 0 : index
    %2 = vector.load %arg2[%c0_2, %c0_3] : memref<128x64xf32, #tpu.memory_space<vmem>>, vector<128x64xf32>
    %cst = arith.constant dense<0.000000e+00> : vector<128x256xf32>
    %3 = tpu.matmul %2, %1, %cst {dimension_numbers = #tpu.dot_dimension_numbers<[1], [0], [0], [1], [0, 0, 1, 1], [], []>} : vector<128x64xf32>, vector<64x256xf32>, vector<128x256xf32> -> vector<128x256xf32>
    %4 = vector.extract_strided_slice %3 {offsets = [0, 0], sizes = [32, 256], strides = [1, 1]} : vector<128x256xf32> to vector<32x256xf32>
    %5 = vector.extract_strided_slice %3 {offsets = [32, 0], sizes = [32, 256], strides = [1, 1]} : vector<128x256xf32> to vector<32x256xf32>
    %6 = vector.extract_strided_slice %3 {offsets = [64, 0], sizes = [32, 256], strides = [1, 1]} : vector<128x256xf32> to vector<32x256xf32>
    %7 = vector.extract_strided_slice %3 {offsets = [96, 0], sizes = [32, 256], strides = [1, 1]} : vector<128x256xf32> to vector<32x256xf32>
    %8 = tpu.concatenate %4, %5, %6, %7 in 1 : vector<32x256xf32>, vector<32x256xf32>, vector<32x256xf32>, vector<32x256xf32> -> vector<32x1024xf32>
    %c0_4 = arith.constant 0 : index
    %c0_5 = arith.constant 0 : index
    %9 = vector.load %arg3[%c0_4, %c0_5] : memref<1024x256xf32, #tpu.memory_space<vmem>>, vector<1024x256xf32>
    %cst_6 = arith.constant dense<0.000000e+00> : vector<32x256xf32>
    %10 = tpu.matmul %8, %9, %cst_6 {dimension_numbers = #tpu.dot_dimension_numbers<[1], [0], [0], [1], [0, 0, 1, 1], [], []>} : vector<32x1024xf32>, vector<1024x256xf32>, vector<32x256xf32> -> vector<32x256xf32>
    %c0_7 = arith.constant 0 : index
    %c0_8 = arith.constant 0 : index
    %11 = vector.load %arg4[%c0_7, %c0_8] : memref<1x256xf32, #tpu.memory_space<vmem>>, vector<1x256xf32>
    %12 = vector.broadcast %11 : vector<1x256xf32> to vector<32x256xf32>
    %13 = arith.addf %10, %12 : vector<32x256xf32>
    %cst_9 = arith.constant 2.000000e-01 : f32
    %14 = vector.broadcast %cst_9 : f32 to vector<32x256xf32>
    %15 = arith.mulf %14, %13 : vector<32x256xf32>
    %16 = arith.maximumf %13, %15 : vector<32x256xf32>
    %c0_10 = arith.constant 0 : index
    %c0_11 = arith.constant 0 : index
    %17 = vector.load %arg5[%c0_10, %c0_11] : memref<64x32xf32, #tpu.memory_space<vmem>>, vector<64x32xf32>
    %cst_12 = arith.constant dense<0.000000e+00> : vector<64x256xf32>
    %18 = tpu.matmul %17, %16, %cst_12 {dimension_numbers = #tpu.dot_dimension_numbers<[1], [0], [0], [1], [0, 0, 1, 1], [], []>} : vector<64x32xf32>, vector<32x256xf32>, vector<64x256xf32> -> vector<64x256xf32>
    %19 = vector.extract_strided_slice %18 {offsets = [0, 0], sizes = [16, 256], strides = [1, 1]} : vector<64x256xf32> to vector<16x256xf32>
    %20 = vector.extract_strided_slice %18 {offsets = [16, 0], sizes = [16, 256], strides = [1, 1]} : vector<64x256xf32> to vector<16x256xf32>
    %21 = vector.extract_strided_slice %18 {offsets = [32, 0], sizes = [16, 256], strides = [1, 1]} : vector<64x256xf32> to vector<16x256xf32>
    %22 = vector.extract_strided_slice %18 {offsets = [48, 0], sizes = [16, 256], strides = [1, 1]} : vector<64x256xf32> to vector<16x256xf32>
    %23 = tpu.concatenate %19, %20, %21, %22 in 1 : vector<16x256xf32>, vector<16x256xf32>, vector<16x256xf32>, vector<16x256xf32> -> vector<16x1024xf32>
    %c0_13 = arith.constant 0 : index
    %c0_14 = arith.constant 0 : index
    %24 = vector.load %arg6[%c0_13, %c0_14] : memref<1024x256xf32, #tpu.memory_space<vmem>>, vector<1024x256xf32>
    %cst_15 = arith.constant dense<0.000000e+00> : vector<16x256xf32>
    %25 = tpu.matmul %23, %24, %cst_15 {dimension_numbers = #tpu.dot_dimension_numbers<[1], [0], [0], [1], [0, 0, 1, 1], [], []>} : vector<16x1024xf32>, vector<1024x256xf32>, vector<16x256xf32> -> vector<16x256xf32>
    %c0_16 = arith.constant 0 : index
    %c0_17 = arith.constant 0 : index
    %26 = vector.load %arg7[%c0_16, %c0_17] : memref<1x256xf32, #tpu.memory_space<vmem>>, vector<1x256xf32>
    %27 = vector.broadcast %26 : vector<1x256xf32> to vector<16x256xf32>
    %28 = arith.addf %25, %27 : vector<16x256xf32>
    %cst_18 = arith.constant 2.000000e-01 : f32
    %29 = vector.broadcast %cst_18 : f32 to vector<16x256xf32>
    %30 = arith.mulf %29, %28 : vector<16x256xf32>
    %31 = arith.maximumf %28, %30 : vector<16x256xf32>
    %c0_19 = arith.constant 0 : index
    %c0_20 = arith.constant 0 : index
    %32 = vector.load %arg8[%c0_19, %c0_20] : memref<32x16xf32, #tpu.memory_space<vmem>>, vector<32x16xf32>
    %cst_21 = arith.constant dense<0.000000e+00> : vector<32x256xf32>
    %33 = tpu.matmul %32, %31, %cst_21 {dimension_numbers = #tpu.dot_dimension_numbers<[1], [0], [0], [1], [0, 0, 1, 1], [], []>} : vector<32x16xf32>, vector<16x256xf32>, vector<32x256xf32> -> vector<32x256xf32>
    %34 = vector.extract_strided_slice %33 {offsets = [0, 0], sizes = [8, 256], strides = [1, 1]} : vector<32x256xf32> to vector<8x256xf32>
    %35 = vector.extract_strided_slice %33 {offsets = [8, 0], sizes = [8, 256], strides = [1, 1]} : vector<32x256xf32> to vector<8x256xf32>
    %36 = vector.extract_strided_slice %33 {offsets = [16, 0], sizes = [8, 256], strides = [1, 1]} : vector<32x256xf32> to vector<8x256xf32>
    %37 = vector.extract_strided_slice %33 {offsets = [24, 0], sizes = [8, 256], strides = [1, 1]} : vector<32x256xf32> to vector<8x256xf32>
    %38 = tpu.concatenate %34, %35, %36, %37 in 1 : vector<8x256xf32>, vector<8x256xf32>, vector<8x256xf32>, vector<8x256xf32> -> vector<8x1024xf32>
    %c0_22 = arith.constant 0 : index
    %c0_23 = arith.constant 0 : index
    %39 = vector.load %arg9[%c0_22, %c0_23] : memref<1024x256xf32, #tpu.memory_space<vmem>>, vector<1024x256xf32>
    %cst_24 = arith.constant dense<0.000000e+00> : vector<8x256xf32>
    %40 = tpu.matmul %38, %39, %cst_24 {dimension_numbers = #tpu.dot_dimension_numbers<[1], [0], [0], [1], [0, 0, 1, 1], [], []>} : vector<8x1024xf32>, vector<1024x256xf32>, vector<8x256xf32> -> vector<8x256xf32>
    %c0_25 = arith.constant 0 : index
    %c0_26 = arith.constant 0 : index
    %41 = vector.load %arg10[%c0_25, %c0_26] : memref<1x256xf32, #tpu.memory_space<vmem>>, vector<1x256xf32>
    %42 = vector.broadcast %41 : vector<1x256xf32> to vector<8x256xf32>
    %43 = arith.addf %40, %42 : vector<8x256xf32>
    %cst_27 = arith.constant 2.000000e-01 : f32
    %44 = vector.broadcast %cst_27 : f32 to vector<8x256xf32>
    %45 = arith.mulf %44, %43 : vector<8x256xf32>
    %46 = arith.maximumf %43, %45 : vector<8x256xf32>
    %c0_28 = arith.constant 0 : index
    %c0_29 = arith.constant 0 : index
    %47 = vector.load %arg11[%c0_28, %c0_29] : memref<16x8xf32, #tpu.memory_space<vmem>>, vector<16x8xf32>
    %cst_30 = arith.constant dense<0.000000e+00> : vector<16x256xf32>
    %48 = tpu.matmul %47, %46, %cst_30 {dimension_numbers = #tpu.dot_dimension_numbers<[1], [0], [0], [1], [0, 0, 1, 1], [], []>} : vector<16x8xf32>, vector<8x256xf32>, vector<16x256xf32> -> vector<16x256xf32>
    %49 = vector.extract_strided_slice %48 {offsets = [0, 0], sizes = [4, 256], strides = [1, 1]} : vector<16x256xf32> to vector<4x256xf32>
    %50 = vector.extract_strided_slice %48 {offsets = [4, 0], sizes = [4, 256], strides = [1, 1]} : vector<16x256xf32> to vector<4x256xf32>
    %51 = vector.extract_strided_slice %48 {offsets = [8, 0], sizes = [4, 256], strides = [1, 1]} : vector<16x256xf32> to vector<4x256xf32>
    %52 = vector.extract_strided_slice %48 {offsets = [12, 0], sizes = [4, 256], strides = [1, 1]} : vector<16x256xf32> to vector<4x256xf32>
    %53 = tpu.concatenate %49, %50, %51, %52 in 1 : vector<4x256xf32>, vector<4x256xf32>, vector<4x256xf32>, vector<4x256xf32> -> vector<4x1024xf32>
    %c0_31 = arith.constant 0 : index
    %c0_32 = arith.constant 0 : index
    %54 = vector.load %arg12[%c0_31, %c0_32] : memref<1024x256xf32, #tpu.memory_space<vmem>>, vector<1024x256xf32>
    %cst_33 = arith.constant dense<0.000000e+00> : vector<4x256xf32>
    %55 = tpu.matmul %53, %54, %cst_33 {dimension_numbers = #tpu.dot_dimension_numbers<[1], [0], [0], [1], [0, 0, 1, 1], [], []>} : vector<4x1024xf32>, vector<1024x256xf32>, vector<4x256xf32> -> vector<4x256xf32>
    %c0_34 = arith.constant 0 : index
    %c0_35 = arith.constant 0 : index
    %56 = vector.load %arg13[%c0_34, %c0_35] : memref<1x256xf32, #tpu.memory_space<vmem>>, vector<1x256xf32>
    %57 = vector.broadcast %56 : vector<1x256xf32> to vector<4x256xf32>
    %58 = arith.addf %55, %57 : vector<4x256xf32>
    %cst_36 = arith.constant 2.000000e-01 : f32
    %59 = vector.broadcast %cst_36 : f32 to vector<4x256xf32>
    %60 = arith.mulf %59, %58 : vector<4x256xf32>
    %61 = arith.maximumf %58, %60 : vector<4x256xf32>
    %c0_37 = arith.constant 0 : index
    %c0_38 = arith.constant 0 : index
    %62 = vector.load %arg14[%c0_37, %c0_38] : memref<4x256xf32, #tpu.memory_space<vmem>>, vector<4x256xf32>
    %63 = arith.mulf %61, %62 : vector<4x256xf32>
    %cst_39 = arith.constant dense<0.000000e+00> : vector<4xf32>
    %64 = vector.multi_reduction <add>, %63, %cst_39 [1] : vector<4x256xf32> to vector<4xf32>
    %65 = vector.shape_cast %64 : vector<4xf32> to vector<4x1xf32>
    %cst_40 = arith.constant dense<0.000000e+00> : vector<1xf32>
    %66 = vector.multi_reduction <add>, %65, %cst_40 [0] : vector<4x1xf32> to vector<1xf32>
    %67 = vector.shape_cast %66 : vector<1xf32> to vector<1x1xf32>
    %c0_41 = arith.constant 0 : index
    %c0_42 = arith.constant 0 : index
    %68 = vector.load %arg15[%c0_41, %c0_42] : memref<1x1xf32, #tpu.memory_space<vmem>>, vector<1x1xf32>
    %69 = arith.addf %67, %68 : vector<1x1xf32>
    %cst_43 = arith.constant 2.000000e-01 : f32
    %70 = vector.broadcast %cst_43 : f32 to vector<1x1xf32>
    %71 = arith.mulf %70, %69 : vector<1x1xf32>
    %72 = arith.maximumf %69, %71 : vector<1x1xf32>
    %c0_44 = arith.constant 0 : index
    %c0_45 = arith.constant 0 : index
    %c0_46 = arith.constant 0 : index
    %73 = vector.load %arg16[%c0_44, %c0_45, %c0_46] : memref<1x1x1xf32, #tpu.memory_space<vmem>>, vector<1x1x1xf32>
    %74 = vector.shape_cast %73 : vector<1x1x1xf32> to vector<1x1xf32>
    %75 = vector.shape_cast %72 : vector<1x1xf32> to vector<1x1x1xf32>
    tpu.vector_store %arg16[%c0_44, %c0_45, %c0_46], %75 {strides = array<i32>} : memref<1x1x1xf32, #tpu.memory_space<vmem>>, vector<1x1x1xf32>,
    return
  }
  func.func @transform_0(%arg0: i32) -> (i32, i32, i32) {
    %c0_i32 = arith.constant 0 : i32
    %c0_i32_0 = arith.constant 0 : i32
    %c0_i32_1 = arith.constant 0 : i32
    return %arg0, %c0_i32, %c0_i32_0 : i32, i32, i32
  }
  func.func @transform_1(%arg0: i32) -> (i32, i32) {
    %c0_i32 = arith.constant 0 : i32
    %c0_i32_0 = arith.constant 0 : i32
    %c0_i32_1 = arith.constant 0 : i32
    return %c0_i32, %c0_i32_0 : i32, i32
  }
  func.func @transform_2(%arg0: i32) -> (i32, i32) {
    %c0_i32 = arith.constant 0 : i32
    %c0_i32_0 = arith.constant 0 : i32
    %c0_i32_1 = arith.constant 0 : i32
    return %c0_i32, %c0_i32_0 : i32, i32
  }
  func.func @transform_3(%arg0: i32) -> (i32, i32) {
    %c0_i32 = arith.constant 0 : i32
    %c0_i32_0 = arith.constant 0 : i32
    %c0_i32_1 = arith.constant 0 : i32
    return %c0_i32, %c0_i32_0 : i32, i32
  }
  func.func @transform_4(%arg0: i32) -> (i32, i32) {
    %c0_i32 = arith.constant 0 : i32
    %c0_i32_0 = arith.constant 0 : i32
    %c0_i32_1 = arith.constant 0 : i32
    return %c0_i32, %c0_i32_0 : i32, i32
  }
  func.func @transform_5(%arg0: i32) -> (i32, i32) {
    %c0_i32 = arith.constant 0 : i32
    %c0_i32_0 = arith.constant 0 : i32
    %c0_i32_1 = arith.constant 0 : i32
    return %c0_i32, %c0_i32_0 : i32, i32
  }
  func.func @transform_6(%arg0: i32) -> (i32, i32) {
    %c0_i32 = arith.constant 0 : i32
    %c0_i32_0 = arith.constant 0 : i32
    %c0_i32_1 = arith.constant 0 : i32
    return %c0_i32, %c0_i32_0 : i32, i32
  }
  func.func @transform_7(%arg0: i32) -> (i32, i32) {
    %c0_i32 = arith.constant 0 : i32
    %c0_i32_0 = arith.constant 0 : i32
    %c0_i32_1 = arith.constant 0 : i32
    return %c0_i32, %c0_i32_0 : i32, i32
  }
  func.func @transform_8(%arg0: i32) -> (i32, i32) {
    %c0_i32 = arith.constant 0 : i32
    %c0_i32_0 = arith.constant 0 : i32
    %c0_i32_1 = arith.constant 0 : i32
    return %c0_i32, %c0_i32_0 : i32, i32
  }
  func.func @transform_9(%arg0: i32) -> (i32, i32) {
    %c0_i32 = arith.constant 0 : i32
    %c0_i32_0 = arith.constant 0 : i32
    %c0_i32_1 = arith.constant 0 : i32
    return %c0_i32, %c0_i32_0 : i32, i32
  }
  func.func @transform_10(%arg0: i32) -> (i32, i32) {
    %c0_i32 = arith.constant 0 : i32
    %c0_i32_0 = arith.constant 0 : i32
    %c0_i32_1 = arith.constant 0 : i32
    return %c0_i32, %c0_i32_0 : i32, i32
  }
  func.func @transform_11(%arg0: i32) -> (i32, i32) {
    %c0_i32 = arith.constant 0 : i32
    %c0_i32_0 = arith.constant 0 : i32
    %c0_i32_1 = arith.constant 0 : i32
    return %c0_i32, %c0_i32_0 : i32, i32
  }
  func.func @transform_12(%arg0: i32) -> (i32, i32) {
    %c0_i32 = arith.constant 0 : i32
    %c0_i32_0 = arith.constant 0 : i32
    %c0_i32_1 = arith.constant 0 : i32
    return %c0_i32, %c0_i32_0 : i32, i32
  }
  func.func @transform_13(%arg0: i32) -> (i32, i32) {
    %c0_i32 = arith.constant 0 : i32
    %c0_i32_0 = arith.constant 0 : i32
    %c0_i32_1 = arith.constant 0 : i32
    return %c0_i32, %c0_i32_0 : i32, i32
  }
  func.func @transform_14(%arg0: i32) -> (i32, i32) {
    %c0_i32 = arith.constant 0 : i32
    %c0_i32_0 = arith.constant 0 : i32
    %c0_i32_1 = arith.constant 0 : i32
    return %c0_i32, %c0_i32_0 : i32, i32
  }
  func.func @transform_15(%arg0: i32) -> (i32, i32, i32) {
    %c0_i32 = arith.constant 0 : i32
    %c0_i32_0 = arith.constant 0 : i32
    %c0_i32_1 = arith.constant 0 : i32
    return %arg0, %c0_i32, %c0_i32_0 : i32, i32, i32
  }
}

</mosaic_0001>

<llo_original>
// kernel: discriminator_forward.1
$region0: #{discriminator_forward.1}
  #allocation0 [shape = 'u32[]', space=smem, size = 0x4, offset = 0x4, fixed_abs, tag = 'smem constant byte address 0x4 - core index']
  #allocation1 [shape = 'u32[144,128]{1,0:T(1,128)}', space=vmem, size = 0x12000, scoped, tag = 'internal scratch']
  #allocation2 [shape = 'f32[1,1]{1,0:T(1,128)S(1)}', space=vmem, size = 0x200, scoped, tag = 'scoped memory for discriminator_forward.1']
  %s0 = inlined_call_operand.vmem [shape: f32[2,64,256], index: 0, kind: input, shape index: {}]
  %s1 = inlined_call_operand.vmem [shape: f32[128,64], index: 1, kind: input, shape index: {}]
  %s2 = inlined_call_operand.hbm [shape: f32[1024,256], index: 2, kind: input, shape index: {}]
  %s3 = inlined_call_operand.vmem [shape: f32[1,256], index: 3, kind: input, shape index: {}]
  %s4 = inlined_call_operand.vmem [shape: f32[64,32], index: 4, kind: input, shape index: {}]
  %s5 = inlined_call_operand.hbm [shape: f32[1024,256], index: 5, kind: input, shape index: {}]
  %s6 = inlined_call_operand.vmem [shape: f32[1,256], index: 6, kind: input, shape index: {}]
  %s7 = inlined_call_operand.vmem [shape: f32[32,16], index: 7, kind: input, shape index: {}]
  %s8 = inlined_call_operand.hbm [shape: f32[1024,256], index: 8, kind: input, shape index: {}]
  %s9 = inlined_call_operand.vmem [shape: f32[1,256], index: 9, kind: input, shape index: {}]
  %s10 = inlined_call_operand.vmem [shape: f32[16,8], index: 10, kind: input, shape index: {}]
  %s11 = inlined_call_operand.hbm [shape: f32[1024,256], index: 11, kind: input, shape index: {}]
  %s12 = inlined_call_operand.vmem [shape: f32[1,256], index: 12, kind: input, shape index: {}]
  %s13 = inlined_call_operand.vmem [shape: f32[4,256], index: 13, kind: input, shape index: {}]
  %s14 = inlined_call_operand.<no memory space> [shape: f32[1,1], index: 14, kind: input, shape index: {}]
  %s15 = inlined_call_operand.vmem [shape: f32[2,1,1], index: 15, kind: output, shape index: {}]
  %s16 = sld [smem:[#allocation0]]
  $region109: #{discriminator_forward.1} parent=0
    _
  %s18 = ssub.s32 1, %s16
  %s19 = scalar_select 0, %s18, %s16
  %v20 = vstv %s14
  %21 = vst [vmem:[#allocation2] sm:$0x1] %v20
  $region1: #{discriminator_forward.1} parent=0
    #allocation3 [shape = 'u8[1048576]{0}', space=vmem, size = 0x100000, scoped, tag = 'input window, operand 2, single buffered']
    #allocation4 [shape = 's32[2]{0}', space=sflag, size = 0x8, scoped, tag = 'scoped memory for discriminator_forward.1']
    #allocation5 [shape = 'u8[1048576]{0}', space=vmem, size = 0x100000, scoped, tag = 'input window, operand 5, single buffered']
    #allocation6 [shape = 's32[1]{0}', space=sflag, size = 0x4, scoped, tag = 'scoped memory for discriminator_forward.1']
    #allocation7 [shape = 'u8[1048576]{0}', space=vmem, size = 0x100000, scoped, tag = 'input window, operand 8, single buffered']
    #allocation8 [shape = 'u8[1048576]{0}', space=vmem, size = 0x100000, scoped, tag = 'input window, operand 11, single buffered']
    #allocation9 [shape = 's32[1]{0}', space=sflag, size = 0x4, scoped, tag = 'scoped memory for discriminator_forward.1']
    %22 = vsyncpa [#allocation4], 0
    %23 = vsyncpa [#allocation6], 0
    %24 = vsyncpa [#allocation9], 0
    loop: start=0, step=1, limit=4
    $region2: #{discriminator_forward.1} parent=1 // loop_pre_header
      _
    $region3: #{discriminator_forward.1} parent=1 // loop_header
      %s26 = sphi 0, %s30
      %p27 = scmp.ge.s32.totalorder %s26, 4
      %s36 = sphi 0, %s38
      %s39 = sphi 0, %s36
      %s40 = sphi 0, %s39
      %s56 = sphi 0, %s40
      %s60 = sphi 0, %s60
      %s62 = sphi 0, %s60
      %s63 = sphi 0, %s62
      %s77 = sphi 0, %s63
      %s81 = sphi 0, %s81
      %s83 = sphi 0, %s81
      %s84 = sphi 0, %s83
      %s98 = sphi 0, %s84
      %s102 = sphi 0, %s102
      %s104 = sphi 0, %s102
      %s105 = sphi 0, %s104
      %s119 = sphi 0, %s105
      %s123 = sphi 0, %s123
      %s125 = sphi 0, %s123
      %s126 = sphi 0, %s125
      %s140 = sphi 0, %s126
      %s144 = sphi 0, %s144
      %s146 = sphi 0, %s144
      %s147 = sphi 0, %s146
      %s161 = sphi 0, %s147
      %s165 = sphi 0, %s165
      %s167 = sphi 0, %s165
      %s168 = sphi 0, %s167
      %s182 = sphi 0, %s168
      %s186 = sphi 0, %s186
      %s188 = sphi 0, %s186
      %s189 = sphi 0, %s188
      %s203 = sphi 0, %s189
      %s207 = sphi 0, %s207
      %s209 = sphi 0, %s207
      %s210 = sphi 0, %s209
      %s224 = sphi 0, %s210
      %s228 = sphi 0, %s228
      %s230 = sphi 0, %s228
      %s231 = sphi 0, %s230
      %s245 = sphi 0, %s231
      %s249 = sphi 0, %s249
      %s251 = sphi 0, %s249
      %s252 = sphi 0, %s251
      %s266 = sphi 0, %s252
      %s270 = sphi 0, %s270
      %s272 = sphi 0, %s270
      %s273 = sphi 0, %s272
      %s287 = sphi 0, %s273
      %s291 = sphi 0, %s291
      %s293 = sphi 0, %s291
      %s294 = sphi 0, %s293
      %s308 = sphi 0, %s294
      %s312 = sphi 0, %s312
      %s314 = sphi 0, %s312
      %s315 = sphi 0, %s314
      %s329 = sphi 0, %s315
      %s333 = sphi 0, %s333
      %s335 = sphi 0, %s333
      %s336 = sphi 0, %s335
      %s350 = sphi 0, %s336
      %s356 = sphi 0, %s358
      %s359 = sphi 0, %s356
      %s360 = sphi 0, %s359
      %s376 = sphi 0, %s360
    $region4: #{discriminator_forward.1} parent=1 // loop_header_branch
      %29 = sbr.rel (%p27) target = $region8
    $region5: #{discriminator_forward.1} parent=1 // loop_body
      %s31 = ssub.s32 %s26, 1
      %s32 = ssub.s32 %s26, 2
      %s33 = sadd.s32 %s26, 1
      %s34 = ssub.s32 %s26, %s33
      %p35 = scmp.eq.s32.totalorder %s34, 0
      %s37 = sadd.s32 %s36, 1
      %s38 = scalar_select %p35, %s36, %s37
      %p41 = pneg %p35
      %p42 = scmp.eq.s32.totalorder %s26, 1
      %p43 = por %p41, %p42
      %p44 = scmp.ne.s32.totalorder %s36, %s39
      %p45 = scmp.eq.s32.totalorder %s26, 0
      %p46 = por %p44, %p45
      %p47 = scmp.ne.s32.totalorder %s36, %s39
      %p48 = scmp.eq.s32.totalorder %s31, 1
      %p49 = por %p47, %p48
      %p50 = scmp.ne.s32.totalorder %s39, %s40
      %p51 = scmp.eq.s32.totalorder %s31, 0
      %p52 = por %p50, %p51
      %p53 = scmp.ne.s32.totalorder %s39, %s40
      %p54 = scmp.eq.s32.totalorder %s32, 1
      %p55 = por %p53, %p54
      %p57 = scmp.ne.s32.totalorder %s40, %s56
      %p58 = scmp.eq.s32.totalorder %s32, 0
      %p59 = por %p57, %p58
      %s61 = sadd.s32 %s60, 1
      %p64 = scmp.eq.s32.totalorder %s26, 1
      %p65 = scmp.ne.s32.totalorder %s60, %s62
      %p66 = scmp.eq.s32.totalorder %s26, 0
      %p67 = por %p65, %p66
      %p68 = scmp.ne.s32.totalorder %s60, %s62
      %p69 = scmp.eq.s32.totalorder %s31, 1
      %p70 = por %p68, %p69
      %p71 = scmp.ne.s32.totalorder %s62, %s63
      %p72 = scmp.eq.s32.totalorder %s31, 0
      %p73 = por %p71, %p72
      %p74 = scmp.ne.s32.totalorder %s62, %s63
      %p75 = scmp.eq.s32.totalorder %s32, 1
      %p76 = por %p74, %p75
      %p78 = scmp.ne.s32.totalorder %s63, %s77
      %p79 = scmp.eq.s32.totalorder %s32, 0
      %p80 = por %p78, %p79
      %s82 = sadd.s32 %s81, 1
      %p85 = scmp.eq.s32.totalorder %s26, 1
      %p86 = scmp.ne.s32.totalorder %s81, %s83
      %p87 = scmp.eq.s32.totalorder %s26, 0
      %p88 = por %p86, %p87
      %p89 = scmp.ne.s32.totalorder %s81, %s83
      %p90 = scmp.eq.s32.totalorder %s31, 1
      %p91 = por %p89, %p90
      %p92 = scmp.ne.s32.totalorder %s83, %s84
      %p93 = scmp.eq.s32.totalorder %s31, 0
      %p94 = por %p92, %p93
      %p95 = scmp.ne.s32.totalorder %s83, %s84
      %p96 = scmp.eq.s32.totalorder %s32, 1
      %p97 = por %p95, %p96
      %p99 = scmp.ne.s32.totalorder %s84, %s98
      %p100 = scmp.eq.s32.totalorder %s32, 0
      %p101 = por %p99, %p100
      %s103 = sadd.s32 %s102, 1
      %p106 = scmp.eq.s32.totalorder %s26, 1
      %p107 = scmp.ne.s32.totalorder %s102, %s104
      %p108 = scmp.eq.s32.totalorder %s26, 0
      %p109 = por %p107, %p108
      %p110 = scmp.ne.s32.totalorder %s102, %s104
      %p111 = scmp.eq.s32.totalorder %s31, 1
      %p112 = por %p110, %p111
      %p113 = scmp.ne.s32.totalorder %s104, %s105
      %p114 = scmp.eq.s32.totalorder %s31, 0
      %p115 = por %p113, %p114
      %p116 = scmp.ne.s32.totalorder %s104, %s105
      %p117 = scmp.eq.s32.totalorder %s32, 1
      %p118 = por %p116, %p117
      %p120 = scmp.ne.s32.totalorder %s105, %s119
      %p121 = scmp.eq.s32.totalorder %s32, 0
      %p122 = por %p120, %p121
      %s124 = sadd.s32 %s123, 1
      %p127 = scmp.eq.s32.totalorder %s26, 1
      %p128 = scmp.ne.s32.totalorder %s123, %s125
      %p129 = scmp.eq.s32.totalorder %s26, 0
      %p130 = por %p128, %p129
      %p131 = scmp.ne.s32.totalorder %s123, %s125
      %p132 = scmp.eq.s32.totalorder %s31, 1
      %p133 = por %p131, %p132
      %p134 = scmp.ne.s32.totalorder %s125, %s126
      %p135 = scmp.eq.s32.totalorder %s31, 0
      %p136 = por %p134, %p135
      %p137 = scmp.ne.s32.totalorder %s125, %s126
      %p138 = scmp.eq.s32.totalorder %s32, 1
      %p139 = por %p137, %p138
      %p141 = scmp.ne.s32.totalorder %s126, %s140
      %p142 = scmp.eq.s32.totalorder %s32, 0
      %p143 = por %p141, %p142
      %s145 = sadd.s32 %s144, 1
      %p148 = scmp.eq.s32.totalorder %s26, 1
      %p149 = scmp.ne.s32.totalorder %s144, %s146
      %p150 = scmp.eq.s32.totalorder %s26, 0
      %p151 = por %p149, %p150
      %p152 = scmp.ne.s32.totalorder %s144, %s146
      %p153 = scmp.eq.s32.totalorder %s31, 1
      %p154 = por %p152, %p153
      %p155 = scmp.ne.s32.totalorder %s146, %s147
      %p156 = scmp.eq.s32.totalorder %s31, 0
      %p157 = por %p155, %p156
      %p158 = scmp.ne.s32.totalorder %s146, %s147
      %p159 = scmp.eq.s32.totalorder %s32, 1
      %p160 = por %p158, %p159
      %p162 = scmp.ne.s32.totalorder %s147, %s161
      %p163 = scmp.eq.s32.totalorder %s32, 0
      %p164 = por %p162, %p163
      %s166 = sadd.s32 %s165, 1
      %p169 = scmp.eq.s32.totalorder %s26, 1
      %p170 = scmp.ne.s32.totalorder %s165, %s167
      %p171 = scmp.eq.s32.totalorder %s26, 0
      %p172 = por %p170, %p171
      %p173 = scmp.ne.s32.totalorder %s165, %s167
      %p174 = scmp.eq.s32.totalorder %s31, 1
      %p175 = por %p173, %p174
      %p176 = scmp.ne.s32.totalorder %s167, %s168
      %p177 = scmp.eq.s32.totalorder %s31, 0
      %p178 = por %p176, %p177
      %p179 = scmp.ne.s32.totalorder %s167, %s168
      %p180 = scmp.eq.s32.totalorder %s32, 1
      %p181 = por %p179, %p180
      %p183 = scmp.ne.s32.totalorder %s168, %s182
      %p184 = scmp.eq.s32.totalorder %s32, 0
      %p185 = por %p183, %p184
      %s187 = sadd.s32 %s186, 1
      %p190 = scmp.eq.s32.totalorder %s26, 1
      %p191 = scmp.ne.s32.totalorder %s186, %s188
      %p192 = scmp.eq.s32.totalorder %s26, 0
      %p193 = por %p191, %p192
      %p194 = scmp.ne.s32.totalorder %s186, %s188
      %p195 = scmp.eq.s32.totalorder %s31, 1
      %p196 = por %p194, %p195
      %p197 = scmp.ne.s32.totalorder %s188, %s189
      %p198 = scmp.eq.s32.totalorder %s31, 0
      %p199 = por %p197, %p198
      %p200 = scmp.ne.s32.totalorder %s188, %s189
      %p201 = scmp.eq.s32.totalorder %s32, 1
      %p202 = por %p200, %p201
      %p204 = scmp.ne.s32.totalorder %s189, %s203
      %p205 = scmp.eq.s32.totalorder %s32, 0
      %p206 = por %p204, %p205
      %s208 = sadd.s32 %s207, 1
      %p211 = scmp.eq.s32.totalorder %s26, 1
      %p212 = scmp.ne.s32.totalorder %s207, %s209
      %p213 = scmp.eq.s32.totalorder %s26, 0
      %p214 = por %p212, %p213
      %p215 = scmp.ne.s32.totalorder %s207, %s209
      %p216 = scmp.eq.s32.totalorder %s31, 1
      %p217 = por %p215, %p216
      %p218 = scmp.ne.s32.totalorder %s209, %s210
      %p219 = scmp.eq.s32.totalorder %s31, 0
      %p220 = por %p218, %p219
      %p221 = scmp.ne.s32.totalorder %s209, %s210
      %p222 = scmp.eq.s32.totalorder %s32, 1
      %p223 = por %p221, %p222
      %p225 = scmp.ne.s32.totalorder %s210, %s224
      %p226 = scmp.eq.s32.totalorder %s32, 0
      %p227 = por %p225, %p226
      %s229 = sadd.s32 %s228, 1
      %p232 = scmp.eq.s32.totalorder %s26, 1
      %p233 = scmp.ne.s32.totalorder %s228, %s230
      %p234 = scmp.eq.s32.totalorder %s26, 0
      %p235 = por %p233, %p234
      %p236 = scmp.ne.s32.totalorder %s228, %s230
      %p237 = scmp.eq.s32.totalorder %s31, 1
      %p238 = por %p236, %p237
      %p239 = scmp.ne.s32.totalorder %s230, %s231
      %p240 = scmp.eq.s32.totalorder %s31, 0
      %p241 = por %p239, %p240
      %p242 = scmp.ne.s32.totalorder %s230, %s231
      %p243 = scmp.eq.s32.totalorder %s32, 1
      %p244 = por %p242, %p243
      %p246 = scmp.ne.s32.totalorder %s231, %s245
      %p247 = scmp.eq.s32.totalorder %s32, 0
      %p248 = por %p246, %p247
      %s250 = sadd.s32 %s249, 1
      %p253 = scmp.eq.s32.totalorder %s26, 1
      %p254 = scmp.ne.s32.totalorder %s249, %s251
      %p255 = scmp.eq.s32.totalorder %s26, 0
      %p256 = por %p254, %p255
      %p257 = scmp.ne.s32.totalorder %s249, %s251
      %p258 = scmp.eq.s32.totalorder %s31, 1
      %p259 = por %p257, %p258
      %p260 = scmp.ne.s32.totalorder %s251, %s252
      %p261 = scmp.eq.s32.totalorder %s31, 0
      %p262 = por %p260, %p261
      %p263 = scmp.ne.s32.totalorder %s251, %s252
      %p264 = scmp.eq.s32.totalorder %s32, 1
      %p265 = por %p263, %p264
      %p267 = scmp.ne.s32.totalorder %s252, %s266
      %p268 = scmp.eq.s32.totalorder %s32, 0
      %p269 = por %p267, %p268
      %s271 = sadd.s32 %s270, 1
      %p274 = scmp.eq.s32.totalorder %s26, 1
      %p275 = scmp.ne.s32.totalorder %s270, %s272
      %p276 = scmp.eq.s32.totalorder %s26, 0
      %p277 = por %p275, %p276
      %p278 = scmp.ne.s32.totalorder %s270, %s272
      %p279 = scmp.eq.s32.totalorder %s31, 1
      %p280 = por %p278, %p279
      %p281 = scmp.ne.s32.totalorder %s272, %s273
      %p282 = scmp.eq.s32.totalorder %s31, 0
      %p283 = por %p281, %p282
      %p284 = scmp.ne.s32.totalorder %s272, %s273
      %p285 = scmp.eq.s32.totalorder %s32, 1
      %p286 = por %p284, %p285
      %p288 = scmp.ne.s32.totalorder %s273, %s287
      %p289 = scmp.eq.s32.totalorder %s32, 0
      %p290 = por %p288, %p289
      %s292 = sadd.s32 %s291, 1
      %p295 = scmp.eq.s32.totalorder %s26, 1
      %p296 = scmp.ne.s32.totalorder %s291, %s293
      %p297 = scmp.eq.s32.totalorder %s26, 0
      %p298 = por %p296, %p297
      %p299 = scmp.ne.s32.totalorder %s291, %s293
      %p300 = scmp.eq.s32.totalorder %s31, 1
      %p301 = por %p299, %p300
      %p302 = scmp.ne.s32.totalorder %s293, %s294
      %p303 = scmp.eq.s32.totalorder %s31, 0
      %p304 = por %p302, %p303
      %p305 = scmp.ne.s32.totalorder %s293, %s294
      %p306 = scmp.eq.s32.totalorder %s32, 1
      %p307 = por %p305, %p306
      %p309 = scmp.ne.s32.totalorder %s294, %s308
      %p310 = scmp.eq.s32.totalorder %s32, 0
      %p311 = por %p309, %p310
      %s313 = sadd.s32 %s312, 1
      %p316 = scmp.eq.s32.totalorder %s26, 1
      %p317 = scmp.ne.s32.totalorder %s312, %s314
      %p318 = scmp.eq.s32.totalorder %s26, 0
      %p319 = por %p317, %p318
      %p320 = scmp.ne.s32.totalorder %s312, %s314
      %p321 = scmp.eq.s32.totalorder %s31, 1
      %p322 = por %p320, %p321
      %p323 = scmp.ne.s32.totalorder %s314, %s315
      %p324 = scmp.eq.s32.totalorder %s31, 0
      %p325 = por %p323, %p324
      %p326 = scmp.ne.s32.totalorder %s314, %s315
      %p327 = scmp.eq.s32.totalorder %s32, 1
      %p328 = por %p326, %p327
      %p330 = scmp.ne.s32.totalorder %s315, %s329
      %p331 = scmp.eq.s32.totalorder %s32, 0
      %p332 = por %p330, %p331
      %s334 = sadd.s32 %s333, 1
      %p337 = scmp.eq.s32.totalorder %s26, 1
      %p338 = scmp.ne.s32.totalorder %s333, %s335
      %p339 = scmp.eq.s32.totalorder %s26, 0
      %p340 = por %p338, %p339
      %p341 = scmp.ne.s32.totalorder %s333, %s335
      %p342 = scmp.eq.s32.totalorder %s31, 1
      %p343 = por %p341, %p342
      %p344 = scmp.ne.s32.totalorder %s335, %s336
      %p345 = scmp.eq.s32.totalorder %s31, 0
      %p346 = por %p344, %p345
      %p347 = scmp.ne.s32.totalorder %s335, %s336
      %p348 = scmp.eq.s32.totalorder %s32, 1
      %p349 = por %p347, %p348
      %p351 = scmp.ne.s32.totalorder %s336, %s350
      %p352 = scmp.eq.s32.totalorder %s32, 0
      %p353 = por %p351, %p352
      %s354 = ssub.s32 %s26, %s33
      %p355 = scmp.eq.s32.totalorder %s354, 0
      %s357 = sadd.s32 %s356, 1
      %s358 = scalar_select %p355, %s356, %s357
      %p361 = pneg %p355
      %p362 = scmp.eq.s32.totalorder %s26, 1
      %p363 = por %p361, %p362
      %p364 = scmp.ne.s32.totalorder %s356, %s359
      %p365 = scmp.eq.s32.totalorder %s26, 0
      %p366 = por %p364, %p365
      %p367 = scmp.ne.s32.totalorder %s356, %s359
      %p368 = scmp.eq.s32.totalorder %s31, 1
      %p369 = por %p367, %p368
      %p370 = scmp.ne.s32.totalorder %s359, %s360
      %p371 = scmp.eq.s32.totalorder %s31, 0
      %p372 = por %p370, %p371
      %p373 = scmp.ne.s32.totalorder %s359, %s360
      %p374 = scmp.eq.s32.totalorder %s32, 1
      %p375 = por %p373, %p374
      %p377 = scmp.ne.s32.totalorder %s360, %s376
      %p378 = scmp.eq.s32.totalorder %s32, 0
      %p379 = por %p377, %p378
      %p380 = scmp.le.s32.totalorder 1, %s26
      %p381 = scmp.lt.s32.totalorder %s26, 3
      %p382 = pnand %p380, %p381
      %p383 = pneg %p382
      // Predicated region
      $region9: #{discriminator_forward.1} parent=5 // pred_check
        _
      $region10: #{discriminator_forward.1} parent=5 // pred_check_branch
        %385 = sbr.rel (%p382) target = $region12
      $region11: #{discriminator_forward.1} parent=5 // pred_region
        %s386 = ssub.s32 %s26, 1
        // Predicated region
        $region13: #{discriminator_forward.1} parent=11 // pred_check
          %p387 = pneg %p73
        $region14: #{discriminator_forward.1} parent=11 // pred_check_branch
          %389 = sbr.rel (%p387) target = $region16
        $region15: #{discriminator_forward.1} parent=11 // pred_region
          _
        $region16: #{discriminator_forward.1} parent=11 // pred_fallthru
          _
        // Predicated region
        $region17: #{discriminator_forward.1} parent=11 // pred_check
          %p390 = pneg %p94
        $region18: #{discriminator_forward.1} parent=11 // pred_check_branch
          %392 = sbr.rel (%p390) target = $region20
        $region19: #{discriminator_forward.1} parent=11 // pred_region
          %s394 = ssub.s32 32768, 32768
          %395 = vsyncadd [#allocation4], %s394
          %s396 = sshll.u32 [#allocation3], 4
          %s397 = int_to_ptr.vmem [resolvable:$true] %s396
          %402 = dma.hbm_to_vmem [thread:$0]  %s2, 32768, %s397, [#allocation4], 256, 256, 16
        $region20: #{discriminator_forward.1} parent=11 // pred_fallthru
          _
        // Predicated region
        $region21: #{discriminator_forward.1} parent=11 // pred_check
          %p403 = pneg %p115
        $region22: #{discriminator_forward.1} parent=11 // pred_check_branch
          %405 = sbr.rel (%p403) target = $region24
        $region23: #{discriminator_forward.1} parent=11 // pred_region
          _
        $region24: #{discriminator_forward.1} parent=11 // pred_fallthru
          _
        // Predicated region
        $region25: #{discriminator_forward.1} parent=11 // pred_check
          %p406 = pneg %p136
        $region26: #{discriminator_forward.1} parent=11 // pred_check_branch
          %408 = sbr.rel (%p406) target = $region28
        $region27: #{discriminator_forward.1} parent=11 // pred_region
          _
        $region28: #{discriminator_forward.1} parent=11 // pred_fallthru
          _
        // Predicated region
        $region29: #{discriminator_forward.1} parent=11 // pred_check
          %p409 = pneg %p157
        $region30: #{discriminator_forward.1} parent=11 // pred_check_branch
          %411 = sbr.rel (%p409) target = $region32
        $region31: #{discriminator_forward.1} parent=11 // pred_region
          %s413 = ssub.s32 32768, 32768
          %414 = vsyncadd [#allocation6], %s413
          %s415 = sshll.u32 [#allocation5], 4
          %s416 = int_to_ptr.vmem [resolvable:$true] %s415
          %421 = dma.hbm_to_vmem [thread:$0]  %s5, 32768, %s416, [#allocation6], 256, 256, 16
        $region32: #{discriminator_forward.1} parent=11 // pred_fallthru
          _
        // Predicated region
        $region33: #{discriminator_forward.1} parent=11 // pred_check
          %p422 = pneg %p178
        $region34: #{discriminator_forward.1} parent=11 // pred_check_branch
          %424 = sbr.rel (%p422) target = $region36
        $region35: #{discriminator_forward.1} parent=11 // pred_region
          _
        $region36: #{discriminator_forward.1} parent=11 // pred_fallthru
          _
        // Predicated region
        $region37: #{discriminator_forward.1} parent=11 // pred_check
          %p425 = pneg %p199
        $region38: #{discriminator_forward.1} parent=11 // pred_check_branch
          %427 = sbr.rel (%p425) target = $region40
        $region39: #{discriminator_forward.1} parent=11 // pred_region
          _
        $region40: #{discriminator_forward.1} parent=11 // pred_fallthru
          _
        // Predicated region
        $region41: #{discriminator_forward.1} parent=11 // pred_check
          %p428 = pneg %p220
        $region42: #{discriminator_forward.1} parent=11 // pred_check_branch
          %430 = sbr.rel (%p428) target = $region44
        $region43: #{discriminator_forward.1} parent=11 // pred_region
          %s432 = ssub.s32 32768, 32768
          %433 = vsyncadd [#allocation6], %s432
          %s434 = sshll.u32 [#allocation7], 4
          %s435 = int_to_ptr.vmem [resolvable:$true] %s434
          %440 = dma.hbm_to_vmem [thread:$0]  %s8, 32768, %s435, [#allocation6], 256, 256, 16
        $region44: #{discriminator_forward.1} parent=11 // pred_fallthru
          _
        // Predicated region
        $region45: #{discriminator_forward.1} parent=11 // pred_check
          %p441 = pneg %p241
        $region46: #{discriminator_forward.1} parent=11 // pred_check_branch
          %443 = sbr.rel (%p441) target = $region48
        $region47: #{discriminator_forward.1} parent=11 // pred_region
          _
        $region48: #{discriminator_forward.1} parent=11 // pred_fallthru
          _
        // Predicated region
        $region49: #{discriminator_forward.1} parent=11 // pred_check
          %p444 = pneg %p262
        $region50: #{discriminator_forward.1} parent=11 // pred_check_branch
          %446 = sbr.rel (%p444) target = $region52
        $region51: #{discriminator_forward.1} parent=11 // pred_region
          _
        $region52: #{discriminator_forward.1} parent=11 // pred_fallthru
          _
        // Predicated region
        $region53: #{discriminator_forward.1} parent=11 // pred_check
          %p447 = pneg %p283
        $region54: #{discriminator_forward.1} parent=11 // pred_check_branch
          %449 = sbr.rel (%p447) target = $region56
        $region55: #{discriminator_forward.1} parent=11 // pred_region
          %s451 = ssub.s32 32768, 32768
          %452 = vsyncadd [#allocation9], %s451
          %s453 = sshll.u32 [#allocation8], 4
          %s454 = int_to_ptr.vmem [resolvable:$true] %s453
          %459 = dma.hbm_to_vmem [thread:$0]  %s11, 32768, %s454, [#allocation9], 256, 256, 16
        $region56: #{discriminator_forward.1} parent=11 // pred_fallthru
          _
        // Predicated region
        $region57: #{discriminator_forward.1} parent=11 // pred_check
          %p460 = pneg %p304
        $region58: #{discriminator_forward.1} parent=11 // pred_check_branch
          %462 = sbr.rel (%p460) target = $region60
        $region59: #{discriminator_forward.1} parent=11 // pred_region
          _
        $region60: #{discriminator_forward.1} parent=11 // pred_fallthru
          _
        // Predicated region
        $region61: #{discriminator_forward.1} parent=11 // pred_check
          %p463 = pneg %p325
        $region62: #{discriminator_forward.1} parent=11 // pred_check_branch
          %465 = sbr.rel (%p463) target = $region64
        $region63: #{discriminator_forward.1} parent=11 // pred_region
          _
        $region64: #{discriminator_forward.1} parent=11 // pred_fallthru
          _
        // Predicated region
        $region65: #{discriminator_forward.1} parent=11 // pred_check
          %p466 = pneg %p346
        $region66: #{discriminator_forward.1} parent=11 // pred_check_branch
          %468 = sbr.rel (%p466) target = $region68
        $region67: #{discriminator_forward.1} parent=11 // pred_region
          _
        $region68: #{discriminator_forward.1} parent=11 // pred_fallthru
          _
      $region12: #{discriminator_forward.1} parent=5 // pred_fallthru
        _
      %p469 = scmp.lt.s32.totalorder %s26, 2
      // Predicated region
      $region69: #{discriminator_forward.1} parent=5 // pred_check
        %p470 = pneg %p469
      $region70: #{discriminator_forward.1} parent=5 // pred_check_branch
        %472 = sbr.rel (%p470) target = $region72
      $region71: #{discriminator_forward.1} parent=5 // pred_region
        // Predicated region
        $region73: #{discriminator_forward.1} parent=71 // pred_check
          %p473 = pneg %p46
        $region74: #{discriminator_forward.1} parent=71 // pred_check_branch
          %475 = sbr.rel (%p473) target = $region76
        $region75: #{discriminator_forward.1} parent=71 // pred_region
          %p476 = scmp.lt.s32.totalorder %s26, 1
          %s477 = scalar_select %p476, %s26, 1
          %s478 = smul.addr %s477, 16
          %s479 = smul.addr %s478, 8
          %s480 = scalar_lea.vmem %s0, %s479
        $region76: #{discriminator_forward.1} parent=71 // pred_fallthru
          _
      $region72: #{discriminator_forward.1} parent=5 // pred_fallthru
        _
      %p481 = scmp.le.s32.totalorder 1, %s26
      %p482 = scmp.lt.s32.totalorder %s26, 3
      %p483 = pnand %p481, %p482
      %p484 = pneg %p483
      // Predicated region
      $region77: #{discriminator_forward.1} parent=5 // pred_check
        _
      $region78: #{discriminator_forward.1} parent=5 // pred_check_branch
        %486 = sbr.rel (%p483) target = $region80
      $region79: #{discriminator_forward.1} parent=5 // pred_region
        %s487 = ssub.s32 %s26, 1
        // Predicated region
        $region81: #{discriminator_forward.1} parent=79 // pred_check
          %p488 = pneg %p94
        $region82: #{discriminator_forward.1} parent=79 // pred_check_branch
          %490 = sbr.rel (%p488) target = $region84
        $region83: #{discriminator_forward.1} parent=79 // pred_region
          %491 = dma.done [#allocation4], 32768
        $region84: #{discriminator_forward.1} parent=79 // pred_fallthru
          _
        // Predicated region
        $region85: #{discriminator_forward.1} parent=79 // pred_check
          %p492 = pneg %p157
        $region86: #{discriminator_forward.1} parent=79 // pred_check_branch
          %494 = sbr.rel (%p492) target = $region88
        $region87: #{discriminator_forward.1} parent=79 // pred_region
          %495 = dma.done [#allocation6], 32768
        $region88: #{discriminator_forward.1} parent=79 // pred_fallthru
          _
        // Predicated region
        $region89: #{discriminator_forward.1} parent=79 // pred_check
          %p496 = pneg %p220
        $region90: #{discriminator_forward.1} parent=79 // pred_check_branch
          %498 = sbr.rel (%p496) target = $region92
        $region91: #{discriminator_forward.1} parent=79 // pred_region
          %499 = dma.done [#allocation6], 32768
        $region92: #{discriminator_forward.1} parent=79 // pred_fallthru
          _
        // Predicated region
        $region93: #{discriminator_forward.1} parent=79 // pred_check
          %p500 = pneg %p283
        $region94: #{discriminator_forward.1} parent=79 // pred_check_branch
          %502 = sbr.rel (%p500) target = $region96
        $region95: #{discriminator_forward.1} parent=79 // pred_region
          %503 = dma.done [#allocation9], 32768
        $region96: #{discriminator_forward.1} parent=79 // pred_fallthru
          _
        %p504 = scmp.lt.s32.totalorder %s31, 1
        %s505 = scalar_select %p504, %s31, 1
        %s506 = smul.addr %s505, 16
        %s507 = smul.addr %s506, 8
        %s508 = scalar_lea.vmem %s0, %s507
        %p509 = pneg %p52
        %p510 = pneg %p49
        %p511 = pneg %p73
        %p512 = pneg %p70
        %p513 = pneg %p94
        %p514 = pneg %p91
        %p515 = pneg %p115
        %p516 = pneg %p112
        %p517 = pneg %p136
        %p518 = pneg %p133
        %p519 = pneg %p157
        %p520 = pneg %p154
        %p521 = pneg %p178
        %p522 = pneg %p175
        %p523 = pneg %p199
        %p524 = pneg %p196
        %p525 = pneg %p220
        %p526 = pneg %p217
        %p527 = pneg %p241
        %p528 = pneg %p238
        %p529 = pneg %p262
        %p530 = pneg %p259
        %p531 = pneg %p283
        %p532 = pneg %p280
        %p533 = pneg %p304
        %p534 = pneg %p301
        %p535 = pneg %p325
        %p536 = pneg %p322
        %p537 = pneg %p346
        %p538 = pneg %p343
        %p539 = pneg %p372
        %p540 = pneg %p369
        %p541 = scmp.lt.s32.totalorder %s31, 1
        %s542 = scalar_select %p541, %s31, 1
        %s543 = scalar_lea.vmem %s15, %s542
        %p544 = scmp.lt.s32.totalorder %s31, 1
        %s545 = scalar_select %p544, %s31, 1
        %s546 = smul.addr %s545, 16
        %s547 = smul.addr %s546, 8
        %s548 = scalar_lea.vmem %s0, %s547
        %p549 = scmp.lt.s32.totalorder %s31, 1
        %s550 = scalar_select %p549, %s31, 1
        %s551 = scalar_lea.vmem %s15, %s550
        %v552 = vld [vmem:[%s548] sm:$0xff]
        %v553 = vld [vmem:[%s548 + $0x8] sm:$0xff]
        %v554 = vld [vmem:[%s548 + $0x10] sm:$0xff]
        %v555 = vld [vmem:[%s548 + $0x18] sm:$0xff]
        %v556 = vld [vmem:[%s548 + $0x20] sm:$0xff]
        %v557 = vld [vmem:[%s548 + $0x28] sm:$0xff]
        %v558 = vld [vmem:[%s548 + $0x30] sm:$0xff]
        %v559 = vld [vmem:[%s548 + $0x38] sm:$0xff]
        %v560 = vld [vmem:[%s548 + $0x40] sm:$0xff]
        %v561 = vld [vmem:[%s548 + $0x48] sm:$0xff]
        %v562 = vld [vmem:[%s548 + $0x50] sm:$0xff]
        %v563 = vld [vmem:[%s548 + $0x58] sm:$0xff]
        %v564 = vld [vmem:[%s548 + $0x60] sm:$0xff]
        %v565 = vld [vmem:[%s548 + $0x68] sm:$0xff]
        %v566 = vld [vmem:[%s548 + $0x70] sm:$0xff]
        %v567 = vld [vmem:[%s548 + $0x78] sm:$0xff]
        %v568 = vld [vmem:[%s1] sm:$0xff]
        %v569 = vld [vmem:[%s1 + $0x8] sm:$0xff]
        %v570 = vld [vmem:[%s1 + $0x10] sm:$0xff]
        %v571 = vld [vmem:[%s1 + $0x18] sm:$0xff]
        %v572 = vld [vmem:[%s1 + $0x20] sm:$0xff]
        %v573 = vld [vmem:[%s1 + $0x28] sm:$0xff]
        %v574 = vld [vmem:[%s1 + $0x30] sm:$0xff]
        %v575 = vld [vmem:[%s1 + $0x38] sm:$0xff]
        %v576 = vld [vmem:[%s1 + $0x40] sm:$0xff]
        %v577 = vld [vmem:[%s1 + $0x48] sm:$0xff]
        %v578 = vld [vmem:[%s1 + $0x50] sm:$0xff]
        %v579 = vld [vmem:[%s1 + $0x58] sm:$0xff]
        %v580 = vld [vmem:[%s1 + $0x60] sm:$0xff]
        %v581 = vld [vmem:[%s1 + $0x68] sm:$0xff]
        %v582 = vld [vmem:[%s1 + $0x70] sm:$0xff]
        %v583 = vld [vmem:[%s1 + $0x78] sm:$0xff]
        %vm584 = vcmask 523264
        %v586 = vsel %vm584, %v568, 0
        %v589 = vsel %vm584, %v569, 0
        %v592 = vsel %vm584, %v570, 0
        %v595 = vsel %vm584, %v571, 0
        %v598 = vsel %vm584, %v572, 0
        %v601 = vsel %vm584, %v573, 0
        %v604 = vsel %vm584, %v574, 0
        %v607 = vsel %vm584, %v575, 0
        %v610 = vsel %vm584, %v576, 0
        %v613 = vsel %vm584, %v577, 0
        %v616 = vsel %vm584, %v578, 0
        %v619 = vsel %vm584, %v579, 0
        %v622 = vsel %vm584, %v580, 0
        %v625 = vsel %vm584, %v581, 0
        %v628 = vsel %vm584, %v582, 0
        %v631 = vsel %vm584, %v583, 0
        %633 = vmatprep.subr.mxu0 %v553
        %634 = vmatpush1.msra.mxu0 %v552
        %635 = vmatprep.subr.mxu0 %v555
        %636 = vmatpush1.msra.mxu0 %v554
        %637 = vmatprep.subr.mxu0 %v557
        %638 = vmatpush1.msra.mxu0 %v556
        %639 = vmatprep.subr.mxu0 %v559
        %640 = vmatpush1.msra.mxu0 %v558
        %641 = vmatprep.subr.mxu0 %v561
        %642 = vmatpush1.msra.mxu0 %v560
        %643 = vmatprep.subr.mxu0 %v563
        %644 = vmatpush1.msra.mxu0 %v562
        %645 = vmatprep.subr.mxu0 %v565
        %646 = vmatpush1.msra.mxu0 %v564
        %647 = vmatprep.subr.mxu0 %v567
        %648 = vmatpush1.msra.mxu0 %v566
        %649 = vmatprep.subr.mxu0 0.0
        %650 = vmatpush1.msra.mxu0 0.0
        %651 = vmatprep.subr.mxu0 0.0
        %652 = vmatpush1.msra.mxu0 0.0
        %653 = vmatprep.subr.mxu0 0.0
        %654 = vmatpush1.msra.mxu0 0.0
        %655 = vmatprep.subr.mxu0 0.0
        %656 = vmatpush1.msra.mxu0 0.0
        %657 = vmatprep.subr.mxu0 0.0
        %658 = vmatpush1.msra.mxu0 0.0
        %659 = vmatprep.subr.mxu0 0.0
        %660 = vmatpush1.msra.mxu0 0.0
        %661 = vmatprep.subr.mxu0 0.0
        %662 = vmatpush1.msra.mxu0 0.0
        %663 = vmatprep.subr.mxu0 0.0
        %664 = vmatpush1.msra.mxu0 0.0
        %665 = vmatprep.subr.mxu0 0.0
        %666 = vmatpush1.msra.mxu0 0.0
        %667 = vmatprep.subr.mxu0 0.0
        %668 = vmatpush1.msra.mxu0 0.0
        %669 = vmatprep.subr.mxu0 0.0
        %670 = vmatpush1.msra.mxu0 0.0
        %671 = vmatprep.subr.mxu0 0.0
        %672 = vmatpush1.msra.mxu0 0.0
        %673 = vmatprep.subr.mxu0 0.0
        %674 = vmatpush1.msra.mxu0 0.0
        %675 = vmatprep.subr.mxu0 0.0
        %676 = vmatpush1.msra.mxu0 0.0
        %677 = vmatprep.subr.mxu0 0.0
        %678 = vmatpush1.msra.mxu0 0.0
        %679 = vmatprep.subr.mxu0 0.0
        %680 = vmatpush1.msra.mxu0 0.0
        %681 = vmatprep.subr.mxu0 0.0
        %682 = vmatpush1.msra.mxu0 0.0
        %683 = vmatprep.subr.mxu0 0.0
        %684 = vmatpush1.msra.mxu0 0.0
        %685 = vmatprep.subr.mxu0 0.0
        %686 = vmatpush1.msra.mxu0 0.0
        %687 = vmatprep.subr.mxu0 0.0
        %688 = vmatpush1.msra.mxu0 0.0
        %689 = vmatprep.subr.mxu0 0.0
        %690 = vmatpush1.msra.mxu0 0.0
        %691 = vmatprep.subr.mxu0 0.0
        %692 = vmatpush1.msra.mxu0 0.0
        %693 = vmatprep.subr.mxu0 0.0
        %694 = vmatpush1.msra.mxu0 0.0
        %695 = vmatprep.subr.mxu0 0.0
        %696 = vmatpush1.msra.mxu0 0.0
        %697 = vmatprep.mubr.f32.mxu0 0.0
        %698 = vmatmul.mubr.f32.gmra.mrb[0].mxu0 %v586
        %v699 = vpop.f32.mrb[0].mxu0
        %v700 = vadd.f32 0.0, %v699
        %v701 = vpop.f32.mrb[0].mxu0
        %v702 = vadd.f32 0.0, %v701
        %703 = vmatprep.mubr.f32.mxu0 0.0
        %704 = vmatmul.mubr.f32.gmra.mrb[0].mxu0 %v589
        %v705 = vpop.f32.mrb[0].mxu0
        %v706 = vadd.f32 0.0, %v705
        %v707 = vpop.f32.mrb[0].mxu0
        %v708 = vadd.f32 0.0, %v707
        %709 = vmatprep.mubr.f32.mxu0 0.0
        %710 = vmatmul.mubr.f32.gmra.mrb[0].mxu0 %v592
        %v711 = vpop.f32.mrb[0].mxu0
        %v712 = vadd.f32 0.0, %v711
        %v713 = vpop.f32.mrb[0].mxu0
        %v714 = vadd.f32 0.0, %v713
        %715 = vmatprep.mubr.f32.mxu0 0.0
        %716 = vmatmul.mubr.f32.gmra.mrb[0].mxu0 %v595
        %v717 = vpop.f32.mrb[0].mxu0
        %v718 = vadd.f32 0.0, %v717
        %v719 = vpop.f32.mrb[0].mxu0
        %v720 = vadd.f32 0.0, %v719
        %721 = vmatprep.mubr.f32.mxu0 0.0
        %722 = vmatmul.mubr.f32.gmra.mrb[0].mxu0 %v598
        %v723 = vpop.f32.mrb[0].mxu0
        %v724 = vadd.f32 0.0, %v723
        %v725 = vpop.f32.mrb[0].mxu0
        %v726 = vadd.f32 0.0, %v725
        %727 = vmatprep.mubr.f32.mxu0 0.0
        %728 = vmatmul.mubr.f32.gmra.mrb[0].mxu0 %v601
        %v729 = vpop.f32.mrb[0].mxu0
        %v730 = vadd.f32 0.0, %v729
        %v731 = vpop.f32.mrb[0].mxu0
        %v732 = vadd.f32 0.0, %v731
        %733 = vmatprep.mubr.f32.mxu0 0.0
        %734 = vmatmul.mubr.f32.gmra.mrb[0].mxu0 %v604
        %v735 = vpop.f32.mrb[0].mxu0
        %v736 = vadd.f32 0.0, %v735
        %v737 = vpop.f32.mrb[0].mxu0
        %v738 = vadd.f32 0.0, %v737
        %739 = vmatprep.mubr.f32.mxu0 0.0
        %740 = vmatmul.mubr.f32.gmra.mrb[0].mxu0 %v607
        %v741 = vpop.f32.mrb[0].mxu0
        %v742 = vadd.f32 0.0, %v741
        %v743 = vpop.f32.mrb[0].mxu0
        %v744 = vadd.f32 0.0, %v743
        %745 = vmatprep.mubr.f32.mxu0 0.0
        %746 = vmatmul.mubr.f32.gmra.mrb[0].mxu0 %v610
        %v747 = vpop.f32.mrb[0].mxu0
        %v748 = vadd.f32 0.0, %v747
        %v749 = vpop.f32.mrb[0].mxu0
        %v750 = vadd.f32 0.0, %v749
        %751 = vmatprep.mubr.f32.mxu0 0.0
        %752 = vmatmul.mubr.f32.gmra.mrb[0].mxu0 %v613
        %v753 = vpop.f32.mrb[0].mxu0
        %v754 = vadd.f32 0.0, %v753
        %v755 = vpop.f32.mrb[0].mxu0
        %v756 = vadd.f32 0.0, %v755
        %757 = vmatprep.mubr.f32.mxu0 0.0
        %758 = vmatmul.mubr.f32.gmra.mrb[0].mxu0 %v616
        %v759 = vpop.f32.mrb[0].mxu0
        %v760 = vadd.f32 0.0, %v759
        %v761 = vpop.f32.mrb[0].mxu0
        %v762 = vadd.f32 0.0, %v761
        %763 = vmatprep.mubr.f32.mxu0 0.0
        %764 = vmatmul.mubr.f32.gmra.mrb[0].mxu0 %v619
        %v765 = vpop.f32.mrb[0].mxu0
        %v766 = vadd.f32 0.0, %v765
        %v767 = vpop.f32.mrb[0].mxu0
        %v768 = vadd.f32 0.0, %v767
        %769 = vmatprep.mubr.f32.mxu0 0.0
        %770 = vmatmul.mubr.f32.gmra.mrb[0].mxu0 %v622
        %v771 = vpop.f32.mrb[0].mxu0
        %v772 = vadd.f32 0.0, %v771
        %v773 = vpop.f32.mrb[0].mxu0
        %v774 = vadd.f32 0.0, %v773
        %775 = vmatprep.mubr.f32.mxu0 0.0
        %776 = vmatmul.mubr.f32.gmra.mrb[0].mxu0 %v625
        %v777 = vpop.f32.mrb[0].mxu0
        %v778 = vadd.f32 0.0, %v777
        %v779 = vpop.f32.mrb[0].mxu0
        %v780 = vadd.f32 0.0, %v779
        %781 = vmatprep.mubr.f32.mxu0 0.0
        %782 = vmatmul.mubr.f32.gmra.mrb[0].mxu0 %v628
        %v783 = vpop.f32.mrb[0].mxu0
        %v784 = vadd.f32 0.0, %v783
        %v785 = vpop.f32.mrb[0].mxu0
        %v786 = vadd.f32 0.0, %v785
        %787 = vmatprep.mubr.f32.mxu0 0.0
        %788 = vmatmul.mubr.f32.gmra.mrb[0].mxu0 %v631
        %v789 = vpop.f32.mrb[0].mxu0
        %v790 = vadd.f32 0.0, %v789
        %v791 = vpop.f32.mrb[0].mxu0
        %v792 = vadd.f32 0.0, %v791
        %793 = vdwg.mxu0
        %v794 = vld [vmem:[#allocation3] sm:$0xff]
        %v795 = vld [vmem:[#allocation3 + $0x8] sm:$0xff]
        %v796 = vld [vmem:[#allocation3 + $0x10] sm:$0xff]
        %v797 = vld [vmem:[#allocation3 + $0x18] sm:$0xff]
        %v798 = vld [vmem:[#allocation3 + $0x20] sm:$0xff]
        %v799 = vld [vmem:[#allocation3 + $0x28] sm:$0xff]
        %v800 = vld [vmem:[#allocation3 + $0x30] sm:$0xff]
        %v801 = vld [vmem:[#allocation3 + $0x38] sm:$0xff]
        %v802 = vld [vmem:[#allocation3 + $0x40] sm:$0xff]
        %v803 = vld [vmem:[#allocation3 + $0x48] sm:$0xff]
        %v804 = vld [vmem:[#allocation3 + $0x50] sm:$0xff]
        %v805 = vld [vmem:[#allocation3 + $0x58] sm:$0xff]
        %v806 = vld [vmem:[#allocation3 + $0x60] sm:$0xff]
        %v807 = vld [vmem:[#allocation3 + $0x68] sm:$0xff]
        %v808 = vld [vmem:[#allocation3 + $0x70] sm:$0xff]
        %v809 = vld [vmem:[#allocation3 + $0x78] sm:$0xff]
        %v810 = vld [vmem:[#allocation3 + $0x80] sm:$0xff]
        %v811 = vld [vmem:[#allocation3 + $0x88] sm:$0xff]
        %v812 = vld [vmem:[#allocation3 + $0x90] sm:$0xff]
        %v813 = vld [vmem:[#allocation3 + $0x98] sm:$0xff]
        %v814 = vld [vmem:[#allocation3 + $0xa0] sm:$0xff]
        %v815 = vld [vmem:[#allocation3 + $0xa8] sm:$0xff]
        %v816 = vld [vmem:[#allocation3 + $0xb0] sm:$0xff]
        %v817 = vld [vmem:[#allocation3 + $0xb8] sm:$0xff]
        %v818 = vld [vmem:[#allocation3 + $0xc0] sm:$0xff]
        %v819 = vld [vmem:[#allocation3 + $0xc8] sm:$0xff]
        %v820 = vld [vmem:[#allocation3 + $0xd0] sm:$0xff]
        %v821 = vld [vmem:[#allocation3 + $0xd8] sm:$0xff]
        %v822 = vld [vmem:[#allocation3 + $0xe0] sm:$0xff]
        %v823 = vld [vmem:[#allocation3 + $0xe8] sm:$0xff]
        %v824 = vld [vmem:[#allocation3 + $0xf0] sm:$0xff]
        %v825 = vld [vmem:[#allocation3 + $0xf8] sm:$0xff]
        %v826 = vld [vmem:[#allocation3 + $0x100] sm:$0xff]
        %v827 = vld [vmem:[#allocation3 + $0x108] sm:$0xff]
        %v828 = vld [vmem:[#allocation3 + $0x110] sm:$0xff]
        %v829 = vld [vmem:[#allocation3 + $0x118] sm:$0xff]
        %v830 = vld [vmem:[#allocation3 + $0x120] sm:$0xff]
        %v831 = vld [vmem:[#allocation3 + $0x128] sm:$0xff]
        %v832 = vld [vmem:[#allocation3 + $0x130] sm:$0xff]
        %v833 = vld [vmem:[#allocation3 + $0x138] sm:$0xff]
        %v834 = vld [vmem:[#allocation3 + $0x140] sm:$0xff]
        %v835 = vld [vmem:[#allocation3 + $0x148] sm:$0xff]
        %v836 = vld [vmem:[#allocation3 + $0x150] sm:$0xff]
        %v837 = vld [vmem:[#allocation3 + $0x158] sm:$0xff]
        %v838 = vld [vmem:[#allocation3 + $0x160] sm:$0xff]
        %v839 = vld [vmem:[#allocation3 + $0x168] sm:$0xff]
        %v840 = vld [vmem:[#allocation3 + $0x170] sm:$0xff]
        %v841 = vld [vmem:[#allocation3 + $0x178] sm:$0xff]
        %v842 = vld [vmem:[#allocation3 + $0x180] sm:$0xff]
        %v843 = vld [vmem:[#allocation3 + $0x188] sm:$0xff]
        %v844 = vld [vmem:[#allocation3 + $0x190] sm:$0xff]
        %v845 = vld [vmem:[#allocation3 + $0x198] sm:$0xff]
        %v846 = vld [vmem:[#allocation3 + $0x1a0] sm:$0xff]
        %v847 = vld [vmem:[#allocation3 + $0x1a8] sm:$0xff]
        %v848 = vld [vmem:[#allocation3 + $0x1b0] sm:$0xff]
        %v849 = vld [vmem:[#allocation3 + $0x1b8] sm:$0xff]
        %v850 = vld [vmem:[#allocation3 + $0x1c0] sm:$0xff]
        %v851 = vld [vmem:[#allocation3 + $0x1c8] sm:$0xff]
        %v852 = vld [vmem:[#allocation3 + $0x1d0] sm:$0xff]
        %v853 = vld [vmem:[#allocation3 + $0x1d8] sm:$0xff]
        %v854 = vld [vmem:[#allocation3 + $0x1e0] sm:$0xff]
        %v855 = vld [vmem:[#allocation3 + $0x1e8] sm:$0xff]
        %v856 = vld [vmem:[#allocation3 + $0x1f0] sm:$0xff]
        %v857 = vld [vmem:[#allocation3 + $0x1f8] sm:$0xff]
        %v858 = vld [vmem:[#allocation3 + $0x200] sm:$0xff]
        %v859 = vld [vmem:[#allocation3 + $0x208] sm:$0xff]
        %v860 = vld [vmem:[#allocation3 + $0x210] sm:$0xff]
        %v861 = vld [vmem:[#allocation3 + $0x218] sm:$0xff]
        %v862 = vld [vmem:[#allocation3 + $0x220] sm:$0xff]
        %v863 = vld [vmem:[#allocation3 + $0x228] sm:$0xff]
        %v864 = vld [vmem:[#allocation3 + $0x230] sm:$0xff]
        %v865 = vld [vmem:[#allocation3 + $0x238] sm:$0xff]
        %v866 = vld [vmem:[#allocation3 + $0x240] sm:$0xff]
        %v867 = vld [vmem:[#allocation3 + $0x248] sm:$0xff]
        %v868 = vld [vmem:[#allocation3 + $0x250] sm:$0xff]
        %v869 = vld [vmem:[#allocation3 + $0x258] sm:$0xff]
        %v870 = vld [vmem:[#allocation3 + $0x260] sm:$0xff]
        %v871 = vld [vmem:[#allocation3 + $0x268] sm:$0xff]
        %v872 = vld [vmem:[#allocation3 + $0x270] sm:$0xff]
        %v873 = vld [vmem:[#allocation3 + $0x278] sm:$0xff]
        %v874 = vld [vmem:[#allocation3 + $0x280] sm:$0xff]
        %v875 = vld [vmem:[#allocation3 + $0x288] sm:$0xff]
        %v876 = vld [vmem:[#allocation3 + $0x290] sm:$0xff]
        %v877 = vld [vmem:[#allocation3 + $0x298] sm:$0xff]
        %v878 = vld [vmem:[#allocation3 + $0x2a0] sm:$0xff]
        %v879 = vld [vmem:[#allocation3 + $0x2a8] sm:$0xff]
        %v880 = vld [vmem:[#allocation3 + $0x2b0] sm:$0xff]
        %v881 = vld [vmem:[#allocation3 + $0x2b8] sm:$0xff]
        %v882 = vld [vmem:[#allocation3 + $0x2c0] sm:$0xff]
        %v883 = vld [vmem:[#allocation3 + $0x2c8] sm:$0xff]
        %v884 = vld [vmem:[#allocation3 + $0x2d0] sm:$0xff]
        %v885 = vld [vmem:[#allocation3 + $0x2d8] sm:$0xff]
        %v886 = vld [vmem:[#allocation3 + $0x2e0] sm:$0xff]
        %v887 = vld [vmem:[#allocation3 + $0x2e8] sm:$0xff]
        %v888 = vld [vmem:[#allocation3 + $0x2f0] sm:$0xff]
        %v889 = vld [vmem:[#allocation3 + $0x2f8] sm:$0xff]
        %v890 = vld [vmem:[#allocation3 + $0x300] sm:$0xff]
        %v891 = vld [vmem:[#allocation3 + $0x308] sm:$0xff]
        %v892 = vld [vmem:[#allocation3 + $0x310] sm:$0xff]
        %v893 = vld [vmem:[#allocation3 + $0x318] sm:$0xff]
        %v894 = vld [vmem:[#allocation3 + $0x320] sm:$0xff]
        %v895 = vld [vmem:[#allocation3 + $0x328] sm:$0xff]
        %v896 = vld [vmem:[#allocation3 + $0x330] sm:$0xff]
        %v897 = vld [vmem:[#allocation3 + $0x338] sm:$0xff]
        %v898 = vld [vmem:[#allocation3 + $0x340] sm:$0xff]
        %v899 = vld [vmem:[#allocation3 + $0x348] sm:$0xff]
        %v900 = vld [vmem:[#allocation3 + $0x350] sm:$0xff]
        %v901 = vld [vmem:[#allocation3 + $0x358] sm:$0xff]
        %v902 = vld [vmem:[#allocation3 + $0x360] sm:$0xff]
        %v903 = vld [vmem:[#allocation3 + $0x368] sm:$0xff]
        %v904 = vld [vmem:[#allocation3 + $0x370] sm:$0xff]
        %v905 = vld [vmem:[#allocation3 + $0x378] sm:$0xff]
        %v906 = vld [vmem:[#allocation3 + $0x380] sm:$0xff]
        %v907 = vld [vmem:[#allocation3 + $0x388] sm:$0xff]
        %v908 = vld [vmem:[#allocation3 + $0x390] sm:$0xff]
        %v909 = vld [vmem:[#allocation3 + $0x398] sm:$0xff]
        %v910 = vld [vmem:[#allocation3 + $0x3a0] sm:$0xff]
        %v911 = vld [vmem:[#allocation3 + $0x3a8] sm:$0xff]
        %v912 = vld [vmem:[#allocation3 + $0x3b0] sm:$0xff]
        %v913 = vld [vmem:[#allocation3 + $0x3b8] sm:$0xff]
        %v914 = vld [vmem:[#allocation3 + $0x3c0] sm:$0xff]
        %v915 = vld [vmem:[#allocation3 + $0x3c8] sm:$0xff]
        %v916 = vld [vmem:[#allocation3 + $0x3d0] sm:$0xff]
        %v917 = vld [vmem:[#allocation3 + $0x3d8] sm:$0xff]
        %v918 = vld [vmem:[#allocation3 + $0x3e0] sm:$0xff]
        %v919 = vld [vmem:[#allocation3 + $0x3e8] sm:$0xff]
        %v920 = vld [vmem:[#allocation3 + $0x3f0] sm:$0xff]
        %v921 = vld [vmem:[#allocation3 + $0x3f8] sm:$0xff]
        %v922 = vld [vmem:[#allocation3 + $0x400] sm:$0xff]
        %v923 = vld [vmem:[#allocation3 + $0x408] sm:$0xff]
        %v924 = vld [vmem:[#allocation3 + $0x410] sm:$0xff]
        %v925 = vld [vmem:[#allocation3 + $0x418] sm:$0xff]
        %v926 = vld [vmem:[#allocation3 + $0x420] sm:$0xff]
        %v927 = vld [vmem:[#allocation3 + $0x428] sm:$0xff]
        %v928 = vld [vmem:[#allocation3 + $0x430] sm:$0xff]
        %v929 = vld [vmem:[#allocation3 + $0x438] sm:$0xff]
        %v930 = vld [vmem:[#allocation3 + $0x440] sm:$0xff]
        %v931 = vld [vmem:[#allocation3 + $0x448] sm:$0xff]
        %v932 = vld [vmem:[#allocation3 + $0x450] sm:$0xff]
        %v933 = vld [vmem:[#allocation3 + $0x458] sm:$0xff]
        %v934 = vld [vmem:[#allocation3 + $0x460] sm:$0xff]
        %v935 = vld [vmem:[#allocation3 + $0x468] sm:$0xff]
        %v936 = vld [vmem:[#allocation3 + $0x470] sm:$0xff]
        %v937 = vld [vmem:[#allocation3 + $0x478] sm:$0xff]
        %v938 = vld [vmem:[#allocation3 + $0x480] sm:$0xff]
        %v939 = vld [vmem:[#allocation3 + $0x488] sm:$0xff]
        %v940 = vld [vmem:[#allocation3 + $0x490] sm:$0xff]
        %v941 = vld [vmem:[#allocation3 + $0x498] sm:$0xff]
        %v942 = vld [vmem:[#allocation3 + $0x4a0] sm:$0xff]
        %v943 = vld [vmem:[#allocation3 + $0x4a8] sm:$0xff]
        %v944 = vld [vmem:[#allocation3 + $0x4b0] sm:$0xff]
        %v945 = vld [vmem:[#allocation3 + $0x4b8] sm:$0xff]
        %v946 = vld [vmem:[#allocation3 + $0x4c0] sm:$0xff]
        %v947 = vld [vmem:[#allocation3 + $0x4c8] sm:$0xff]
        %v948 = vld [vmem:[#allocation3 + $0x4d0] sm:$0xff]
        %v949 = vld [vmem:[#allocation3 + $0x4d8] sm:$0xff]
        %v950 = vld [vmem:[#allocation3 + $0x4e0] sm:$0xff]
        %v951 = vld [vmem:[#allocation3 + $0x4e8] sm:$0xff]
        %v952 = vld [vmem:[#allocation3 + $0x4f0] sm:$0xff]
        %v953 = vld [vmem:[#allocation3 + $0x4f8] sm:$0xff]
        %v954 = vld [vmem:[#allocation3 + $0x500] sm:$0xff]
        %v955 = vld [vmem:[#allocation3 + $0x508] sm:$0xff]
        %v956 = vld [vmem:[#allocation3 + $0x510] sm:$0xff]
        %v957 = vld [vmem:[#allocation3 + $0x518] sm:$0xff]
        %v958 = vld [vmem:[#allocation3 + $0x520] sm:$0xff]
        %v959 = vld [vmem:[#allocation3 + $0x528] sm:$0xff]
        %v960 = vld [vmem:[#allocation3 + $0x530] sm:$0xff]
        %v961 = vld [vmem:[#allocation3 + $0x538] sm:$0xff]
        %v962 = vld [vmem:[#allocation3 + $0x540] sm:$0xff]
        %v963 = vld [vmem:[#allocation3 + $0x548] sm:$0xff]
        %v964 = vld [vmem:[#allocation3 + $0x550] sm:$0xff]
        %v965 = vld [vmem:[#allocation3 + $0x558] sm:$0xff]
        %v966 = vld [vmem:[#allocation3 + $0x560] sm:$0xff]
        %v967 = vld [vmem:[#allocation3 + $0x568] sm:$0xff]
        %v968 = vld [vmem:[#allocation3 + $0x570] sm:$0xff]
        %v969 = vld [vmem:[#allocation3 + $0x578] sm:$0xff]
        %v970 = vld [vmem:[#allocation3 + $0x580] sm:$0xff]
        %v971 = vld [vmem:[#allocation3 + $0x588] sm:$0xff]
        %v972 = vld [vmem:[#allocation3 + $0x590] sm:$0xff]
        %v973 = vld [vmem:[#allocation3 + $0x598] sm:$0xff]
        %v974 = vld [vmem:[#allocation3 + $0x5a0] sm:$0xff]
        %v975 = vld [vmem:[#allocation3 + $0x5a8] sm:$0xff]
        %v976 = vld [vmem:[#allocation3 + $0x5b0] sm:$0xff]
        %v977 = vld [vmem:[#allocation3 + $0x5b8] sm:$0xff]
        %v978 = vld [vmem:[#allocation3 + $0x5c0] sm:$0xff]
        %v979 = vld [vmem:[#allocation3 + $0x5c8] sm:$0xff]
        %v980 = vld [vmem:[#allocation3 + $0x5d0] sm:$0xff]
        %v981 = vld [vmem:[#allocation3 + $0x5d8] sm:$0xff]
        %v982 = vld [vmem:[#allocation3 + $0x5e0] sm:$0xff]
        %v983 = vld [vmem:[#allocation3 + $0x5e8] sm:$0xff]
        %v984 = vld [vmem:[#allocation3 + $0x5f0] sm:$0xff]
        %v985 = vld [vmem:[#allocation3 + $0x5f8] sm:$0xff]
        %v986 = vld [vmem:[#allocation3 + $0x600] sm:$0xff]
        %v987 = vld [vmem:[#allocation3 + $0x608] sm:$0xff]
        %v988 = vld [vmem:[#allocation3 + $0x610] sm:$0xff]
        %v989 = vld [vmem:[#allocation3 + $0x618] sm:$0xff]
        %v990 = vld [vmem:[#allocation3 + $0x620] sm:$0xff]
        %v991 = vld [vmem:[#allocation3 + $0x628] sm:$0xff]
        %v992 = vld [vmem:[#allocation3 + $0x630] sm:$0xff]
        %v993 = vld [vmem:[#allocation3 + $0x638] sm:$0xff]
        %v994 = vld [vmem:[#allocation3 + $0x640] sm:$0xff]
        %v995 = vld [vmem:[#allocation3 + $0x648] sm:$0xff]
        %v996 = vld [vmem:[#allocation3 + $0x650] sm:$0xff]
        %v997 = vld [vmem:[#allocation3 + $0x658] sm:$0xff]
        %v998 = vld [vmem:[#allocation3 + $0x660] sm:$0xff]
        %v999 = vld [vmem:[#allocation3 + $0x668] sm:$0xff]
        %v1000 = vld [vmem:[#allocation3 + $0x670] sm:$0xff]
        %v1001 = vld [vmem:[#allocation3 + $0x678] sm:$0xff]
        %v1002 = vld [vmem:[#allocation3 + $0x680] sm:$0xff]
        %v1003 = vld [vmem:[#allocation3 + $0x688] sm:$0xff]
        %v1004 = vld [vmem:[#allocation3 + $0x690] sm:$0xff]
        %v1005 = vld [vmem:[#allocation3 + $0x698] sm:$0xff]
        %v1006 = vld [vmem:[#allocation3 + $0x6a0] sm:$0xff]
        %v1007 = vld [vmem:[#allocation3 + $0x6a8] sm:$0xff]
        %v1008 = vld [vmem:[#allocation3 + $0x6b0] sm:$0xff]
        %v1009 = vld [vmem:[#allocation3 + $0x6b8] sm:$0xff]
        %v1010 = vld [vmem:[#allocation3 + $0x6c0] sm:$0xff]
        %v1011 = vld [vmem:[#allocation3 + $0x6c8] sm:$0xff]
        %v1012 = vld [vmem:[#allocation3 + $0x6d0] sm:$0xff]
        %v1013 = vld [vmem:[#allocation3 + $0x6d8] sm:$0xff]
        %v1014 = vld [vmem:[#allocation3 + $0x6e0] sm:$0xff]
        %v1015 = vld [vmem:[#allocation3 + $0x6e8] sm:$0xff]
        %v1016 = vld [vmem:[#allocation3 + $0x6f0] sm:$0xff]
        %v1017 = vld [vmem:[#allocation3 + $0x6f8] sm:$0xff]
        %v1018 = vld [vmem:[#allocation3 + $0x700] sm:$0xff]
        %v1019 = vld [vmem:[#allocation3 + $0x708] sm:$0xff]
        %v1020 = vld [vmem:[#allocation3 + $0x710] sm:$0xff]
        %v1021 = vld [vmem:[#allocation3 + $0x718] sm:$0xff]
        %v1022 = vld [vmem:[#allocation3 + $0x720] sm:$0xff]
        %v1023 = vld [vmem:[#allocation3 + $0x728] sm:$0xff]
        %v1024 = vld [vmem:[#allocation3 + $0x730] sm:$0xff]
        %v1025 = vld [vmem:[#allocation3 + $0x738] sm:$0xff]
        %v1026 = vld [vmem:[#allocation3 + $0x740] sm:$0xff]
        %v1027 = vld [vmem:[#allocation3 + $0x748] sm:$0xff]
        %v1028 = vld [vmem:[#allocation3 + $0x750] sm:$0xff]
        %v1029 = vld [vmem:[#allocation3 + $0x758] sm:$0xff]
        %v1030 = vld [vmem:[#allocation3 + $0x760] sm:$0xff]
        %v1031 = vld [vmem:[#allocation3 + $0x768] sm:$0xff]
        %v1032 = vld [vmem:[#allocation3 + $0x770] sm:$0xff]
        %v1033 = vld [vmem:[#allocation3 + $0x778] sm:$0xff]
        %v1034 = vld [vmem:[#allocation3 + $0x780] sm:$0xff]
        %v1035 = vld [vmem:[#allocation3 + $0x788] sm:$0xff]
        %v1036 = vld [vmem:[#allocation3 + $0x790] sm:$0xff]
        %v1037 = vld [vmem:[#allocation3 + $0x798] sm:$0xff]
        %v1038 = vld [vmem:[#allocation3 + $0x7a0] sm:$0xff]
        %v1039 = vld [vmem:[#allocation3 + $0x7a8] sm:$0xff]
        %v1040 = vld [vmem:[#allocation3 + $0x7b0] sm:$0xff]
        %v1041 = vld [vmem:[#allocation3 + $0x7b8] sm:$0xff]
        %v1042 = vld [vmem:[#allocation3 + $0x7c0] sm:$0xff]
        %v1043 = vld [vmem:[#allocation3 + $0x7c8] sm:$0xff]
        %v1044 = vld [vmem:[#allocation3 + $0x7d0] sm:$0xff]
        %v1045 = vld [vmem:[#allocation3 + $0x7d8] sm:$0xff]
        %v1046 = vld [vmem:[#allocation3 + $0x7e0] sm:$0xff]
        %v1047 = vld [vmem:[#allocation3 + $0x7e8] sm:$0xff]
        %v1048 = vld [vmem:[#allocation3 + $0x7f0] sm:$0xff]
        %v1049 = vld [vmem:[#allocation3 + $0x7f8] sm:$0xff]
        %v1050 = vld [vmem:[%s3] sm:$0x3]
        %v1052 = vlaneseq
        %v1053 = vshrl.u32 %v1052, 7
        %v1054 = vsub.s32 0, %v1053
        %v1055 = vrot.slane %v1050, %v1054
        %v1056 = vlaneseq
        %v1057 = vshrl.u32 %v1056, 7
        %v1058 = vsub.s32 1, %v1057
        %v1059 = vrot.slane %v1050, %v1058
        %1062 = vmatprep.subr.mxu0 %v795
        %1063 = vmatpush1.msra.mxu0 %v794
        %1064 = vmatprep.subr.mxu0 %v797
        %1065 = vmatpush1.msra.mxu0 %v796
        %1066 = vmatprep.subr.mxu0 %v799
        %1067 = vmatpush1.msra.mxu0 %v798
        %1068 = vmatprep.subr.mxu0 %v801
        %1069 = vmatpush1.msra.mxu0 %v800
        %1070 = vmatprep.subr.mxu0 %v803
        %1071 = vmatpush1.msra.mxu0 %v802
        %1072 = vmatprep.subr.mxu0 %v805
        %1073 = vmatpush1.msra.mxu0 %v804
        %1074 = vmatprep.subr.mxu0 %v807
        %1075 = vmatpush1.msra.mxu0 %v806
        %1076 = vmatprep.subr.mxu0 %v809
        %1077 = vmatpush1.msra.mxu0 %v808
        %1078 = vmatprep.subr.mxu0 %v811
        %1079 = vmatpush1.msra.mxu0 %v810
        %1080 = vmatprep.subr.mxu0 %v813
        %1081 = vmatpush1.msra.mxu0 %v812
        %1082 = vmatprep.subr.mxu0 %v815
        %1083 = vmatpush1.msra.mxu0 %v814
        %1084 = vmatprep.subr.mxu0 %v817
        %1085 = vmatpush1.msra.mxu0 %v816
        %1086 = vmatprep.subr.mxu0 %v819
        %1087 = vmatpush1.msra.mxu0 %v818
        %1088 = vmatprep.subr.mxu0 %v821
        %1089 = vmatpush1.msra.mxu0 %v820
        %1090 = vmatprep.subr.mxu0 %v823
        %1091 = vmatpush1.msra.mxu0 %v822
        %1092 = vmatprep.subr.mxu0 %v825
        %1093 = vmatpush1.msra.mxu0 %v824
        %1094 = vmatprep.subr.mxu0 %v827
        %1095 = vmatpush1.msra.mxu0 %v826
        %1096 = vmatprep.subr.mxu0 %v829
        %1097 = vmatpush1.msra.mxu0 %v828
        %1098 = vmatprep.subr.mxu0 %v831
        %1099 = vmatpush1.msra.mxu0 %v830
        %1100 = vmatprep.subr.mxu0 %v833
        %1101 = vmatpush1.msra.mxu0 %v832
        %1102 = vmatprep.subr.mxu0 %v835
        %1103 = vmatpush1.msra.mxu0 %v834
        %1104 = vmatprep.subr.mxu0 %v837
        %1105 = vmatpush1.msra.mxu0 %v836
        %1106 = vmatprep.subr.mxu0 %v839
        %1107 = vmatpush1.msra.mxu0 %v838
        %1108 = vmatprep.subr.mxu0 %v841
        %1109 = vmatpush1.msra.mxu0 %v840
        %1110 = vmatprep.subr.mxu0 %v843
        %1111 = vmatpush1.msra.mxu0 %v842
        %1112 = vmatprep.subr.mxu0 %v845
        %1113 = vmatpush1.msra.mxu0 %v844
        %1114 = vmatprep.subr.mxu0 %v847
        %1115 = vmatpush1.msra.mxu0 %v846
        %1116 = vmatprep.subr.mxu0 %v849
        %1117 = vmatpush1.msra.mxu0 %v848
        %1118 = vmatprep.subr.mxu0 %v851
        %1119 = vmatpush1.msra.mxu0 %v850
        %1120 = vmatprep.subr.mxu0 %v853
        %1121 = vmatpush1.msra.mxu0 %v852
        %1122 = vmatprep.subr.mxu0 %v855
        %1123 = vmatpush1.msra.mxu0 %v854
        %1124 = vmatprep.subr.mxu0 %v857
        %1125 = vmatpush1.msra.mxu0 %v856
        %1126 = vmatprep.mubr.f32.mxu0 %v702
        %1127 = vmatmul.mubr.f32.gmra.mrb[0].mxu0 %v700
        %v1128 = vpop.f32.mrb[0].mxu0
        %v1129 = vadd.f32 %v1055, %v1128
        %v1130 = vpop.f32.mrb[0].mxu0
        %v1131 = vadd.f32 %v1059, %v1130
        %1132 = vmatprep.mubr.f32.mxu0 %v708
        %1133 = vmatmul.mubr.f32.gmra.mrb[0].mxu0 %v706
        %v1134 = vpop.f32.mrb[0].mxu0
        %v1135 = vadd.f32 %v1055, %v1134
        %v1136 = vpop.f32.mrb[0].mxu0
        %v1137 = vadd.f32 %v1059, %v1136
        %1138 = vmatprep.mubr.f32.mxu0 %v714
        %1139 = vmatmul.mubr.f32.gmra.mrb[0].mxu0 %v712
        %v1140 = vpop.f32.mrb[0].mxu0
        %v1141 = vadd.f32 %v1055, %v1140
        %v1142 = vpop.f32.mrb[0].mxu0
        %v1143 = vadd.f32 %v1059, %v1142
        %1144 = vmatprep.mubr.f32.mxu0 %v720
        %1145 = vmatmul.mubr.f32.gmra.mrb[0].mxu0 %v718
        %v1146 = vpop.f32.mrb[0].mxu0
        %v1147 = vadd.f32 %v1055, %v1146
        %v1148 = vpop.f32.mrb[0].mxu0
        %v1149 = vadd.f32 %v1059, %v1148
        %1150 = vdwg.mxu0
        %1151 = vmatprep.subr.mxu0 %v859
        %1152 = vmatpush1.msra.mxu0 %v858
        %1153 = vmatprep.subr.mxu0 %v861
        %1154 = vmatpush1.msra.mxu0 %v860
        %1155 = vmatprep.subr.mxu0 %v863
        %1156 = vmatpush1.msra.mxu0 %v862
        %1157 = vmatprep.subr.mxu0 %v865
        %1158 = vmatpush1.msra.mxu0 %v864
        %1159 = vmatprep.subr.mxu0 %v867
        %1160 = vmatpush1.msra.mxu0 %v866
        %1161 = vmatprep.subr.mxu0 %v869
        %1162 = vmatpush1.msra.mxu0 %v868
        %1163 = vmatprep.subr.mxu0 %v871
        %1164 = vmatpush1.msra.mxu0 %v870
        %1165 = vmatprep.subr.mxu0 %v873
        %1166 = vmatpush1.msra.mxu0 %v872
        %1167 = vmatprep.subr.mxu0 %v875
        %1168 = vmatpush1.msra.mxu0 %v874
        %1169 = vmatprep.subr.mxu0 %v877
        %1170 = vmatpush1.msra.mxu0 %v876
        %1171 = vmatprep.subr.mxu0 %v879
        %1172 = vmatpush1.msra.mxu0 %v878
        %1173 = vmatprep.subr.mxu0 %v881
        %1174 = vmatpush1.msra.mxu0 %v880
        %1175 = vmatprep.subr.mxu0 %v883
        %1176 = vmatpush1.msra.mxu0 %v882
        %1177 = vmatprep.subr.mxu0 %v885
        %1178 = vmatpush1.msra.mxu0 %v884
        %1179 = vmatprep.subr.mxu0 %v887
        %1180 = vmatpush1.msra.mxu0 %v886
        %1181 = vmatprep.subr.mxu0 %v889
        %1182 = vmatpush1.msra.mxu0 %v888
        %1183 = vmatprep.subr.mxu0 %v891
        %1184 = vmatpush1.msra.mxu0 %v890
        %1185 = vmatprep.subr.mxu0 %v893
        %1186 = vmatpush1.msra.mxu0 %v892
        %1187 = vmatprep.subr.mxu0 %v895
        %1188 = vmatpush1.msra.mxu0 %v894
        %1189 = vmatprep.subr.mxu0 %v897
        %1190 = vmatpush1.msra.mxu0 %v896
        %1191 = vmatprep.subr.mxu0 %v899
        %1192 = vmatpush1.msra.mxu0 %v898
        %1193 = vmatprep.subr.mxu0 %v901
        %1194 = vmatpush1.msra.mxu0 %v900
        %1195 = vmatprep.subr.mxu0 %v903
        %1196 = vmatpush1.msra.mxu0 %v902
        %1197 = vmatprep.subr.mxu0 %v905
        %1198 = vmatpush1.msra.mxu0 %v904
        %1199 = vmatprep.subr.mxu0 %v907
        %1200 = vmatpush1.msra.mxu0 %v906
        %1201 = vmatprep.subr.mxu0 %v909
        %1202 = vmatpush1.msra.mxu0 %v908
        %1203 = vmatprep.subr.mxu0 %v911
        %1204 = vmatpush1.msra.mxu0 %v910
        %1205 = vmatprep.subr.mxu0 %v913
        %1206 = vmatpush1.msra.mxu0 %v912
        %1207 = vmatprep.subr.mxu0 %v915
        %1208 = vmatpush1.msra.mxu0 %v914
        %1209 = vmatprep.subr.mxu0 %v917
        %1210 = vmatpush1.msra.mxu0 %v916
        %1211 = vmatprep.subr.mxu0 %v919
        %1212 = vmatpush1.msra.mxu0 %v918
        %1213 = vmatprep.subr.mxu0 %v921
        %1214 = vmatpush1.msra.mxu0 %v920
        %1215 = vmatprep.mubr.f32.mxu0 %v726
        %1216 = vmatmul.mubr.f32.gmra.mrb[0].mxu0 %v724
        %v1217 = vpop.f32.mrb[0].mxu0
        %v1218 = vadd.f32 %v1129, %v1217
        %v1219 = vpop.f32.mrb[0].mxu0
        %v1220 = vadd.f32 %v1131, %v1219
        %1221 = vmatprep.mubr.f32.mxu0 %v732
        %1222 = vmatmul.mubr.f32.gmra.mrb[0].mxu0 %v730
        %v1223 = vpop.f32.mrb[0].mxu0
        %v1224 = vadd.f32 %v1135, %v1223
        %v1225 = vpop.f32.mrb[0].mxu0
        %v1226 = vadd.f32 %v1137, %v1225
        %1227 = vmatprep.mubr.f32.mxu0 %v738
        %1228 = vmatmul.mubr.f32.gmra.mrb[0].mxu0 %v736
        %v1229 = vpop.f32.mrb[0].mxu0
        %v1230 = vadd.f32 %v1141, %v1229
        %v1231 = vpop.f32.mrb[0].mxu0
        %v1232 = vadd.f32 %v1143, %v1231
        %1233 = vmatprep.mubr.f32.mxu0 %v744
        %1234 = vmatmul.mubr.f32.gmra.mrb[0].mxu0 %v742
        %v1235 = vpop.f32.mrb[0].mxu0
        %v1236 = vadd.f32 %v1147, %v1235
        %v1237 = vpop.f32.mrb[0].mxu0
        %v1238 = vadd.f32 %v1149, %v1237
        %1239 = vdwg.mxu0
        %1240 = vmatprep.subr.mxu0 %v923
        %1241 = vmatpush1.msra.mxu0 %v922
        %1242 = vmatprep.subr.mxu0 %v925
        %1243 = vmatpush1.msra.mxu0 %v924
        %1244 = vmatprep.subr.mxu0 %v927
        %1245 = vmatpush1.msra.mxu0 %v926
        %1246 = vmatprep.subr.mxu0 %v929
        %1247 = vmatpush1.msra.mxu0 %v928
        %1248 = vmatprep.subr.mxu0 %v931
        %1249 = vmatpush1.msra.mxu0 %v930
        %1250 = vmatprep.subr.mxu0 %v933
        %1251 = vmatpush1.msra.mxu0 %v932
        %1252 = vmatprep.subr.mxu0 %v935
        %1253 = vmatpush1.msra.mxu0 %v934
        %1254 = vmatprep.subr.mxu0 %v937
        %1255 = vmatpush1.msra.mxu0 %v936
        %1256 = vmatprep.subr.mxu0 %v939
        %1257 = vmatpush1.msra.mxu0 %v938
        %1258 = vmatprep.subr.mxu0 %v941
        %1259 = vmatpush1.msra.mxu0 %v940
        %1260 = vmatprep.subr.mxu0 %v943
        %1261 = vmatpush1.msra.mxu0 %v942
        %1262 = vmatprep.subr.mxu0 %v945
        %1263 = vmatpush1.msra.mxu0 %v944
        %1264 = vmatprep.subr.mxu0 %v947
        %1265 = vmatpush1.msra.mxu0 %v946
        %1266 = vmatprep.subr.mxu0 %v949
        %1267 = vmatpush1.msra.mxu0 %v948
        %1268 = vmatprep.subr.mxu0 %v951
        %1269 = vmatpush1.msra.mxu0 %v950
        %1270 = vmatprep.subr.mxu0 %v953
        %1271 = vmatpush1.msra.mxu0 %v952
        %1272 = vmatprep.subr.mxu0 %v955
        %1273 = vmatpush1.msra.mxu0 %v954
        %1274 = vmatprep.subr.mxu0 %v957
        %1275 = vmatpush1.msra.mxu0 %v956
        %1276 = vmatprep.subr.mxu0 %v959
        %1277 = vmatpush1.msra.mxu0 %v958
        %1278 = vmatprep.subr.mxu0 %v961
        %1279 = vmatpush1.msra.mxu0 %v960
        %1280 = vmatprep.subr.mxu0 %v963
        %1281 = vmatpush1.msra.mxu0 %v962
        %1282 = vmatprep.subr.mxu0 %v965
        %1283 = vmatpush1.msra.mxu0 %v964
        %1284 = vmatprep.subr.mxu0 %v967
        %1285 = vmatpush1.msra.mxu0 %v966
        %1286 = vmatprep.subr.mxu0 %v969
        %1287 = vmatpush1.msra.mxu0 %v968
        %1288 = vmatprep.subr.mxu0 %v971
        %1289 = vmatpush1.msra.mxu0 %v970
        %1290 = vmatprep.subr.mxu0 %v973
        %1291 = vmatpush1.msra.mxu0 %v972
        %1292 = vmatprep.subr.mxu0 %v975
        %1293 = vmatpush1.msra.mxu0 %v974
        %1294 = vmatprep.subr.mxu0 %v977
        %1295 = vmatpush1.msra.mxu0 %v976
        %1296 = vmatprep.subr.mxu0 %v979
        %1297 = vmatpush1.msra.mxu0 %v978
        %1298 = vmatprep.subr.mxu0 %v981
        %1299 = vmatpush1.msra.mxu0 %v980
        %1300 = vmatprep.subr.mxu0 %v983
        %1301 = vmatpush1.msra.mxu0 %v982
        %1302 = vmatprep.subr.mxu0 %v985
        %1303 = vmatpush1.msra.mxu0 %v984
        %1304 = vmatprep.mubr.f32.mxu0 %v750
        %1305 = vmatmul.mubr.f32.gmra.mrb[0].mxu0 %v748
        %v1306 = vpop.f32.mrb[0].mxu0
        %v1307 = vadd.f32 %v1218, %v1306
        %v1308 = vpop.f32.mrb[0].mxu0
        %v1309 = vadd.f32 %v1220, %v1308
        %1310 = vmatprep.mubr.f32.mxu0 %v756
        %1311 = vmatmul.mubr.f32.gmra.mrb[0].mxu0 %v754
        %v1312 = vpop.f32.mrb[0].mxu0
        %v1313 = vadd.f32 %v1224, %v1312
        %v1314 = vpop.f32.mrb[0].mxu0
        %v1315 = vadd.f32 %v1226, %v1314
        %1316 = vmatprep.mubr.f32.mxu0 %v762
        %1317 = vmatmul.mubr.f32.gmra.mrb[0].mxu0 %v760
        %v1318 = vpop.f32.mrb[0].mxu0
        %v1319 = vadd.f32 %v1230, %v1318
        %v1320 = vpop.f32.mrb[0].mxu0
        %v1321 = vadd.f32 %v1232, %v1320
        %1322 = vmatprep.mubr.f32.mxu0 %v768
        %1323 = vmatmul.mubr.f32.gmra.mrb[0].mxu0 %v766
        %v1324 = vpop.f32.mrb[0].mxu0
        %v1325 = vadd.f32 %v1236, %v1324
        %v1326 = vpop.f32.mrb[0].mxu0
        %v1327 = vadd.f32 %v1238, %v1326
        %1328 = vdwg.mxu0
        %1329 = vmatprep.subr.mxu0 %v987
        %1330 = vmatpush1.msra.mxu0 %v986
        %1331 = vmatprep.subr.mxu0 %v989
        %1332 = vmatpush1.msra.mxu0 %v988
        %1333 = vmatprep.subr.mxu0 %v991
        %1334 = vmatpush1.msra.mxu0 %v990
        %1335 = vmatprep.subr.mxu0 %v993
        %1336 = vmatpush1.msra.mxu0 %v992
        %1337 = vmatprep.subr.mxu0 %v995
        %1338 = vmatpush1.msra.mxu0 %v994
        %1339 = vmatprep.subr.mxu0 %v997
        %1340 = vmatpush1.msra.mxu0 %v996
        %1341 = vmatprep.subr.mxu0 %v999
        %1342 = vmatpush1.msra.mxu0 %v998
        %1343 = vmatprep.subr.mxu0 %v1001
        %1344 = vmatpush1.msra.mxu0 %v1000
        %1345 = vmatprep.subr.mxu0 %v1003
        %1346 = vmatpush1.msra.mxu0 %v1002
        %1347 = vmatprep.subr.mxu0 %v1005
        %1348 = vmatpush1.msra.mxu0 %v1004
        %1349 = vmatprep.subr.mxu0 %v1007
        %1350 = vmatpush1.msra.mxu0 %v1006
        %1351 = vmatprep.subr.mxu0 %v1009
        %1352 = vmatpush1.msra.mxu0 %v1008
        %1353 = vmatprep.subr.mxu0 %v1011
        %1354 = vmatpush1.msra.mxu0 %v1010
        %1355 = vmatprep.subr.mxu0 %v1013
        %1356 = vmatpush1.msra.mxu0 %v1012
        %1357 = vmatprep.subr.mxu0 %v1015
        %1358 = vmatpush1.msra.mxu0 %v1014
        %1359 = vmatprep.subr.mxu0 %v1017
        %1360 = vmatpush1.msra.mxu0 %v1016
        %1361 = vmatprep.subr.mxu0 %v1019
        %1362 = vmatpush1.msra.mxu0 %v1018
        %1363 = vmatprep.subr.mxu0 %v1021
        %1364 = vmatpush1.msra.mxu0 %v1020
        %1365 = vmatprep.subr.mxu0 %v1023
        %1366 = vmatpush1.msra.mxu0 %v1022
        %1367 = vmatprep.subr.mxu0 %v1025
        %1368 = vmatpush1.msra.mxu0 %v1024
        %1369 = vmatprep.subr.mxu0 %v1027
        %1370 = vmatpush1.msra.mxu0 %v1026
        %1371 = vmatprep.subr.mxu0 %v1029
        %1372 = vmatpush1.msra.mxu0 %v1028
        %1373 = vmatprep.subr.mxu0 %v1031
        %1374 = vmatpush1.msra.mxu0 %v1030
        %1375 = vmatprep.subr.mxu0 %v1033
        %1376 = vmatpush1.msra.mxu0 %v1032
        %1377 = vmatprep.subr.mxu0 %v1035
        %1378 = vmatpush1.msra.mxu0 %v1034
        %1379 = vmatprep.subr.mxu0 %v1037
        %1380 = vmatpush1.msra.mxu0 %v1036
        %1381 = vmatprep.subr.mxu0 %v1039
        %1382 = vmatpush1.msra.mxu0 %v1038
        %1383 = vmatprep.subr.mxu0 %v1041
        %1384 = vmatpush1.msra.mxu0 %v1040
        %1385 = vmatprep.subr.mxu0 %v1043
        %1386 = vmatpush1.msra.mxu0 %v1042
        %1387 = vmatprep.subr.mxu0 %v1045
        %1388 = vmatpush1.msra.mxu0 %v1044
        %1389 = vmatprep.subr.mxu0 %v1047
        %1390 = vmatpush1.msra.mxu0 %v1046
        %1391 = vmatprep.subr.mxu0 %v1049
        %1392 = vmatpush1.msra.mxu0 %v1048
        %1393 = vmatprep.mubr.f32.mxu0 %v774
        %1394 = vmatmul.mubr.f32.gmra.mrb[0].mxu0 %v772
        %v1395 = vpop.f32.mrb[0].mxu0
        %v1396 = vadd.f32 %v1307, %v1395
        %v1397 = vpop.f32.mrb[0].mxu0
        %v1398 = vadd.f32 %v1309, %v1397
        %1399 = vmatprep.mubr.f32.mxu0 %v780
        %1400 = vmatmul.mubr.f32.gmra.mrb[0].mxu0 %v778
        %v1401 = vpop.f32.mrb[0].mxu0
        %v1402 = vadd.f32 %v1313, %v1401
        %v1403 = vpop.f32.mrb[0].mxu0
        %v1404 = vadd.f32 %v1315, %v1403
        %1405 = vmatprep.mubr.f32.mxu0 %v786
        %1406 = vmatmul.mubr.f32.gmra.mrb[0].mxu0 %v784
        %v1407 = vpop.f32.mrb[0].mxu0
        %v1408 = vadd.f32 %v1319, %v1407
        %v1409 = vpop.f32.mrb[0].mxu0
        %v1410 = vadd.f32 %v1321, %v1409
        %1411 = vmatprep.mubr.f32.mxu0 %v792
        %1412 = vmatmul.mubr.f32.gmra.mrb[0].mxu0 %v790
        %v1413 = vpop.f32.mrb[0].mxu0
        %v1414 = vadd.f32 %v1325, %v1413
        %v1415 = vpop.f32.mrb[0].mxu0
        %v1416 = vadd.f32 %v1327, %v1415
        %1417 = vdwg.mxu0
        %v1418 = vmul.f32 %v1396, 0.2
        %v1419 = vmul.f32 %v1398, 0.2
        %v1420 = vmul.f32 %v1402, 0.2
        %v1421 = vmul.f32 %v1404, 0.2
        %v1422 = vmul.f32 %v1408, 0.2
        %v1423 = vmul.f32 %v1410, 0.2
        %v1424 = vmul.f32 %v1414, 0.2
        %v1425 = vmul.f32 %v1416, 0.2
        %v1426 = vmax.f32 %v1396, %v1418
        %v1427 = vmax.f32 %v1398, %v1419
        %v1428 = vmax.f32 %v1402, %v1420
        %v1429 = vmax.f32 %v1404, %v1421
        %v1430 = vmax.f32 %v1408, %v1422
        %v1431 = vmax.f32 %v1410, %v1423
        %v1432 = vmax.f32 %v1414, %v1424
        %v1433 = vmax.f32 %v1416, %v1425
        %v1434 = vld [vmem:[%s4] sm:$0xff]
        %v1435 = vld [vmem:[%s4 + $0x8] sm:$0xff]
        %v1436 = vld [vmem:[%s4 + $0x10] sm:$0xff]
        %v1437 = vld [vmem:[%s4 + $0x18] sm:$0xff]
        %v1438 = vld [vmem:[%s4 + $0x20] sm:$0xff]
        %v1439 = vld [vmem:[%s4 + $0x28] sm:$0xff]
        %v1440 = vld [vmem:[%s4 + $0x30] sm:$0xff]
        %v1441 = vld [vmem:[%s4 + $0x38] sm:$0xff]
        %vm1442 = vcmask 261120
        %v1444 = vsel %vm1442, %v1434, 0
        %v1447 = vsel %vm1442, %v1435, 0
        %v1450 = vsel %vm1442, %v1436, 0
        %v1453 = vsel %vm1442, %v1437, 0
        %v1456 = vsel %vm1442, %v1438, 0
        %v1459 = vsel %vm1442, %v1439, 0
        %v1462 = vsel %vm1442, %v1440, 0
        %v1465 = vsel %vm1442, %v1441, 0
        %1467 = vmatprep.subr.mxu0 %v1427
        %1468 = vmatpush1.msra.mxu0 %v1426
        %1469 = vmatprep.subr.mxu0 %v1429
        %1470 = vmatpush1.msra.mxu0 %v1428
        %1471 = vmatprep.subr.mxu0 %v1431
        %1472 = vmatpush1.msra.mxu0 %v1430
        %1473 = vmatprep.subr.mxu0 %v1433
        %1474 = vmatpush1.msra.mxu0 %v1432
        %1475 = vmatprep.subr.mxu0 0.0
        %1476 = vmatpush1.msra.mxu0 0.0
        %1477 = vmatprep.subr.mxu0 0.0
        %1478 = vmatpush1.msra.mxu0 0.0
        %1479 = vmatprep.subr.mxu0 0.0
        %1480 = vmatpush1.msra.mxu0 0.0
        %1481 = vmatprep.subr.mxu0 0.0
        %1482 = vmatpush1.msra.mxu0 0.0
        %1483 = vmatprep.subr.mxu0 0.0
        %1484 = vmatpush1.msra.mxu0 0.0
        %1485 = vmatprep.subr.mxu0 0.0
        %1486 = vmatpush1.msra.mxu0 0.0
        %1487 = vmatprep.subr.mxu0 0.0
        %1488 = vmatpush1.msra.mxu0 0.0
        %1489 = vmatprep.subr.mxu0 0.0
        %1490 = vmatpush1.msra.mxu0 0.0
        %1491 = vmatprep.subr.mxu0 0.0
        %1492 = vmatpush1.msra.mxu0 0.0
        %1493 = vmatprep.subr.mxu0 0.0
        %1494 = vmatpush1.msra.mxu0 0.0
        %1495 = vmatprep.subr.mxu0 0.0
        %1496 = vmatpush1.msra.mxu0 0.0
        %1497 = vmatprep.subr.mxu0 0.0
        %1498 = vmatpush1.msra.mxu0 0.0
        %1499 = vmatprep.subr.mxu0 0.0
        %1500 = vmatpush1.msra.mxu0 0.0
        %1501 = vmatprep.subr.mxu0 0.0
        %1502 = vmatpush1.msra.mxu0 0.0
        %1503 = vmatprep.subr.mxu0 0.0
        %1504 = vmatpush1.msra.mxu0 0.0
        %1505 = vmatprep.subr.mxu0 0.0
        %1506 = vmatpush1.msra.mxu0 0.0
        %1507 = vmatprep.subr.mxu0 0.0
        %1508 = vmatpush1.msra.mxu0 0.0
        %1509 = vmatprep.subr.mxu0 0.0
        %1510 = vmatpush1.msra.mxu0 0.0
        %1511 = vmatprep.subr.mxu0 0.0
        %1512 = vmatpush1.msra.mxu0 0.0
        %1513 = vmatprep.subr.mxu0 0.0
        %1514 = vmatpush1.msra.mxu0 0.0
        %1515 = vmatprep.subr.mxu0 0.0
        %1516 = vmatpush1.msra.mxu0 0.0
        %1517 = vmatprep.subr.mxu0 0.0
        %1518 = vmatpush1.msra.mxu0 0.0
        %1519 = vmatprep.subr.mxu0 0.0
        %1520 = vmatpush1.msra.mxu0 0.0
        %1521 = vmatprep.subr.mxu0 0.0
        %1522 = vmatpush1.msra.mxu0 0.0
        %1523 = vmatprep.subr.mxu0 0.0
        %1524 = vmatpush1.msra.mxu0 0.0
        %1525 = vmatprep.subr.mxu0 0.0
        %1526 = vmatpush1.msra.mxu0 0.0
        %1527 = vmatprep.subr.mxu0 0.0
        %1528 = vmatpush1.msra.mxu0 0.0
        %1529 = vmatprep.subr.mxu0 0.0
        %1530 = vmatpush1.msra.mxu0 0.0
        %1531 = vmatprep.mubr.f32.mxu0 0.0
        %1532 = vmatmul.mubr.f32.gmra.mrb[0].mxu0 %v1444
        %v1533 = vpop.f32.mrb[0].mxu0
        %v1534 = vadd.f32 0.0, %v1533
        %v1535 = vpop.f32.mrb[0].mxu0
        %v1536 = vadd.f32 0.0, %v1535
        %1537 = vmatprep.mubr.f32.mxu0 0.0
        %1538 = vmatmul.mubr.f32.gmra.mrb[0].mxu0 %v1447
        %v1539 = vpop.f32.mrb[0].mxu0
        %v1540 = vadd.f32 0.0, %v1539
        %v1541 = vpop.f32.mrb[0].mxu0
        %v1542 = vadd.f32 0.0, %v1541
        %1543 = vmatprep.mubr.f32.mxu0 0.0
        %1544 = vmatmul.mubr.f32.gmra.mrb[0].mxu0 %v1450
        %v1545 = vpop.f32.mrb[0].mxu0
        %v1546 = vadd.f32 0.0, %v1545
        %v1547 = vpop.f32.mrb[0].mxu0
        %v1548 = vadd.f32 0.0, %v1547
        %1549 = vmatprep.mubr.f32.mxu0 0.0
        %1550 = vmatmul.mubr.f32.gmra.mrb[0].mxu0 %v1453
        %v1551 = vpop.f32.mrb[0].mxu0
        %v1552 = vadd.f32 0.0, %v1551
        %v1553 = vpop.f32.mrb[0].mxu0
        %v1554 = vadd.f32 0.0, %v1553
        %1555 = vmatprep.mubr.f32.mxu0 0.0
        %1556 = vmatmul.mubr.f32.gmra.mrb[0].mxu0 %v1456
        %v1557 = vpop.f32.mrb[0].mxu0
        %v1558 = vadd.f32 0.0, %v1557
        %v1559 = vpop.f32.mrb[0].mxu0
        %v1560 = vadd.f32 0.0, %v1559
        %1561 = vmatprep.mubr.f32.mxu0 0.0
        %1562 = vmatmul.mubr.f32.gmra.mrb[0].mxu0 %v1459
        %v1563 = vpop.f32.mrb[0].mxu0
        %v1564 = vadd.f32 0.0, %v1563
        %v1565 = vpop.f32.mrb[0].mxu0
        %v1566 = vadd.f32 0.0, %v1565
        %1567 = vmatprep.mubr.f32.mxu0 0.0
        %1568 = vmatmul.mubr.f32.gmra.mrb[0].mxu0 %v1462
        %v1569 = vpop.f32.mrb[0].mxu0
        %v1570 = vadd.f32 0.0, %v1569
        %v1571 = vpop.f32.mrb[0].mxu0
        %v1572 = vadd.f32 0.0, %v1571
        %1573 = vmatprep.mubr.f32.mxu0 0.0
        %1574 = vmatmul.mubr.f32.gmra.mrb[0].mxu0 %v1465
        %v1575 = vpop.f32.mrb[0].mxu0
        %v1576 = vadd.f32 0.0, %v1575
        %v1577 = vpop.f32.mrb[0].mxu0
        %v1578 = vadd.f32 0.0, %v1577
        %1579 = vdwg.mxu0
        %v1580 = vld [vmem:[#allocation5] sm:$0xff]
        %v1581 = vld [vmem:[#allocation5 + $0x8] sm:$0xff]
        %v1582 = vld [vmem:[#allocation5 + $0x10] sm:$0xff]
        %v1583 = vld [vmem:[#allocation5 + $0x18] sm:$0xff]
        %v1584 = vld [vmem:[#allocation5 + $0x20] sm:$0xff]
        %v1585 = vld [vmem:[#allocation5 + $0x28] sm:$0xff]
        %v1586 = vld [vmem:[#allocation5 + $0x30] sm:$0xff]
        %v1587 = vld [vmem:[#allocation5 + $0x38] sm:$0xff]
        %v1588 = vld [vmem:[#allocation5 + $0x40] sm:$0xff]
        %v1589 = vld [vmem:[#allocation5 + $0x48] sm:$0xff]
        %v1590 = vld [vmem:[#allocation5 + $0x50] sm:$0xff]
        %v1591 = vld [vmem:[#allocation5 + $0x58] sm:$0xff]
        %v1592 = vld [vmem:[#allocation5 + $0x60] sm:$0xff]
        %v1593 = vld [vmem:[#allocation5 + $0x68] sm:$0xff]
        %v1594 = vld [vmem:[#allocation5 + $0x70] sm:$0xff]
        %v1595 = vld [vmem:[#allocation5 + $0x78] sm:$0xff]
        %v1596 = vld [vmem:[#allocation5 + $0x80] sm:$0xff]
        %v1597 = vld [vmem:[#allocation5 + $0x88] sm:$0xff]
        %v1598 = vld [vmem:[#allocation5 + $0x90] sm:$0xff]
        %v1599 = vld [vmem:[#allocation5 + $0x98] sm:$0xff]
        %v1600 = vld [vmem:[#allocation5 + $0xa0] sm:$0xff]
        %v1601 = vld [vmem:[#allocation5 + $0xa8] sm:$0xff]
        %v1602 = vld [vmem:[#allocation5 + $0xb0] sm:$0xff]
        %v1603 = vld [vmem:[#allocation5 + $0xb8] sm:$0xff]
        %v1604 = vld [vmem:[#allocation5 + $0xc0] sm:$0xff]
        %v1605 = vld [vmem:[#allocation5 + $0xc8] sm:$0xff]
        %v1606 = vld [vmem:[#allocation5 + $0xd0] sm:$0xff]
        %v1607 = vld [vmem:[#allocation5 + $0xd8] sm:$0xff]
        %v1608 = vld [vmem:[#allocation5 + $0xe0] sm:$0xff]
        %v1609 = vld [vmem:[#allocation5 + $0xe8] sm:$0xff]
        %v1610 = vld [vmem:[#allocation5 + $0xf0] sm:$0xff]
        %v1611 = vld [vmem:[#allocation5 + $0xf8] sm:$0xff]
        %v1612 = vld [vmem:[#allocation5 + $0x100] sm:$0xff]
        %v1613 = vld [vmem:[#allocation5 + $0x108] sm:$0xff]
        %v1614 = vld [vmem:[#allocation5 + $0x110] sm:$0xff]
        %v1615 = vld [vmem:[#allocation5 + $0x118] sm:$0xff]
        %v1616 = vld [vmem:[#allocation5 + $0x120] sm:$0xff]
        %v1617 = vld [vmem:[#allocation5 + $0x128] sm:$0xff]
        %v1618 = vld [vmem:[#allocation5 + $0x130] sm:$0xff]
        %v1619 = vld [vmem:[#allocation5 + $0x138] sm:$0xff]
        %v1620 = vld [vmem:[#allocation5 + $0x140] sm:$0xff]
        %v1621 = vld [vmem:[#allocation5 + $0x148] sm:$0xff]
        %v1622 = vld [vmem:[#allocation5 + $0x150] sm:$0xff]
        %v1623 = vld [vmem:[#allocation5 + $0x158] sm:$0xff]
        %v1624 = vld [vmem:[#allocation5 + $0x160] sm:$0xff]
        %v1625 = vld [vmem:[#allocation5 + $0x168] sm:$0xff]
        %v1626 = vld [vmem:[#allocation5 + $0x170] sm:$0xff]
        %v1627 = vld [vmem:[#allocation5 + $0x178] sm:$0xff]
        %v1628 = vld [vmem:[#allocation5 + $0x180] sm:$0xff]
        %v1629 = vld [vmem:[#allocation5 + $0x188] sm:$0xff]
        %v1630 = vld [vmem:[#allocation5 + $0x190] sm:$0xff]
        %v1631 = vld [vmem:[#allocation5 + $0x198] sm:$0xff]
        %v1632 = vld [vmem:[#allocation5 + $0x1a0] sm:$0xff]
        %v1633 = vld [vmem:[#allocation5 + $0x1a8] sm:$0xff]
        %v1634 = vld [vmem:[#allocation5 + $0x1b0] sm:$0xff]
        %v1635 = vld [vmem:[#allocation5 + $0x1b8] sm:$0xff]
        %v1636 = vld [vmem:[#allocation5 + $0x1c0] sm:$0xff]
        %v1637 = vld [vmem:[#allocation5 + $0x1c8] sm:$0xff]
        %v1638 = vld [vmem:[#allocation5 + $0x1d0] sm:$0xff]
        %v1639 = vld [vmem:[#allocation5 + $0x1d8] sm:$0xff]
        %v1640 = vld [vmem:[#allocation5 + $0x1e0] sm:$0xff]
        %v1641 = vld [vmem:[#allocation5 + $0x1e8] sm:$0xff]
        %v1642 = vld [vmem:[#allocation5 + $0x1f0] sm:$0xff]
        %v1643 = vld [vmem:[#allocation5 + $0x1f8] sm:$0xff]
        %v1644 = vld [vmem:[#allocation5 + $0x200] sm:$0xff]
        %v1645 = vld [vmem:[#allocation5 + $0x208] sm:$0xff]
        %v1646 = vld [vmem:[#allocation5 + $0x210] sm:$0xff]
        %v1647 = vld [vmem:[#allocation5 + $0x218] sm:$0xff]
        %v1648 = vld [vmem:[#allocation5 + $0x220] sm:$0xff]
        %v1649 = vld [vmem:[#allocation5 + $0x228] sm:$0xff]
        %v1650 = vld [vmem:[#allocation5 + $0x230] sm:$0xff]
        %v1651 = vld [vmem:[#allocation5 + $0x238] sm:$0xff]
        %v1652 = vld [vmem:[#allocation5 + $0x240] sm:$0xff]
        %v1653 = vld [vmem:[#allocation5 + $0x248] sm:$0xff]
        %v1654 = vld [vmem:[#allocation5 + $0x250] sm:$0xff]
        %v1655 = vld [vmem:[#allocation5 + $0x258] sm:$0xff]
        %v1656 = vld [vmem:[#allocation5 + $0x260] sm:$0xff]
        %v1657 = vld [vmem:[#allocation5 + $0x268] sm:$0xff]
        %v1658 = vld [vmem:[#allocation5 + $0x270] sm:$0xff]
        %v1659 = vld [vmem:[#allocation5 + $0x278] sm:$0xff]
        %v1660 = vld [vmem:[#allocation5 + $0x280] sm:$0xff]
        %v1661 = vld [vmem:[#allocation5 + $0x288] sm:$0xff]
        %v1662 = vld [vmem:[#allocation5 + $0x290] sm:$0xff]
        %v1663 = vld [vmem:[#allocation5 + $0x298] sm:$0xff]
        %v1664 = vld [vmem:[#allocation5 + $0x2a0] sm:$0xff]
        %v1665 = vld [vmem:[#allocation5 + $0x2a8] sm:$0xff]
        %v1666 = vld [vmem:[#allocation5 + $0x2b0] sm:$0xff]
        %v1667 = vld [vmem:[#allocation5 + $0x2b8] sm:$0xff]
        %v1668 = vld [vmem:[#allocation5 + $0x2c0] sm:$0xff]
        %v1669 = vld [vmem:[#allocation5 + $0x2c8] sm:$0xff]
        %v1670 = vld [vmem:[#allocation5 + $0x2d0] sm:$0xff]
        %v1671 = vld [vmem:[#allocation5 + $0x2d8] sm:$0xff]
        %v1672 = vld [vmem:[#allocation5 + $0x2e0] sm:$0xff]
        %v1673 = vld [vmem:[#allocation5 + $0x2e8] sm:$0xff]
        %v1674 = vld [vmem:[#allocation5 + $0x2f0] sm:$0xff]
        %v1675 = vld [vmem:[#allocation5 + $0x2f8] sm:$0xff]
        %v1676 = vld [vmem:[#allocation5 + $0x300] sm:$0xff]
        %v1677 = vld [vmem:[#allocation5 + $0x308] sm:$0xff]
        %v1678 = vld [vmem:[#allocation5 + $0x310] sm:$0xff]
        %v1679 = vld [vmem:[#allocation5 + $0x318] sm:$0xff]
        %v1680 = vld [vmem:[#allocation5 + $0x320] sm:$0xff]
        %v1681 = vld [vmem:[#allocation5 + $0x328] sm:$0xff]
        %v1682 = vld [vmem:[#allocation5 + $0x330] sm:$0xff]
        %v1683 = vld [vmem:[#allocation5 + $0x338] sm:$0xff]
        %v1684 = vld [vmem:[#allocation5 + $0x340] sm:$0xff]
        %v1685 = vld [vmem:[#allocation5 + $0x348] sm:$0xff]
        %v1686 = vld [vmem:[#allocation5 + $0x350] sm:$0xff]
        %v1687 = vld [vmem:[#allocation5 + $0x358] sm:$0xff]
        %v1688 = vld [vmem:[#allocation5 + $0x360] sm:$0xff]
        %v1689 = vld [vmem:[#allocation5 + $0x368] sm:$0xff]
        %v1690 = vld [vmem:[#allocation5 + $0x370] sm:$0xff]
        %v1691 = vld [vmem:[#allocation5 + $0x378] sm:$0xff]
        %v1692 = vld [vmem:[#allocation5 + $0x380] sm:$0xff]
        %v1693 = vld [vmem:[#allocation5 + $0x388] sm:$0xff]
        %v1694 = vld [vmem:[#allocation5 + $0x390] sm:$0xff]
        %v1695 = vld [vmem:[#allocation5 + $0x398] sm:$0xff]
        %v1696 = vld [vmem:[#allocation5 + $0x3a0] sm:$0xff]
        %v1697 = vld [vmem:[#allocation5 + $0x3a8] sm:$0xff]
        %v1698 = vld [vmem:[#allocation5 + $0x3b0] sm:$0xff]
        %v1699 = vld [vmem:[#allocation5 + $0x3b8] sm:$0xff]
        %v1700 = vld [vmem:[#allocation5 + $0x3c0] sm:$0xff]
        %v1701 = vld [vmem:[#allocation5 + $0x3c8] sm:$0xff]
        %v1702 = vld [vmem:[#allocation5 + $0x3d0] sm:$0xff]
        %v1703 = vld [vmem:[#allocation5 + $0x3d8] sm:$0xff]
        %v1704 = vld [vmem:[#allocation5 + $0x3e0] sm:$0xff]
        %v1705 = vld [vmem:[#allocation5 + $0x3e8] sm:$0xff]
        %v1706 = vld [vmem:[#allocation5 + $0x3f0] sm:$0xff]
        %v1707 = vld [vmem:[#allocation5 + $0x3f8] sm:$0xff]
        %v1708 = vld [vmem:[#allocation5 + $0x400] sm:$0xff]
        %v1709 = vld [vmem:[#allocation5 + $0x408] sm:$0xff]
        %v1710 = vld [vmem:[#allocation5 + $0x410] sm:$0xff]
        %v1711 = vld [vmem:[#allocation5 + $0x418] sm:$0xff]
        %v1712 = vld [vmem:[#allocation5 + $0x420] sm:$0xff]
        %v1713 = vld [vmem:[#allocation5 + $0x428] sm:$0xff]
        %v1714 = vld [vmem:[#allocation5 + $0x430] sm:$0xff]
        %v1715 = vld [vmem:[#allocation5 + $0x438] sm:$0xff]
        %v1716 = vld [vmem:[#allocation5 + $0x440] sm:$0xff]
        %v1717 = vld [vmem:[#allocation5 + $0x448] sm:$0xff]
        %v1718 = vld [vmem:[#allocation5 + $0x450] sm:$0xff]
        %v1719 = vld [vmem:[#allocation5 + $0x458] sm:$0xff]
        %v1720 = vld [vmem:[#allocation5 + $0x460] sm:$0xff]
        %v1721 = vld [vmem:[#allocation5 + $0x468] sm:$0xff]
        %v1722 = vld [vmem:[#allocation5 + $0x470] sm:$0xff]
        %v1723 = vld [vmem:[#allocation5 + $0x478] sm:$0xff]
        %v1724 = vld [vmem:[#allocation5 + $0x480] sm:$0xff]
        %v1725 = vld [vmem:[#allocation5 + $0x488] sm:$0xff]
        %v1726 = vld [vmem:[#allocation5 + $0x490] sm:$0xff]
        %v1727 = vld [vmem:[#allocation5 + $0x498] sm:$0xff]
        %v1728 = vld [vmem:[#allocation5 + $0x4a0] sm:$0xff]
        %v1729 = vld [vmem:[#allocation5 + $0x4a8] sm:$0xff]
        %v1730 = vld [vmem:[#allocation5 + $0x4b0] sm:$0xff]
        %v1731 = vld [vmem:[#allocation5 + $0x4b8] sm:$0xff]
        %v1732 = vld [vmem:[#allocation5 + $0x4c0] sm:$0xff]
        %v1733 = vld [vmem:[#allocation5 + $0x4c8] sm:$0xff]
        %v1734 = vld [vmem:[#allocation5 + $0x4d0] sm:$0xff]
        %v1735 = vld [vmem:[#allocation5 + $0x4d8] sm:$0xff]
        %v1736 = vld [vmem:[#allocation5 + $0x4e0] sm:$0xff]
        %v1737 = vld [vmem:[#allocation5 + $0x4e8] sm:$0xff]
        %v1738 = vld [vmem:[#allocation5 + $0x4f0] sm:$0xff]
        %v1739 = vld [vmem:[#allocation5 + $0x4f8] sm:$0xff]
        %v1740 = vld [vmem:[#allocation5 + $0x500] sm:$0xff]
        %v1741 = vld [vmem:[#allocation5 + $0x508] sm:$0xff]
        %v1742 = vld [vmem:[#allocation5 + $0x510] sm:$0xff]
        %v1743 = vld [vmem:[#allocation5 + $0x518] sm:$0xff]
        %v1744 = vld [vmem:[#allocation5 + $0x520] sm:$0xff]
        %v1745 = vld [vmem:[#allocation5 + $0x528] sm:$0xff]
        %v1746 = vld [vmem:[#allocation5 + $0x530] sm:$0xff]
        %v1747 = vld [vmem:[#allocation5 + $0x538] sm:$0xff]
        %v1748 = vld [vmem:[#allocation5 + $0x540] sm:$0xff]
        %v1749 = vld [vmem:[#allocation5 + $0x548] sm:$0xff]
        %v1750 = vld [vmem:[#allocation5 + $0x550] sm:$0xff]
        %v1751 = vld [vmem:[#allocation5 + $0x558] sm:$0xff]
        %v1752 = vld [vmem:[#allocation5 + $0x560] sm:$0xff]
        %v1753 = vld [vmem:[#allocation5 + $0x568] sm:$0xff]
        %v1754 = vld [vmem:[#allocation5 + $0x570] sm:$0xff]
        %v1755 = vld [vmem:[#allocation5 + $0x578] sm:$0xff]
        %v1756 = vld [vmem:[#allocation5 + $0x580] sm:$0xff]
        %v1757 = vld [vmem:[#allocation5 + $0x588] sm:$0xff]
        %v1758 = vld [vmem:[#allocation5 + $0x590] sm:$0xff]
        %v1759 = vld [vmem:[#allocation5 + $0x598] sm:$0xff]
        %v1760 = vld [vmem:[#allocation5 + $0x5a0] sm:$0xff]
        %v1761 = vld [vmem:[#allocation5 + $0x5a8] sm:$0xff]
        %v1762 = vld [vmem:[#allocation5 + $0x5b0] sm:$0xff]
        %v1763 = vld [vmem:[#allocation5 + $0x5b8] sm:$0xff]
        %v1764 = vld [vmem:[#allocation5 + $0x5c0] sm:$0xff]
        %v1765 = vld [vmem:[#allocation5 + $0x5c8] sm:$0xff]
        %v1766 = vld [vmem:[#allocation5 + $0x5d0] sm:$0xff]
        %v1767 = vld [vmem:[#allocation5 + $0x5d8] sm:$0xff]
        %v1768 = vld [vmem:[#allocation5 + $0x5e0] sm:$0xff]
        %v1769 = vld [vmem:[#allocation5 + $0x5e8] sm:$0xff]
        %v1770 = vld [vmem:[#allocation5 + $0x5f0] sm:$0xff]
        %v1771 = vld [vmem:[#allocation5 + $0x5f8] sm:$0xff]
        %v1772 = vld [vmem:[#allocation5 + $0x600] sm:$0xff]
        %v1773 = vld [vmem:[#allocation5 + $0x608] sm:$0xff]
        %v1774 = vld [vmem:[#allocation5 + $0x610] sm:$0xff]
        %v1775 = vld [vmem:[#allocation5 + $0x618] sm:$0xff]
        %v1776 = vld [vmem:[#allocation5 + $0x620] sm:$0xff]
        %v1777 = vld [vmem:[#allocation5 + $0x628] sm:$0xff]
        %v1778 = vld [vmem:[#allocation5 + $0x630] sm:$0xff]
        %v1779 = vld [vmem:[#allocation5 + $0x638] sm:$0xff]
        %v1780 = vld [vmem:[#allocation5 + $0x640] sm:$0xff]
        %v1781 = vld [vmem:[#allocation5 + $0x648] sm:$0xff]
        %v1782 = vld [vmem:[#allocation5 + $0x650] sm:$0xff]
        %v1783 = vld [vmem:[#allocation5 + $0x658] sm:$0xff]
        %v1784 = vld [vmem:[#allocation5 + $0x660] sm:$0xff]
        %v1785 = vld [vmem:[#allocation5 + $0x668] sm:$0xff]
        %v1786 = vld [vmem:[#allocation5 + $0x670] sm:$0xff]
        %v1787 = vld [vmem:[#allocation5 + $0x678] sm:$0xff]
        %v1788 = vld [vmem:[#allocation5 + $0x680] sm:$0xff]
        %v1789 = vld [vmem:[#allocation5 + $0x688] sm:$0xff]
        %v1790 = vld [vmem:[#allocation5 + $0x690] sm:$0xff]
        %v1791 = vld [vmem:[#allocation5 + $0x698] sm:$0xff]
        %v1792 = vld [vmem:[#allocation5 + $0x6a0] sm:$0xff]
        %v1793 = vld [vmem:[#allocation5 + $0x6a8] sm:$0xff]
        %v1794 = vld [vmem:[#allocation5 + $0x6b0] sm:$0xff]
        %v1795 = vld [vmem:[#allocation5 + $0x6b8] sm:$0xff]
        %v1796 = vld [vmem:[#allocation5 + $0x6c0] sm:$0xff]
        %v1797 = vld [vmem:[#allocation5 + $0x6c8] sm:$0xff]
        %v1798 = vld [vmem:[#allocation5 + $0x6d0] sm:$0xff]
        %v1799 = vld [vmem:[#allocation5 + $0x6d8] sm:$0xff]
        %v1800 = vld [vmem:[#allocation5 + $0x6e0] sm:$0xff]
        %v1801 = vld [vmem:[#allocation5 + $0x6e8] sm:$0xff]
        %v1802 = vld [vmem:[#allocation5 + $0x6f0] sm:$0xff]
        %v1803 = vld [vmem:[#allocation5 + $0x6f8] sm:$0xff]
        %v1804 = vld [vmem:[#allocation5 + $0x700] sm:$0xff]
        %v1805 = vld [vmem:[#allocation5 + $0x708] sm:$0xff]
        %v1806 = vld [vmem:[#allocation5 + $0x710] sm:$0xff]
        %v1807 = vld [vmem:[#allocation5 + $0x718] sm:$0xff]
        %v1808 = vld [vmem:[#allocation5 + $0x720] sm:$0xff]
        %v1809 = vld [vmem:[#allocation5 + $0x728] sm:$0xff]
        %v1810 = vld [vmem:[#allocation5 + $0x730] sm:$0xff]
        %v1811 = vld [vmem:[#allocation5 + $0x738] sm:$0xff]
        %v1812 = vld [vmem:[#allocation5 + $0x740] sm:$0xff]
        %v1813 = vld [vmem:[#allocation5 + $0x748] sm:$0xff]
        %v1814 = vld [vmem:[#allocation5 + $0x750] sm:$0xff]
        %v1815 = vld [vmem:[#allocation5 + $0x758] sm:$0xff]
        %v1816 = vld [vmem:[#allocation5 + $0x760] sm:$0xff]
        %v1817 = vld [vmem:[#allocation5 + $0x768] sm:$0xff]
        %v1818 = vld [vmem:[#allocation5 + $0x770] sm:$0xff]
        %v1819 = vld [vmem:[#allocation5 + $0x778] sm:$0xff]
        %v1820 = vld [vmem:[#allocation5 + $0x780] sm:$0xff]
        %v1821 = vld [vmem:[#allocation5 + $0x788] sm:$0xff]
        %v1822 = vld [vmem:[#allocation5 + $0x790] sm:$0xff]
        %v1823 = vld [vmem:[#allocation5 + $0x798] sm:$0xff]
        %v1824 = vld [vmem:[#allocation5 + $0x7a0] sm:$0xff]
        %v1825 = vld [vmem:[#allocation5 + $0x7a8] sm:$0xff]
        %v1826 = vld [vmem:[#allocation5 + $0x7b0] sm:$0xff]
        %v1827 = vld [vmem:[#allocation5 + $0x7b8] sm:$0xff]
        %v1828 = vld [vmem:[#allocation5 + $0x7c0] sm:$0xff]
        %v1829 = vld [vmem:[#allocation5 + $0x7c8] sm:$0xff]
        %v1830 = vld [vmem:[#allocation5 + $0x7d0] sm:$0xff]
        %v1831 = vld [vmem:[#allocation5 + $0x7d8] sm:$0xff]
        %v1832 = vld [vmem:[#allocation5 + $0x7e0] sm:$0xff]
        %v1833 = vld [vmem:[#allocation5 + $0x7e8] sm:$0xff]
        %v1834 = vld [vmem:[#allocation5 + $0x7f0] sm:$0xff]
        %v1835 = vld [vmem:[#allocation5 + $0x7f8] sm:$0xff]
        %v1836 = vld [vmem:[%s6] sm:$0x3]
        %v1838 = vlaneseq
        %v1839 = vshrl.u32 %v1838, 7
        %v1840 = vsub.s32 0, %v1839
        %v1841 = vrot.slane %v1836, %v1840
        %v1842 = vlaneseq
        %v1843 = vshrl.u32 %v1842, 7
        %v1844 = vsub.s32 1, %v1843
        %v1845 = vrot.slane %v1836, %v1844
        %1848 = vmatprep.subr.mxu0 %v1581
        %1849 = vmatpush1.msra.mxu0 %v1580
        %1850 = vmatprep.subr.mxu0 %v1583
        %1851 = vmatpush1.msra.mxu0 %v1582
        %1852 = vmatprep.subr.mxu0 %v1585
        %1853 = vmatpush1.msra.mxu0 %v1584
        %1854 = vmatprep.subr.mxu0 %v1587
        %1855 = vmatpush1.msra.mxu0 %v1586
        %1856 = vmatprep.subr.mxu0 %v1589
        %1857 = vmatpush1.msra.mxu0 %v1588
        %1858 = vmatprep.subr.mxu0 %v1591
        %1859 = vmatpush1.msra.mxu0 %v1590
        %1860 = vmatprep.subr.mxu0 %v1593
        %1861 = vmatpush1.msra.mxu0 %v1592
        %1862 = vmatprep.subr.mxu0 %v1595
        %1863 = vmatpush1.msra.mxu0 %v1594
        %1864 = vmatprep.subr.mxu0 %v1597
        %1865 = vmatpush1.msra.mxu0 %v1596
        %1866 = vmatprep.subr.mxu0 %v1599
        %1867 = vmatpush1.msra.mxu0 %v1598
        %1868 = vmatprep.subr.mxu0 %v1601
        %1869 = vmatpush1.msra.mxu0 %v1600
        %1870 = vmatprep.subr.mxu0 %v1603
        %1871 = vmatpush1.msra.mxu0 %v1602
        %1872 = vmatprep.subr.mxu0 %v1605
        %1873 = vmatpush1.msra.mxu0 %v1604
        %1874 = vmatprep.subr.mxu0 %v1607
        %1875 = vmatpush1.msra.mxu0 %v1606
        %1876 = vmatprep.subr.mxu0 %v1609
        %1877 = vmatpush1.msra.mxu0 %v1608
        %1878 = vmatprep.subr.mxu0 %v1611
        %1879 = vmatpush1.msra.mxu0 %v1610
        %1880 = vmatprep.subr.mxu0 %v1613
        %1881 = vmatpush1.msra.mxu0 %v1612
        %1882 = vmatprep.subr.mxu0 %v1615
        %1883 = vmatpush1.msra.mxu0 %v1614
        %1884 = vmatprep.subr.mxu0 %v1617
        %1885 = vmatpush1.msra.mxu0 %v1616
        %1886 = vmatprep.subr.mxu0 %v1619
        %1887 = vmatpush1.msra.mxu0 %v1618
        %1888 = vmatprep.subr.mxu0 %v1621
        %1889 = vmatpush1.msra.mxu0 %v1620
        %1890 = vmatprep.subr.mxu0 %v1623
        %1891 = vmatpush1.msra.mxu0 %v1622
        %1892 = vmatprep.subr.mxu0 %v1625
        %1893 = vmatpush1.msra.mxu0 %v1624
        %1894 = vmatprep.subr.mxu0 %v1627
        %1895 = vmatpush1.msra.mxu0 %v1626
        %1896 = vmatprep.subr.mxu0 %v1629
        %1897 = vmatpush1.msra.mxu0 %v1628
        %1898 = vmatprep.subr.mxu0 %v1631
        %1899 = vmatpush1.msra.mxu0 %v1630
        %1900 = vmatprep.subr.mxu0 %v1633
        %1901 = vmatpush1.msra.mxu0 %v1632
        %1902 = vmatprep.subr.mxu0 %v1635
        %1903 = vmatpush1.msra.mxu0 %v1634
        %1904 = vmatprep.subr.mxu0 %v1637
        %1905 = vmatpush1.msra.mxu0 %v1636
        %1906 = vmatprep.subr.mxu0 %v1639
        %1907 = vmatpush1.msra.mxu0 %v1638
        %1908 = vmatprep.subr.mxu0 %v1641
        %1909 = vmatpush1.msra.mxu0 %v1640
        %1910 = vmatprep.subr.mxu0 %v1643
        %1911 = vmatpush1.msra.mxu0 %v1642
        %1912 = vmatprep.mubr.f32.mxu0 %v1536
        %1913 = vmatmul.mubr.f32.gmra.mrb[0].mxu0 %v1534
        %v1914 = vpop.f32.mrb[0].mxu0
        %v1915 = vadd.f32 %v1841, %v1914
        %v1916 = vpop.f32.mrb[0].mxu0
        %v1917 = vadd.f32 %v1845, %v1916
        %1918 = vmatprep.mubr.f32.mxu0 %v1542
        %1919 = vmatmul.mubr.f32.gmra.mrb[0].mxu0 %v1540
        %v1920 = vpop.f32.mrb[0].mxu0
        %v1921 = vadd.f32 %v1841, %v1920
        %v1922 = vpop.f32.mrb[0].mxu0
        %v1923 = vadd.f32 %v1845, %v1922
        %1924 = vdwg.mxu0
        %1925 = vmatprep.subr.mxu0 %v1645
        %1926 = vmatpush1.msra.mxu0 %v1644
        %1927 = vmatprep.subr.mxu0 %v1647
        %1928 = vmatpush1.msra.mxu0 %v1646
        %1929 = vmatprep.subr.mxu0 %v1649
        %1930 = vmatpush1.msra.mxu0 %v1648
        %1931 = vmatprep.subr.mxu0 %v1651
        %1932 = vmatpush1.msra.mxu0 %v1650
        %1933 = vmatprep.subr.mxu0 %v1653
        %1934 = vmatpush1.msra.mxu0 %v1652
        %1935 = vmatprep.subr.mxu0 %v1655
        %1936 = vmatpush1.msra.mxu0 %v1654
        %1937 = vmatprep.subr.mxu0 %v1657
        %1938 = vmatpush1.msra.mxu0 %v1656
        %1939 = vmatprep.subr.mxu0 %v1659
        %1940 = vmatpush1.msra.mxu0 %v1658
        %1941 = vmatprep.subr.mxu0 %v1661
        %1942 = vmatpush1.msra.mxu0 %v1660
        %1943 = vmatprep.subr.mxu0 %v1663
        %1944 = vmatpush1.msra.mxu0 %v1662
        %1945 = vmatprep.subr.mxu0 %v1665
        %1946 = vmatpush1.msra.mxu0 %v1664
        %1947 = vmatprep.subr.mxu0 %v1667
        %1948 = vmatpush1.msra.mxu0 %v1666
        %1949 = vmatprep.subr.mxu0 %v1669
        %1950 = vmatpush1.msra.mxu0 %v1668
        %1951 = vmatprep.subr.mxu0 %v1671
        %1952 = vmatpush1.msra.mxu0 %v1670
        %1953 = vmatprep.subr.mxu0 %v1673
        %1954 = vmatpush1.msra.mxu0 %v1672
        %1955 = vmatprep.subr.mxu0 %v1675
        %1956 = vmatpush1.msra.mxu0 %v1674
        %1957 = vmatprep.subr.mxu0 %v1677
        %1958 = vmatpush1.msra.mxu0 %v1676
        %1959 = vmatprep.subr.mxu0 %v1679
        %1960 = vmatpush1.msra.mxu0 %v1678
        %1961 = vmatprep.subr.mxu0 %v1681
        %1962 = vmatpush1.msra.mxu0 %v1680
        %1963 = vmatprep.subr.mxu0 %v1683
        %1964 = vmatpush1.msra.mxu0 %v1682
        %1965 = vmatprep.subr.mxu0 %v1685
        %1966 = vmatpush1.msra.mxu0 %v1684
        %1967 = vmatprep.subr.mxu0 %v1687
        %1968 = vmatpush1.msra.mxu0 %v1686
        %1969 = vmatprep.subr.mxu0 %v1689
        %1970 = vmatpush1.msra.mxu0 %v1688
        %1971 = vmatprep.subr.mxu0 %v1691
        %1972 = vmatpush1.msra.mxu0 %v1690
        %1973 = vmatprep.subr.mxu0 %v1693
        %1974 = vmatpush1.msra.mxu0 %v1692
        %1975 = vmatprep.subr.mxu0 %v1695
        %1976 = vmatpush1.msra.mxu0 %v1694
        %1977 = vmatprep.subr.mxu0 %v1697
        %1978 = vmatpush1.msra.mxu0 %v1696
        %1979 = vmatprep.subr.mxu0 %v1699
        %1980 = vmatpush1.msra.mxu0 %v1698
        %1981 = vmatprep.subr.mxu0 %v1701
        %1982 = vmatpush1.msra.mxu0 %v1700
        %1983 = vmatprep.subr.mxu0 %v1703
        %1984 = vmatpush1.msra.mxu0 %v1702
        %1985 = vmatprep.subr.mxu0 %v1705
        %1986 = vmatpush1.msra.mxu0 %v1704
        %1987 = vmatprep.subr.mxu0 %v1707
        %1988 = vmatpush1.msra.mxu0 %v1706
        %1989 = vmatprep.mubr.f32.mxu0 %v1548
        %1990 = vmatmul.mubr.f32.gmra.mrb[0].mxu0 %v1546
        %v1991 = vpop.f32.mrb[0].mxu0
        %v1992 = vadd.f32 %v1915, %v1991
        %v1993 = vpop.f32.mrb[0].mxu0
        %v1994 = vadd.f32 %v1917, %v1993
        %1995 = vmatprep.mubr.f32.mxu0 %v1554
        %1996 = vmatmul.mubr.f32.gmra.mrb[0].mxu0 %v1552
        %v1997 = vpop.f32.mrb[0].mxu0
        %v1998 = vadd.f32 %v1921, %v1997
        %v1999 = vpop.f32.mrb[0].mxu0
        %v2000 = vadd.f32 %v1923, %v1999
        %2001 = vdwg.mxu0
        %2002 = vmatprep.subr.mxu0 %v1709
        %2003 = vmatpush1.msra.mxu0 %v1708
        %2004 = vmatprep.subr.mxu0 %v1711
        %2005 = vmatpush1.msra.mxu0 %v1710
        %2006 = vmatprep.subr.mxu0 %v1713
        %2007 = vmatpush1.msra.mxu0 %v1712
        %2008 = vmatprep.subr.mxu0 %v1715
        %2009 = vmatpush1.msra.mxu0 %v1714
        %2010 = vmatprep.subr.mxu0 %v1717
        %2011 = vmatpush1.msra.mxu0 %v1716
        %2012 = vmatprep.subr.mxu0 %v1719
        %2013 = vmatpush1.msra.mxu0 %v1718
        %2014 = vmatprep.subr.mxu0 %v1721
        %2015 = vmatpush1.msra.mxu0 %v1720
        %2016 = vmatprep.subr.mxu0 %v1723
        %2017 = vmatpush1.msra.mxu0 %v1722
        %2018 = vmatprep.subr.mxu0 %v1725
        %2019 = vmatpush1.msra.mxu0 %v1724
        %2020 = vmatprep.subr.mxu0 %v1727
        %2021 = vmatpush1.msra.mxu0 %v1726
        %2022 = vmatprep.subr.mxu0 %v1729
        %2023 = vmatpush1.msra.mxu0 %v1728
        %2024 = vmatprep.subr.mxu0 %v1731
        %2025 = vmatpush1.msra.mxu0 %v1730
        %2026 = vmatprep.subr.mxu0 %v1733
        %2027 = vmatpush1.msra.mxu0 %v1732
        %2028 = vmatprep.subr.mxu0 %v1735
        %2029 = vmatpush1.msra.mxu0 %v1734
        %2030 = vmatprep.subr.mxu0 %v1737
        %2031 = vmatpush1.msra.mxu0 %v1736
        %2032 = vmatprep.subr.mxu0 %v1739
        %2033 = vmatpush1.msra.mxu0 %v1738
        %2034 = vmatprep.subr.mxu0 %v1741
        %2035 = vmatpush1.msra.mxu0 %v1740
        %2036 = vmatprep.subr.mxu0 %v1743
        %2037 = vmatpush1.msra.mxu0 %v1742
        %2038 = vmatprep.subr.mxu0 %v1745
        %2039 = vmatpush1.msra.mxu0 %v1744
        %2040 = vmatprep.subr.mxu0 %v1747
        %2041 = vmatpush1.msra.mxu0 %v1746
        %2042 = vmatprep.subr.mxu0 %v1749
        %2043 = vmatpush1.msra.mxu0 %v1748
        %2044 = vmatprep.subr.mxu0 %v1751
        %2045 = vmatpush1.msra.mxu0 %v1750
        %2046 = vmatprep.subr.mxu0 %v1753
        %2047 = vmatpush1.msra.mxu0 %v1752
        %2048 = vmatprep.subr.mxu0 %v1755
        %2049 = vmatpush1.msra.mxu0 %v1754
        %2050 = vmatprep.subr.mxu0 %v1757
        %2051 = vmatpush1.msra.mxu0 %v1756
        %2052 = vmatprep.subr.mxu0 %v1759
        %2053 = vmatpush1.msra.mxu0 %v1758
        %2054 = vmatprep.subr.mxu0 %v1761
        %2055 = vmatpush1.msra.mxu0 %v1760
        %2056 = vmatprep.subr.mxu0 %v1763
        %2057 = vmatpush1.msra.mxu0 %v1762
        %2058 = vmatprep.subr.mxu0 %v1765
        %2059 = vmatpush1.msra.mxu0 %v1764
        %2060 = vmatprep.subr.mxu0 %v1767
        %2061 = vmatpush1.msra.mxu0 %v1766
        %2062 = vmatprep.subr.mxu0 %v1769
        %2063 = vmatpush1.msra.mxu0 %v1768
        %2064 = vmatprep.subr.mxu0 %v1771
        %2065 = vmatpush1.msra.mxu0 %v1770
        %2066 = vmatprep.mubr.f32.mxu0 %v1560
        %2067 = vmatmul.mubr.f32.gmra.mrb[0].mxu0 %v1558
        %v2068 = vpop.f32.mrb[0].mxu0
        %v2069 = vadd.f32 %v1992, %v2068
        %v2070 = vpop.f32.mrb[0].mxu0
        %v2071 = vadd.f32 %v1994, %v2070
        %2072 = vmatprep.mubr.f32.mxu0 %v1566
        %2073 = vmatmul.mubr.f32.gmra.mrb[0].mxu0 %v1564
        %v2074 = vpop.f32.mrb[0].mxu0
        %v2075 = vadd.f32 %v1998, %v2074
        %v2076 = vpop.f32.mrb[0].mxu0
        %v2077 = vadd.f32 %v2000, %v2076
        %2078 = vdwg.mxu0
        %2079 = vmatprep.subr.mxu0 %v1773
        %2080 = vmatpush1.msra.mxu0 %v1772
        %2081 = vmatprep.subr.mxu0 %v1775
        %2082 = vmatpush1.msra.mxu0 %v1774
        %2083 = vmatprep.subr.mxu0 %v1777
        %2084 = vmatpush1.msra.mxu0 %v1776
        %2085 = vmatprep.subr.mxu0 %v1779
        %2086 = vmatpush1.msra.mxu0 %v1778
        %2087 = vmatprep.subr.mxu0 %v1781
        %2088 = vmatpush1.msra.mxu0 %v1780
        %2089 = vmatprep.subr.mxu0 %v1783
        %2090 = vmatpush1.msra.mxu0 %v1782
        %2091 = vmatprep.subr.mxu0 %v1785
        %2092 = vmatpush1.msra.mxu0 %v1784
        %2093 = vmatprep.subr.mxu0 %v1787
        %2094 = vmatpush1.msra.mxu0 %v1786
        %2095 = vmatprep.subr.mxu0 %v1789
        %2096 = vmatpush1.msra.mxu0 %v1788
        %2097 = vmatprep.subr.mxu0 %v1791
        %2098 = vmatpush1.msra.mxu0 %v1790
        %2099 = vmatprep.subr.mxu0 %v1793
        %2100 = vmatpush1.msra.mxu0 %v1792
        %2101 = vmatprep.subr.mxu0 %v1795
        %2102 = vmatpush1.msra.mxu0 %v1794
        %2103 = vmatprep.subr.mxu0 %v1797
        %2104 = vmatpush1.msra.mxu0 %v1796
        %2105 = vmatprep.subr.mxu0 %v1799
        %2106 = vmatpush1.msra.mxu0 %v1798
        %2107 = vmatprep.subr.mxu0 %v1801
        %2108 = vmatpush1.msra.mxu0 %v1800
        %2109 = vmatprep.subr.mxu0 %v1803
        %2110 = vmatpush1.msra.mxu0 %v1802
        %2111 = vmatprep.subr.mxu0 %v1805
        %2112 = vmatpush1.msra.mxu0 %v1804
        %2113 = vmatprep.subr.mxu0 %v1807
        %2114 = vmatpush1.msra.mxu0 %v1806
        %2115 = vmatprep.subr.mxu0 %v1809
        %2116 = vmatpush1.msra.mxu0 %v1808
        %2117 = vmatprep.subr.mxu0 %v1811
        %2118 = vmatpush1.msra.mxu0 %v1810
        %2119 = vmatprep.subr.mxu0 %v1813
        %2120 = vmatpush1.msra.mxu0 %v1812
        %2121 = vmatprep.subr.mxu0 %v1815
        %2122 = vmatpush1.msra.mxu0 %v1814
        %2123 = vmatprep.subr.mxu0 %v1817
        %2124 = vmatpush1.msra.mxu0 %v1816
        %2125 = vmatprep.subr.mxu0 %v1819
        %2126 = vmatpush1.msra.mxu0 %v1818
        %2127 = vmatprep.subr.mxu0 %v1821
        %2128 = vmatpush1.msra.mxu0 %v1820
        %2129 = vmatprep.subr.mxu0 %v1823
        %2130 = vmatpush1.msra.mxu0 %v1822
        %2131 = vmatprep.subr.mxu0 %v1825
        %2132 = vmatpush1.msra.mxu0 %v1824
        %2133 = vmatprep.subr.mxu0 %v1827
        %2134 = vmatpush1.msra.mxu0 %v1826
        %2135 = vmatprep.subr.mxu0 %v1829
        %2136 = vmatpush1.msra.mxu0 %v1828
        %2137 = vmatprep.subr.mxu0 %v1831
        %2138 = vmatpush1.msra.mxu0 %v1830
        %2139 = vmatprep.subr.mxu0 %v1833
        %2140 = vmatpush1.msra.mxu0 %v1832
        %2141 = vmatprep.subr.mxu0 %v1835
        %2142 = vmatpush1.msra.mxu0 %v1834
        %2143 = vmatprep.mubr.f32.mxu0 %v1572
        %2144 = vmatmul.mubr.f32.gmra.mrb[0].mxu0 %v1570
        %v2145 = vpop.f32.mrb[0].mxu0
        %v2146 = vadd.f32 %v2069, %v2145
        %v2147 = vpop.f32.mrb[0].mxu0
        %v2148 = vadd.f32 %v2071, %v2147
        %2149 = vmatprep.mubr.f32.mxu0 %v1578
        %2150 = vmatmul.mubr.f32.gmra.mrb[0].mxu0 %v1576
        %v2151 = vpop.f32.mrb[0].mxu0
        %v2152 = vadd.f32 %v2075, %v2151
        %v2153 = vpop.f32.mrb[0].mxu0
        %v2154 = vadd.f32 %v2077, %v2153
        %2155 = vdwg.mxu0
        %v2156 = vmul.f32 %v2146, 0.2
        %v2157 = vmul.f32 %v2148, 0.2
        %v2158 = vmul.f32 %v2152, 0.2
        %v2159 = vmul.f32 %v2154, 0.2
        %v2160 = vmax.f32 %v2146, %v2156
        %v2161 = vmax.f32 %v2148, %v2157
        %v2162 = vmax.f32 %v2152, %v2158
        %v2163 = vmax.f32 %v2154, %v2159
        %v2164 = vld [vmem:[%s7] sm:$0xff]
        %v2165 = vld [vmem:[%s7 + $0x8] sm:$0xff]
        %v2166 = vld [vmem:[%s7 + $0x10] sm:$0xff]
        %v2167 = vld [vmem:[%s7 + $0x18] sm:$0xff]
        %vm2168 = vcmask 130048
        %v2170 = vsel %vm2168, %v2164, 0
        %v2173 = vsel %vm2168, %v2165, 0
        %v2176 = vsel %vm2168, %v2166, 0
        %v2179 = vsel %vm2168, %v2167, 0
        %2181 = vmatprep.subr.mxu0 %v2161
        %2182 = vmatpush1.msra.mxu0 %v2160
        %2183 = vmatprep.subr.mxu0 %v2163
        %2184 = vmatpush1.msra.mxu0 %v2162
        %2185 = vmatprep.subr.mxu0 0.0
        %2186 = vmatpush1.msra.mxu0 0.0
        %2187 = vmatprep.subr.mxu0 0.0
        %2188 = vmatpush1.msra.mxu0 0.0
        %2189 = vmatprep.subr.mxu0 0.0
        %2190 = vmatpush1.msra.mxu0 0.0
        %2191 = vmatprep.subr.mxu0 0.0
        %2192 = vmatpush1.msra.mxu0 0.0
        %2193 = vmatprep.subr.mxu0 0.0
        %2194 = vmatpush1.msra.mxu0 0.0
        %2195 = vmatprep.subr.mxu0 0.0
        %2196 = vmatpush1.msra.mxu0 0.0
        %2197 = vmatprep.subr.mxu0 0.0
        %2198 = vmatpush1.msra.mxu0 0.0
        %2199 = vmatprep.subr.mxu0 0.0
        %2200 = vmatpush1.msra.mxu0 0.0
        %2201 = vmatprep.subr.mxu0 0.0
        %2202 = vmatpush1.msra.mxu0 0.0
        %2203 = vmatprep.subr.mxu0 0.0
        %2204 = vmatpush1.msra.mxu0 0.0
        %2205 = vmatprep.subr.mxu0 0.0
        %2206 = vmatpush1.msra.mxu0 0.0
        %2207 = vmatprep.subr.mxu0 0.0
        %2208 = vmatpush1.msra.mxu0 0.0
        %2209 = vmatprep.subr.mxu0 0.0
        %2210 = vmatpush1.msra.mxu0 0.0
        %2211 = vmatprep.subr.mxu0 0.0
        %2212 = vmatpush1.msra.mxu0 0.0
        %2213 = vmatprep.subr.mxu0 0.0
        %2214 = vmatpush1.msra.mxu0 0.0
        %2215 = vmatprep.subr.mxu0 0.0
        %2216 = vmatpush1.msra.mxu0 0.0
        %2217 = vmatprep.subr.mxu0 0.0
        %2218 = vmatpush1.msra.mxu0 0.0
        %2219 = vmatprep.subr.mxu0 0.0
        %2220 = vmatpush1.msra.mxu0 0.0
        %2221 = vmatprep.subr.mxu0 0.0
        %2222 = vmatpush1.msra.mxu0 0.0
        %2223 = vmatprep.subr.mxu0 0.0
        %2224 = vmatpush1.msra.mxu0 0.0
        %2225 = vmatprep.subr.mxu0 0.0
        %2226 = vmatpush1.msra.mxu0 0.0
        %2227 = vmatprep.subr.mxu0 0.0
        %2228 = vmatpush1.msra.mxu0 0.0
        %2229 = vmatprep.subr.mxu0 0.0
        %2230 = vmatpush1.msra.mxu0 0.0
        %2231 = vmatprep.subr.mxu0 0.0
        %2232 = vmatpush1.msra.mxu0 0.0
        %2233 = vmatprep.subr.mxu0 0.0
        %2234 = vmatpush1.msra.mxu0 0.0
        %2235 = vmatprep.subr.mxu0 0.0
        %2236 = vmatpush1.msra.mxu0 0.0
        %2237 = vmatprep.subr.mxu0 0.0
        %2238 = vmatpush1.msra.mxu0 0.0
        %2239 = vmatprep.subr.mxu0 0.0
        %2240 = vmatpush1.msra.mxu0 0.0
        %2241 = vmatprep.subr.mxu0 0.0
        %2242 = vmatpush1.msra.mxu0 0.0
        %2243 = vmatprep.subr.mxu0 0.0
        %2244 = vmatpush1.msra.mxu0 0.0
        %2245 = vmatprep.mubr.f32.mxu0 0.0
        %2246 = vmatmul.mubr.f32.gmra.mrb[0].mxu0 %v2170
        %v2247 = vpop.f32.mrb[0].mxu0
        %v2248 = vadd.f32 0.0, %v2247
        %v2249 = vpop.f32.mrb[0].mxu0
        %v2250 = vadd.f32 0.0, %v2249
        %2251 = vmatprep.mubr.f32.mxu0 0.0
        %2252 = vmatmul.mubr.f32.gmra.mrb[0].mxu0 %v2173
        %v2253 = vpop.f32.mrb[0].mxu0
        %v2254 = vadd.f32 0.0, %v2253
        %v2255 = vpop.f32.mrb[0].mxu0
        %v2256 = vadd.f32 0.0, %v2255
        %2257 = vmatprep.mubr.f32.mxu0 0.0
        %2258 = vmatmul.mubr.f32.gmra.mrb[0].mxu0 %v2176
        %v2259 = vpop.f32.mrb[0].mxu0
        %v2260 = vadd.f32 0.0, %v2259
        %v2261 = vpop.f32.mrb[0].mxu0
        %v2262 = vadd.f32 0.0, %v2261
        %2263 = vmatprep.mubr.f32.mxu0 0.0
        %2264 = vmatmul.mubr.f32.gmra.mrb[0].mxu0 %v2179
        %v2265 = vpop.f32.mrb[0].mxu0
        %v2266 = vadd.f32 0.0, %v2265
        %v2267 = vpop.f32.mrb[0].mxu0
        %v2268 = vadd.f32 0.0, %v2267
        %2269 = vdwg.mxu0
        %v2270 = vld [vmem:[#allocation7] sm:$0xff]
        %v2271 = vld [vmem:[#allocation7 + $0x8] sm:$0xff]
        %v2272 = vld [vmem:[#allocation7 + $0x10] sm:$0xff]
        %v2273 = vld [vmem:[#allocation7 + $0x18] sm:$0xff]
        %v2274 = vld [vmem:[#allocation7 + $0x20] sm:$0xff]
        %v2275 = vld [vmem:[#allocation7 + $0x28] sm:$0xff]
        %v2276 = vld [vmem:[#allocation7 + $0x30] sm:$0xff]
        %v2277 = vld [vmem:[#allocation7 + $0x38] sm:$0xff]
        %v2278 = vld [vmem:[#allocation7 + $0x40] sm:$0xff]
        %v2279 = vld [vmem:[#allocation7 + $0x48] sm:$0xff]
        %v2280 = vld [vmem:[#allocation7 + $0x50] sm:$0xff]
        %v2281 = vld [vmem:[#allocation7 + $0x58] sm:$0xff]
        %v2282 = vld [vmem:[#allocation7 + $0x60] sm:$0xff]
        %v2283 = vld [vmem:[#allocation7 + $0x68] sm:$0xff]
        %v2284 = vld [vmem:[#allocation7 + $0x70] sm:$0xff]
        %v2285 = vld [vmem:[#allocation7 + $0x78] sm:$0xff]
        %v2286 = vld [vmem:[#allocation7 + $0x80] sm:$0xff]
        %v2287 = vld [vmem:[#allocation7 + $0x88] sm:$0xff]
        %v2288 = vld [vmem:[#allocation7 + $0x90] sm:$0xff]
        %v2289 = vld [vmem:[#allocation7 + $0x98] sm:$0xff]
        %v2290 = vld [vmem:[#allocation7 + $0xa0] sm:$0xff]
        %v2291 = vld [vmem:[#allocation7 + $0xa8] sm:$0xff]
        %v2292 = vld [vmem:[#allocation7 + $0xb0] sm:$0xff]
        %v2293 = vld [vmem:[#allocation7 + $0xb8] sm:$0xff]
        %v2294 = vld [vmem:[#allocation7 + $0xc0] sm:$0xff]
        %v2295 = vld [vmem:[#allocation7 + $0xc8] sm:$0xff]
        %v2296 = vld [vmem:[#allocation7 + $0xd0] sm:$0xff]
        %v2297 = vld [vmem:[#allocation7 + $0xd8] sm:$0xff]
        %v2298 = vld [vmem:[#allocation7 + $0xe0] sm:$0xff]
        %v2299 = vld [vmem:[#allocation7 + $0xe8] sm:$0xff]
        %v2300 = vld [vmem:[#allocation7 + $0xf0] sm:$0xff]
        %v2301 = vld [vmem:[#allocation7 + $0xf8] sm:$0xff]
        %v2302 = vld [vmem:[#allocation7 + $0x100] sm:$0xff]
        %v2303 = vld [vmem:[#allocation7 + $0x108] sm:$0xff]
        %v2304 = vld [vmem:[#allocation7 + $0x110] sm:$0xff]
        %v2305 = vld [vmem:[#allocation7 + $0x118] sm:$0xff]
        %v2306 = vld [vmem:[#allocation7 + $0x120] sm:$0xff]
        %v2307 = vld [vmem:[#allocation7 + $0x128] sm:$0xff]
        %v2308 = vld [vmem:[#allocation7 + $0x130] sm:$0xff]
        %v2309 = vld [vmem:[#allocation7 + $0x138] sm:$0xff]
        %v2310 = vld [vmem:[#allocation7 + $0x140] sm:$0xff]
        %v2311 = vld [vmem:[#allocation7 + $0x148] sm:$0xff]
        %v2312 = vld [vmem:[#allocation7 + $0x150] sm:$0xff]
        %v2313 = vld [vmem:[#allocation7 + $0x158] sm:$0xff]
        %v2314 = vld [vmem:[#allocation7 + $0x160] sm:$0xff]
        %v2315 = vld [vmem:[#allocation7 + $0x168] sm:$0xff]
        %v2316 = vld [vmem:[#allocation7 + $0x170] sm:$0xff]
        %v2317 = vld [vmem:[#allocation7 + $0x178] sm:$0xff]
        %v2318 = vld [vmem:[#allocation7 + $0x180] sm:$0xff]
        %v2319 = vld [vmem:[#allocation7 + $0x188] sm:$0xff]
        %v2320 = vld [vmem:[#allocation7 + $0x190] sm:$0xff]
        %v2321 = vld [vmem:[#allocation7 + $0x198] sm:$0xff]
        %v2322 = vld [vmem:[#allocation7 + $0x1a0] sm:$0xff]
        %v2323 = vld [vmem:[#allocation7 + $0x1a8] sm:$0xff]
        %v2324 = vld [vmem:[#allocation7 + $0x1b0] sm:$0xff]
        %v2325 = vld [vmem:[#allocation7 + $0x1b8] sm:$0xff]
        %v2326 = vld [vmem:[#allocation7 + $0x1c0] sm:$0xff]
        %v2327 = vld [vmem:[#allocation7 + $0x1c8] sm:$0xff]
        %v2328 = vld [vmem:[#allocation7 + $0x1d0] sm:$0xff]
        %v2329 = vld [vmem:[#allocation7 + $0x1d8] sm:$0xff]
        %v2330 = vld [vmem:[#allocation7 + $0x1e0] sm:$0xff]
        %v2331 = vld [vmem:[#allocation7 + $0x1e8] sm:$0xff]
        %v2332 = vld [vmem:[#allocation7 + $0x1f0] sm:$0xff]
        %v2333 = vld [vmem:[#allocation7 + $0x1f8] sm:$0xff]
        %v2334 = vld [vmem:[#allocation7 + $0x200] sm:$0xff]
        %v2335 = vld [vmem:[#allocation7 + $0x208] sm:$0xff]
        %v2336 = vld [vmem:[#allocation7 + $0x210] sm:$0xff]
        %v2337 = vld [vmem:[#allocation7 + $0x218] sm:$0xff]
        %v2338 = vld [vmem:[#allocation7 + $0x220] sm:$0xff]
        %v2339 = vld [vmem:[#allocation7 + $0x228] sm:$0xff]
        %v2340 = vld [vmem:[#allocation7 + $0x230] sm:$0xff]
        %v2341 = vld [vmem:[#allocation7 + $0x238] sm:$0xff]
        %v2342 = vld [vmem:[#allocation7 + $0x240] sm:$0xff]
        %v2343 = vld [vmem:[#allocation7 + $0x248] sm:$0xff]
        %v2344 = vld [vmem:[#allocation7 + $0x250] sm:$0xff]
        %v2345 = vld [vmem:[#allocation7 + $0x258] sm:$0xff]
        %v2346 = vld [vmem:[#allocation7 + $0x260] sm:$0xff]
        %v2347 = vld [vmem:[#allocation7 + $0x268] sm:$0xff]
        %v2348 = vld [vmem:[#allocation7 + $0x270] sm:$0xff]
        %v2349 = vld [vmem:[#allocation7 + $0x278] sm:$0xff]
        %v2350 = vld [vmem:[#allocation7 + $0x280] sm:$0xff]
        %v2351 = vld [vmem:[#allocation7 + $0x288] sm:$0xff]
        %v2352 = vld [vmem:[#allocation7 + $0x290] sm:$0xff]
        %v2353 = vld [vmem:[#allocation7 + $0x298] sm:$0xff]
        %v2354 = vld [vmem:[#allocation7 + $0x2a0] sm:$0xff]
        %v2355 = vld [vmem:[#allocation7 + $0x2a8] sm:$0xff]
        %v2356 = vld [vmem:[#allocation7 + $0x2b0] sm:$0xff]
        %v2357 = vld [vmem:[#allocation7 + $0x2b8] sm:$0xff]
        %v2358 = vld [vmem:[#allocation7 + $0x2c0] sm:$0xff]
        %v2359 = vld [vmem:[#allocation7 + $0x2c8] sm:$0xff]
        %v2360 = vld [vmem:[#allocation7 + $0x2d0] sm:$0xff]
        %v2361 = vld [vmem:[#allocation7 + $0x2d8] sm:$0xff]
        %v2362 = vld [vmem:[#allocation7 + $0x2e0] sm:$0xff]
        %v2363 = vld [vmem:[#allocation7 + $0x2e8] sm:$0xff]
        %v2364 = vld [vmem:[#allocation7 + $0x2f0] sm:$0xff]
        %v2365 = vld [vmem:[#allocation7 + $0x2f8] sm:$0xff]
        %v2366 = vld [vmem:[#allocation7 + $0x300] sm:$0xff]
        %v2367 = vld [vmem:[#allocation7 + $0x308] sm:$0xff]
        %v2368 = vld [vmem:[#allocation7 + $0x310] sm:$0xff]
        %v2369 = vld [vmem:[#allocation7 + $0x318] sm:$0xff]
        %v2370 = vld [vmem:[#allocation7 + $0x320] sm:$0xff]
        %v2371 = vld [vmem:[#allocation7 + $0x328] sm:$0xff]
        %v2372 = vld [vmem:[#allocation7 + $0x330] sm:$0xff]
        %v2373 = vld [vmem:[#allocation7 + $0x338] sm:$0xff]
        %v2374 = vld [vmem:[#allocation7 + $0x340] sm:$0xff]
        %v2375 = vld [vmem:[#allocation7 + $0x348] sm:$0xff]
        %v2376 = vld [vmem:[#allocation7 + $0x350] sm:$0xff]
        %v2377 = vld [vmem:[#allocation7 + $0x358] sm:$0xff]
        %v2378 = vld [vmem:[#allocation7 + $0x360] sm:$0xff]
        %v2379 = vld [vmem:[#allocation7 + $0x368] sm:$0xff]
        %v2380 = vld [vmem:[#allocation7 + $0x370] sm:$0xff]
        %v2381 = vld [vmem:[#allocation7 + $0x378] sm:$0xff]
        %v2382 = vld [vmem:[#allocation7 + $0x380] sm:$0xff]
        %v2383 = vld [vmem:[#allocation7 + $0x388] sm:$0xff]
        %v2384 = vld [vmem:[#allocation7 + $0x390] sm:$0xff]
        %v2385 = vld [vmem:[#allocation7 + $0x398] sm:$0xff]
        %v2386 = vld [vmem:[#allocation7 + $0x3a0] sm:$0xff]
        %v2387 = vld [vmem:[#allocation7 + $0x3a8] sm:$0xff]
        %v2388 = vld [vmem:[#allocation7 + $0x3b0] sm:$0xff]
        %v2389 = vld [vmem:[#allocation7 + $0x3b8] sm:$0xff]
        %v2390 = vld [vmem:[#allocation7 + $0x3c0] sm:$0xff]
        %v2391 = vld [vmem:[#allocation7 + $0x3c8] sm:$0xff]
        %v2392 = vld [vmem:[#allocation7 + $0x3d0] sm:$0xff]
        %v2393 = vld [vmem:[#allocation7 + $0x3d8] sm:$0xff]
        %v2394 = vld [vmem:[#allocation7 + $0x3e0] sm:$0xff]
        %v2395 = vld [vmem:[#allocation7 + $0x3e8] sm:$0xff]
        %v2396 = vld [vmem:[#allocation7 + $0x3f0] sm:$0xff]
        %v2397 = vld [vmem:[#allocation7 + $0x3f8] sm:$0xff]
        %v2398 = vld [vmem:[#allocation7 + $0x400] sm:$0xff]
        %v2399 = vld [vmem:[#allocation7 + $0x408] sm:$0xff]
        %v2400 = vld [vmem:[#allocation7 + $0x410] sm:$0xff]
        %v2401 = vld [vmem:[#allocation7 + $0x418] sm:$0xff]
        %v2402 = vld [vmem:[#allocation7 + $0x420] sm:$0xff]
        %v2403 = vld [vmem:[#allocation7 + $0x428] sm:$0xff]
        %v2404 = vld [vmem:[#allocation7 + $0x430] sm:$0xff]
        %v2405 = vld [vmem:[#allocation7 + $0x438] sm:$0xff]
        %v2406 = vld [vmem:[#allocation7 + $0x440] sm:$0xff]
        %v2407 = vld [vmem:[#allocation7 + $0x448] sm:$0xff]
        %v2408 = vld [vmem:[#allocation7 + $0x450] sm:$0xff]
        %v2409 = vld [vmem:[#allocation7 + $0x458] sm:$0xff]
        %v2410 = vld [vmem:[#allocation7 + $0x460] sm:$0xff]
        %v2411 = vld [vmem:[#allocation7 + $0x468] sm:$0xff]
        %v2412 = vld [vmem:[#allocation7 + $0x470] sm:$0xff]
        %v2413 = vld [vmem:[#allocation7 + $0x478] sm:$0xff]
        %v2414 = vld [vmem:[#allocation7 + $0x480] sm:$0xff]
        %v2415 = vld [vmem:[#allocation7 + $0x488] sm:$0xff]
        %v2416 = vld [vmem:[#allocation7 + $0x490] sm:$0xff]
        %v2417 = vld [vmem:[#allocation7 + $0x498] sm:$0xff]
        %v2418 = vld [vmem:[#allocation7 + $0x4a0] sm:$0xff]
        %v2419 = vld [vmem:[#allocation7 + $0x4a8] sm:$0xff]
        %v2420 = vld [vmem:[#allocation7 + $0x4b0] sm:$0xff]
        %v2421 = vld [vmem:[#allocation7 + $0x4b8] sm:$0xff]
        %v2422 = vld [vmem:[#allocation7 + $0x4c0] sm:$0xff]
        %v2423 = vld [vmem:[#allocation7 + $0x4c8] sm:$0xff]
        %v2424 = vld [vmem:[#allocation7 + $0x4d0] sm:$0xff]
        %v2425 = vld [vmem:[#allocation7 + $0x4d8] sm:$0xff]
        %v2426 = vld [vmem:[#allocation7 + $0x4e0] sm:$0xff]
        %v2427 = vld [vmem:[#allocation7 + $0x4e8] sm:$0xff]
        %v2428 = vld [vmem:[#allocation7 + $0x4f0] sm:$0xff]
        %v2429 = vld [vmem:[#allocation7 + $0x4f8] sm:$0xff]
        %v2430 = vld [vmem:[#allocation7 + $0x500] sm:$0xff]
        %v2431 = vld [vmem:[#allocation7 + $0x508] sm:$0xff]
        %v2432 = vld [vmem:[#allocation7 + $0x510] sm:$0xff]
        %v2433 = vld [vmem:[#allocation7 + $0x518] sm:$0xff]
        %v2434 = vld [vmem:[#allocation7 + $0x520] sm:$0xff]
        %v2435 = vld [vmem:[#allocation7 + $0x528] sm:$0xff]
        %v2436 = vld [vmem:[#allocation7 + $0x530] sm:$0xff]
        %v2437 = vld [vmem:[#allocation7 + $0x538] sm:$0xff]
        %v2438 = vld [vmem:[#allocation7 + $0x540] sm:$0xff]
        %v2439 = vld [vmem:[#allocation7 + $0x548] sm:$0xff]
        %v2440 = vld [vmem:[#allocation7 + $0x550] sm:$0xff]
        %v2441 = vld [vmem:[#allocation7 + $0x558] sm:$0xff]
        %v2442 = vld [vmem:[#allocation7 + $0x560] sm:$0xff]
        %v2443 = vld [vmem:[#allocation7 + $0x568] sm:$0xff]
        %v2444 = vld [vmem:[#allocation7 + $0x570] sm:$0xff]
        %v2445 = vld [vmem:[#allocation7 + $0x578] sm:$0xff]
        %v2446 = vld [vmem:[#allocation7 + $0x580] sm:$0xff]
        %v2447 = vld [vmem:[#allocation7 + $0x588] sm:$0xff]
        %v2448 = vld [vmem:[#allocation7 + $0x590] sm:$0xff]
        %v2449 = vld [vmem:[#allocation7 + $0x598] sm:$0xff]
        %v2450 = vld [vmem:[#allocation7 + $0x5a0] sm:$0xff]
        %v2451 = vld [vmem:[#allocation7 + $0x5a8] sm:$0xff]
        %v2452 = vld [vmem:[#allocation7 + $0x5b0] sm:$0xff]
        %v2453 = vld [vmem:[#allocation7 + $0x5b8] sm:$0xff]
        %v2454 = vld [vmem:[#allocation7 + $0x5c0] sm:$0xff]
        %v2455 = vld [vmem:[#allocation7 + $0x5c8] sm:$0xff]
        %v2456 = vld [vmem:[#allocation7 + $0x5d0] sm:$0xff]
        %v2457 = vld [vmem:[#allocation7 + $0x5d8] sm:$0xff]
        %v2458 = vld [vmem:[#allocation7 + $0x5e0] sm:$0xff]
        %v2459 = vld [vmem:[#allocation7 + $0x5e8] sm:$0xff]
        %v2460 = vld [vmem:[#allocation7 + $0x5f0] sm:$0xff]
        %v2461 = vld [vmem:[#allocation7 + $0x5f8] sm:$0xff]
        %v2462 = vld [vmem:[#allocation7 + $0x600] sm:$0xff]
        %v2463 = vld [vmem:[#allocation7 + $0x608] sm:$0xff]
        %v2464 = vld [vmem:[#allocation7 + $0x610] sm:$0xff]
        %v2465 = vld [vmem:[#allocation7 + $0x618] sm:$0xff]
        %v2466 = vld [vmem:[#allocation7 + $0x620] sm:$0xff]
        %v2467 = vld [vmem:[#allocation7 + $0x628] sm:$0xff]
        %v2468 = vld [vmem:[#allocation7 + $0x630] sm:$0xff]
        %v2469 = vld [vmem:[#allocation7 + $0x638] sm:$0xff]
        %v2470 = vld [vmem:[#allocation7 + $0x640] sm:$0xff]
        %v2471 = vld [vmem:[#allocation7 + $0x648] sm:$0xff]
        %v2472 = vld [vmem:[#allocation7 + $0x650] sm:$0xff]
        %v2473 = vld [vmem:[#allocation7 + $0x658] sm:$0xff]
        %v2474 = vld [vmem:[#allocation7 + $0x660] sm:$0xff]
        %v2475 = vld [vmem:[#allocation7 + $0x668] sm:$0xff]
        %v2476 = vld [vmem:[#allocation7 + $0x670] sm:$0xff]
        %v2477 = vld [vmem:[#allocation7 + $0x678] sm:$0xff]
        %v2478 = vld [vmem:[#allocation7 + $0x680] sm:$0xff]
        %v2479 = vld [vmem:[#allocation7 + $0x688] sm:$0xff]
        %v2480 = vld [vmem:[#allocation7 + $0x690] sm:$0xff]
        %v2481 = vld [vmem:[#allocation7 + $0x698] sm:$0xff]
        %v2482 = vld [vmem:[#allocation7 + $0x6a0] sm:$0xff]
        %v2483 = vld [vmem:[#allocation7 + $0x6a8] sm:$0xff]
        %v2484 = vld [vmem:[#allocation7 + $0x6b0] sm:$0xff]
        %v2485 = vld [vmem:[#allocation7 + $0x6b8] sm:$0xff]
        %v2486 = vld [vmem:[#allocation7 + $0x6c0] sm:$0xff]
        %v2487 = vld [vmem:[#allocation7 + $0x6c8] sm:$0xff]
        %v2488 = vld [vmem:[#allocation7 + $0x6d0] sm:$0xff]
        %v2489 = vld [vmem:[#allocation7 + $0x6d8] sm:$0xff]
        %v2490 = vld [vmem:[#allocation7 + $0x6e0] sm:$0xff]
        %v2491 = vld [vmem:[#allocation7 + $0x6e8] sm:$0xff]
        %v2492 = vld [vmem:[#allocation7 + $0x6f0] sm:$0xff]
        %v2493 = vld [vmem:[#allocation7 + $0x6f8] sm:$0xff]
        %v2494 = vld [vmem:[#allocation7 + $0x700] sm:$0xff]
        %v2495 = vld [vmem:[#allocation7 + $0x708] sm:$0xff]
        %v2496 = vld [vmem:[#allocation7 + $0x710] sm:$0xff]
        %v2497 = vld [vmem:[#allocation7 + $0x718] sm:$0xff]
        %v2498 = vld [vmem:[#allocation7 + $0x720] sm:$0xff]
        %v2499 = vld [vmem:[#allocation7 + $0x728] sm:$0xff]
        %v2500 = vld [vmem:[#allocation7 + $0x730] sm:$0xff]
        %v2501 = vld [vmem:[#allocation7 + $0x738] sm:$0xff]
        %v2502 = vld [vmem:[#allocation7 + $0x740] sm:$0xff]
        %v2503 = vld [vmem:[#allocation7 + $0x748] sm:$0xff]
        %v2504 = vld [vmem:[#allocation7 + $0x750] sm:$0xff]
        %v2505 = vld [vmem:[#allocation7 + $0x758] sm:$0xff]
        %v2506 = vld [vmem:[#allocation7 + $0x760] sm:$0xff]
        %v2507 = vld [vmem:[#allocation7 + $0x768] sm:$0xff]
        %v2508 = vld [vmem:[#allocation7 + $0x770] sm:$0xff]
        %v2509 = vld [vmem:[#allocation7 + $0x778] sm:$0xff]
        %v2510 = vld [vmem:[#allocation7 + $0x780] sm:$0xff]
        %v2511 = vld [vmem:[#allocation7 + $0x788] sm:$0xff]
        %v2512 = vld [vmem:[#allocation7 + $0x790] sm:$0xff]
        %v2513 = vld [vmem:[#allocation7 + $0x798] sm:$0xff]
        %v2514 = vld [vmem:[#allocation7 + $0x7a0] sm:$0xff]
        %v2515 = vld [vmem:[#allocation7 + $0x7a8] sm:$0xff]
        %v2516 = vld [vmem:[#allocation7 + $0x7b0] sm:$0xff]
        %v2517 = vld [vmem:[#allocation7 + $0x7b8] sm:$0xff]
        %v2518 = vld [vmem:[#allocation7 + $0x7c0] sm:$0xff]
        %v2519 = vld [vmem:[#allocation7 + $0x7c8] sm:$0xff]
        %v2520 = vld [vmem:[#allocation7 + $0x7d0] sm:$0xff]
        %v2521 = vld [vmem:[#allocation7 + $0x7d8] sm:$0xff]
        %v2522 = vld [vmem:[#allocation7 + $0x7e0] sm:$0xff]
        %v2523 = vld [vmem:[#allocation7 + $0x7e8] sm:$0xff]
        %v2524 = vld [vmem:[#allocation7 + $0x7f0] sm:$0xff]
        %v2525 = vld [vmem:[#allocation7 + $0x7f8] sm:$0xff]
        %v2526 = vld [vmem:[%s9] sm:$0x3]
        %v2528 = vlaneseq
        %v2529 = vshrl.u32 %v2528, 7
        %v2530 = vsub.s32 0, %v2529
        %v2531 = vrot.slane %v2526, %v2530
        %v2532 = vlaneseq
        %v2533 = vshrl.u32 %v2532, 7
        %v2534 = vsub.s32 1, %v2533
        %v2535 = vrot.slane %v2526, %v2534
        %2538 = vmatprep.subr.mxu0 %v2271
        %2539 = vmatpush1.msra.mxu0 %v2270
        %2540 = vmatprep.subr.mxu0 %v2273
        %2541 = vmatpush1.msra.mxu0 %v2272
        %2542 = vmatprep.subr.mxu0 %v2275
        %2543 = vmatpush1.msra.mxu0 %v2274
        %2544 = vmatprep.subr.mxu0 %v2277
        %2545 = vmatpush1.msra.mxu0 %v2276
        %2546 = vmatprep.subr.mxu0 %v2279
        %2547 = vmatpush1.msra.mxu0 %v2278
        %2548 = vmatprep.subr.mxu0 %v2281
        %2549 = vmatpush1.msra.mxu0 %v2280
        %2550 = vmatprep.subr.mxu0 %v2283
        %2551 = vmatpush1.msra.mxu0 %v2282
        %2552 = vmatprep.subr.mxu0 %v2285
        %2553 = vmatpush1.msra.mxu0 %v2284
        %2554 = vmatprep.subr.mxu0 %v2287
        %2555 = vmatpush1.msra.mxu0 %v2286
        %2556 = vmatprep.subr.mxu0 %v2289
        %2557 = vmatpush1.msra.mxu0 %v2288
        %2558 = vmatprep.subr.mxu0 %v2291
        %2559 = vmatpush1.msra.mxu0 %v2290
        %2560 = vmatprep.subr.mxu0 %v2293
        %2561 = vmatpush1.msra.mxu0 %v2292
        %2562 = vmatprep.subr.mxu0 %v2295
        %2563 = vmatpush1.msra.mxu0 %v2294
        %2564 = vmatprep.subr.mxu0 %v2297
        %2565 = vmatpush1.msra.mxu0 %v2296
        %2566 = vmatprep.subr.mxu0 %v2299
        %2567 = vmatpush1.msra.mxu0 %v2298
        %2568 = vmatprep.subr.mxu0 %v2301
        %2569 = vmatpush1.msra.mxu0 %v2300
        %2570 = vmatprep.subr.mxu0 %v2303
        %2571 = vmatpush1.msra.mxu0 %v2302
        %2572 = vmatprep.subr.mxu0 %v2305
        %2573 = vmatpush1.msra.mxu0 %v2304
        %2574 = vmatprep.subr.mxu0 %v2307
        %2575 = vmatpush1.msra.mxu0 %v2306
        %2576 = vmatprep.subr.mxu0 %v2309
        %2577 = vmatpush1.msra.mxu0 %v2308
        %2578 = vmatprep.subr.mxu0 %v2311
        %2579 = vmatpush1.msra.mxu0 %v2310
        %2580 = vmatprep.subr.mxu0 %v2313
        %2581 = vmatpush1.msra.mxu0 %v2312
        %2582 = vmatprep.subr.mxu0 %v2315
        %2583 = vmatpush1.msra.mxu0 %v2314
        %2584 = vmatprep.subr.mxu0 %v2317
        %2585 = vmatpush1.msra.mxu0 %v2316
        %2586 = vmatprep.subr.mxu0 %v2319
        %2587 = vmatpush1.msra.mxu0 %v2318
        %2588 = vmatprep.subr.mxu0 %v2321
        %2589 = vmatpush1.msra.mxu0 %v2320
        %2590 = vmatprep.subr.mxu0 %v2323
        %2591 = vmatpush1.msra.mxu0 %v2322
        %2592 = vmatprep.subr.mxu0 %v2325
        %2593 = vmatpush1.msra.mxu0 %v2324
        %2594 = vmatprep.subr.mxu0 %v2327
        %2595 = vmatpush1.msra.mxu0 %v2326
        %2596 = vmatprep.subr.mxu0 %v2329
        %2597 = vmatpush1.msra.mxu0 %v2328
        %2598 = vmatprep.subr.mxu0 %v2331
        %2599 = vmatpush1.msra.mxu0 %v2330
        %2600 = vmatprep.subr.mxu0 %v2333
        %2601 = vmatpush1.msra.mxu0 %v2332
        %2602 = vmatprep.mubr.f32.mxu0 %v2250
        %2603 = vmatmul.mubr.f32.gmra.mrb[0].mxu0 %v2248
        %v2604 = vpop.f32.mrb[0].mxu0
        %v2605 = vadd.f32 %v2531, %v2604
        %v2606 = vpop.f32.mrb[0].mxu0
        %v2607 = vadd.f32 %v2535, %v2606
        %2608 = vdwg.mxu0
        %2609 = vmatprep.subr.mxu0 %v2335
        %2610 = vmatpush1.msra.mxu0 %v2334
        %2611 = vmatprep.subr.mxu0 %v2337
        %2612 = vmatpush1.msra.mxu0 %v2336
        %2613 = vmatprep.subr.mxu0 %v2339
        %2614 = vmatpush1.msra.mxu0 %v2338
        %2615 = vmatprep.subr.mxu0 %v2341
        %2616 = vmatpush1.msra.mxu0 %v2340
        %2617 = vmatprep.subr.mxu0 %v2343
        %2618 = vmatpush1.msra.mxu0 %v2342
        %2619 = vmatprep.subr.mxu0 %v2345
        %2620 = vmatpush1.msra.mxu0 %v2344
        %2621 = vmatprep.subr.mxu0 %v2347
        %2622 = vmatpush1.msra.mxu0 %v2346
        %2623 = vmatprep.subr.mxu0 %v2349
        %2624 = vmatpush1.msra.mxu0 %v2348
        %2625 = vmatprep.subr.mxu0 %v2351
        %2626 = vmatpush1.msra.mxu0 %v2350
        %2627 = vmatprep.subr.mxu0 %v2353
        %2628 = vmatpush1.msra.mxu0 %v2352
        %2629 = vmatprep.subr.mxu0 %v2355
        %2630 = vmatpush1.msra.mxu0 %v2354
        %2631 = vmatprep.subr.mxu0 %v2357
        %2632 = vmatpush1.msra.mxu0 %v2356
        %2633 = vmatprep.subr.mxu0 %v2359
        %2634 = vmatpush1.msra.mxu0 %v2358
        %2635 = vmatprep.subr.mxu0 %v2361
        %2636 = vmatpush1.msra.mxu0 %v2360
        %2637 = vmatprep.subr.mxu0 %v2363
        %2638 = vmatpush1.msra.mxu0 %v2362
        %2639 = vmatprep.subr.mxu0 %v2365
        %2640 = vmatpush1.msra.mxu0 %v2364
        %2641 = vmatprep.subr.mxu0 %v2367
        %2642 = vmatpush1.msra.mxu0 %v2366
        %2643 = vmatprep.subr.mxu0 %v2369
        %2644 = vmatpush1.msra.mxu0 %v2368
        %2645 = vmatprep.subr.mxu0 %v2371
        %2646 = vmatpush1.msra.mxu0 %v2370
        %2647 = vmatprep.subr.mxu0 %v2373
        %2648 = vmatpush1.msra.mxu0 %v2372
        %2649 = vmatprep.subr.mxu0 %v2375
        %2650 = vmatpush1.msra.mxu0 %v2374
        %2651 = vmatprep.subr.mxu0 %v2377
        %2652 = vmatpush1.msra.mxu0 %v2376
        %2653 = vmatprep.subr.mxu0 %v2379
        %2654 = vmatpush1.msra.mxu0 %v2378
        %2655 = vmatprep.subr.mxu0 %v2381
        %2656 = vmatpush1.msra.mxu0 %v2380
        %2657 = vmatprep.subr.mxu0 %v2383
        %2658 = vmatpush1.msra.mxu0 %v2382
        %2659 = vmatprep.subr.mxu0 %v2385
        %2660 = vmatpush1.msra.mxu0 %v2384
        %2661 = vmatprep.subr.mxu0 %v2387
        %2662 = vmatpush1.msra.mxu0 %v2386
        %2663 = vmatprep.subr.mxu0 %v2389
        %2664 = vmatpush1.msra.mxu0 %v2388
        %2665 = vmatprep.subr.mxu0 %v2391
        %2666 = vmatpush1.msra.mxu0 %v2390
        %2667 = vmatprep.subr.mxu0 %v2393
        %2668 = vmatpush1.msra.mxu0 %v2392
        %2669 = vmatprep.subr.mxu0 %v2395
        %2670 = vmatpush1.msra.mxu0 %v2394
        %2671 = vmatprep.subr.mxu0 %v2397
        %2672 = vmatpush1.msra.mxu0 %v2396
        %2673 = vmatprep.mubr.f32.mxu0 %v2256
        %2674 = vmatmul.mubr.f32.gmra.mrb[0].mxu0 %v2254
        %v2675 = vpop.f32.mrb[0].mxu0
        %v2676 = vadd.f32 %v2605, %v2675
        %v2677 = vpop.f32.mrb[0].mxu0
        %v2678 = vadd.f32 %v2607, %v2677
        %2679 = vdwg.mxu0
        %2680 = vmatprep.subr.mxu0 %v2399
        %2681 = vmatpush1.msra.mxu0 %v2398
        %2682 = vmatprep.subr.mxu0 %v2401
        %2683 = vmatpush1.msra.mxu0 %v2400
        %2684 = vmatprep.subr.mxu0 %v2403
        %2685 = vmatpush1.msra.mxu0 %v2402
        %2686 = vmatprep.subr.mxu0 %v2405
        %2687 = vmatpush1.msra.mxu0 %v2404
        %2688 = vmatprep.subr.mxu0 %v2407
        %2689 = vmatpush1.msra.mxu0 %v2406
        %2690 = vmatprep.subr.mxu0 %v2409
        %2691 = vmatpush1.msra.mxu0 %v2408
        %2692 = vmatprep.subr.mxu0 %v2411
        %2693 = vmatpush1.msra.mxu0 %v2410
        %2694 = vmatprep.subr.mxu0 %v2413
        %2695 = vmatpush1.msra.mxu0 %v2412
        %2696 = vmatprep.subr.mxu0 %v2415
        %2697 = vmatpush1.msra.mxu0 %v2414
        %2698 = vmatprep.subr.mxu0 %v2417
        %2699 = vmatpush1.msra.mxu0 %v2416
        %2700 = vmatprep.subr.mxu0 %v2419
        %2701 = vmatpush1.msra.mxu0 %v2418
        %2702 = vmatprep.subr.mxu0 %v2421
        %2703 = vmatpush1.msra.mxu0 %v2420
        %2704 = vmatprep.subr.mxu0 %v2423
        %2705 = vmatpush1.msra.mxu0 %v2422
        %2706 = vmatprep.subr.mxu0 %v2425
        %2707 = vmatpush1.msra.mxu0 %v2424
        %2708 = vmatprep.subr.mxu0 %v2427
        %2709 = vmatpush1.msra.mxu0 %v2426
        %2710 = vmatprep.subr.mxu0 %v2429
        %2711 = vmatpush1.msra.mxu0 %v2428
        %2712 = vmatprep.subr.mxu0 %v2431
        %2713 = vmatpush1.msra.mxu0 %v2430
        %2714 = vmatprep.subr.mxu0 %v2433
        %2715 = vmatpush1.msra.mxu0 %v2432
        %2716 = vmatprep.subr.mxu0 %v2435
        %2717 = vmatpush1.msra.mxu0 %v2434
        %2718 = vmatprep.subr.mxu0 %v2437
        %2719 = vmatpush1.msra.mxu0 %v2436
        %2720 = vmatprep.subr.mxu0 %v2439
        %2721 = vmatpush1.msra.mxu0 %v2438
        %2722 = vmatprep.subr.mxu0 %v2441
        %2723 = vmatpush1.msra.mxu0 %v2440
        %2724 = vmatprep.subr.mxu0 %v2443
        %2725 = vmatpush1.msra.mxu0 %v2442
        %2726 = vmatprep.subr.mxu0 %v2445
        %2727 = vmatpush1.msra.mxu0 %v2444
        %2728 = vmatprep.subr.mxu0 %v2447
        %2729 = vmatpush1.msra.mxu0 %v2446
        %2730 = vmatprep.subr.mxu0 %v2449
        %2731 = vmatpush1.msra.mxu0 %v2448
        %2732 = vmatprep.subr.mxu0 %v2451
        %2733 = vmatpush1.msra.mxu0 %v2450
        %2734 = vmatprep.subr.mxu0 %v2453
        %2735 = vmatpush1.msra.mxu0 %v2452
        %2736 = vmatprep.subr.mxu0 %v2455
        %2737 = vmatpush1.msra.mxu0 %v2454
        %2738 = vmatprep.subr.mxu0 %v2457
        %2739 = vmatpush1.msra.mxu0 %v2456
        %2740 = vmatprep.subr.mxu0 %v2459
        %2741 = vmatpush1.msra.mxu0 %v2458
        %2742 = vmatprep.subr.mxu0 %v2461
        %2743 = vmatpush1.msra.mxu0 %v2460
        %2744 = vmatprep.mubr.f32.mxu0 %v2262
        %2745 = vmatmul.mubr.f32.gmra.mrb[0].mxu0 %v2260
        %v2746 = vpop.f32.mrb[0].mxu0
        %v2747 = vadd.f32 %v2676, %v2746
        %v2748 = vpop.f32.mrb[0].mxu0
        %v2749 = vadd.f32 %v2678, %v2748
        %2750 = vdwg.mxu0
        %2751 = vmatprep.subr.mxu0 %v2463
        %2752 = vmatpush1.msra.mxu0 %v2462
        %2753 = vmatprep.subr.mxu0 %v2465
        %2754 = vmatpush1.msra.mxu0 %v2464
        %2755 = vmatprep.subr.mxu0 %v2467
        %2756 = vmatpush1.msra.mxu0 %v2466
        %2757 = vmatprep.subr.mxu0 %v2469
        %2758 = vmatpush1.msra.mxu0 %v2468
        %2759 = vmatprep.subr.mxu0 %v2471
        %2760 = vmatpush1.msra.mxu0 %v2470
        %2761 = vmatprep.subr.mxu0 %v2473
        %2762 = vmatpush1.msra.mxu0 %v2472
        %2763 = vmatprep.subr.mxu0 %v2475
        %2764 = vmatpush1.msra.mxu0 %v2474
        %2765 = vmatprep.subr.mxu0 %v2477
        %2766 = vmatpush1.msra.mxu0 %v2476
        %2767 = vmatprep.subr.mxu0 %v2479
        %2768 = vmatpush1.msra.mxu0 %v2478
        %2769 = vmatprep.subr.mxu0 %v2481
        %2770 = vmatpush1.msra.mxu0 %v2480
        %2771 = vmatprep.subr.mxu0 %v2483
        %2772 = vmatpush1.msra.mxu0 %v2482
        %2773 = vmatprep.subr.mxu0 %v2485
        %2774 = vmatpush1.msra.mxu0 %v2484
        %2775 = vmatprep.subr.mxu0 %v2487
        %2776 = vmatpush1.msra.mxu0 %v2486
        %2777 = vmatprep.subr.mxu0 %v2489
        %2778 = vmatpush1.msra.mxu0 %v2488
        %2779 = vmatprep.subr.mxu0 %v2491
        %2780 = vmatpush1.msra.mxu0 %v2490
        %2781 = vmatprep.subr.mxu0 %v2493
        %2782 = vmatpush1.msra.mxu0 %v2492
        %2783 = vmatprep.subr.mxu0 %v2495
        %2784 = vmatpush1.msra.mxu0 %v2494
        %2785 = vmatprep.subr.mxu0 %v2497
        %2786 = vmatpush1.msra.mxu0 %v2496
        %2787 = vmatprep.subr.mxu0 %v2499
        %2788 = vmatpush1.msra.mxu0 %v2498
        %2789 = vmatprep.subr.mxu0 %v2501
        %2790 = vmatpush1.msra.mxu0 %v2500
        %2791 = vmatprep.subr.mxu0 %v2503
        %2792 = vmatpush1.msra.mxu0 %v2502
        %2793 = vmatprep.subr.mxu0 %v2505
        %2794 = vmatpush1.msra.mxu0 %v2504
        %2795 = vmatprep.subr.mxu0 %v2507
        %2796 = vmatpush1.msra.mxu0 %v2506
        %2797 = vmatprep.subr.mxu0 %v2509
        %2798 = vmatpush1.msra.mxu0 %v2508
        %2799 = vmatprep.subr.mxu0 %v2511
        %2800 = vmatpush1.msra.mxu0 %v2510
        %2801 = vmatprep.subr.mxu0 %v2513
        %2802 = vmatpush1.msra.mxu0 %v2512
        %2803 = vmatprep.subr.mxu0 %v2515
        %2804 = vmatpush1.msra.mxu0 %v2514
        %2805 = vmatprep.subr.mxu0 %v2517
        %2806 = vmatpush1.msra.mxu0 %v2516
        %2807 = vmatprep.subr.mxu0 %v2519
        %2808 = vmatpush1.msra.mxu0 %v2518
        %2809 = vmatprep.subr.mxu0 %v2521
        %2810 = vmatpush1.msra.mxu0 %v2520
        %2811 = vmatprep.subr.mxu0 %v2523
        %2812 = vmatpush1.msra.mxu0 %v2522
        %2813 = vmatprep.subr.mxu0 %v2525
        %2814 = vmatpush1.msra.mxu0 %v2524
        %2815 = vmatprep.mubr.f32.mxu0 %v2268
        %2816 = vmatmul.mubr.f32.gmra.mrb[0].mxu0 %v2266
        %v2817 = vpop.f32.mrb[0].mxu0
        %v2818 = vadd.f32 %v2747, %v2817
        %v2819 = vpop.f32.mrb[0].mxu0
        %v2820 = vadd.f32 %v2749, %v2819
        %2821 = vdwg.mxu0
        %v2822 = vmul.f32 %v2818, 0.2
        %v2823 = vmul.f32 %v2820, 0.2
        %v2824 = vmax.f32 %v2818, %v2822
        %v2825 = vmax.f32 %v2820, %v2823
        %v2826 = vld [vmem:[%s10] sm:$0xff]
        %v2827 = vld [vmem:[%s10 + $0x8] sm:$0xff]
        %vm2828 = vcmask 64512
        %v2830 = vsel %vm2828, %v2826, 0
        %v2833 = vsel %vm2828, %v2827, 0
        %2835 = vmatprep.subr.mxu0 %v2825
        %2836 = vmatpush1.msra.mxu0 %v2824
        %2837 = vmatprep.subr.mxu0 0.0
        %2838 = vmatpush1.msra.mxu0 0.0
        %2839 = vmatprep.subr.mxu0 0.0
        %2840 = vmatpush1.msra.mxu0 0.0
        %2841 = vmatprep.subr.mxu0 0.0
        %2842 = vmatpush1.msra.mxu0 0.0
        %2843 = vmatprep.subr.mxu0 0.0
        %2844 = vmatpush1.msra.mxu0 0.0
        %2845 = vmatprep.subr.mxu0 0.0
        %2846 = vmatpush1.msra.mxu0 0.0
        %2847 = vmatprep.subr.mxu0 0.0
        %2848 = vmatpush1.msra.mxu0 0.0
        %2849 = vmatprep.subr.mxu0 0.0
        %2850 = vmatpush1.msra.mxu0 0.0
        %2851 = vmatprep.subr.mxu0 0.0
        %2852 = vmatpush1.msra.mxu0 0.0
        %2853 = vmatprep.subr.mxu0 0.0
        %2854 = vmatpush1.msra.mxu0 0.0
        %2855 = vmatprep.subr.mxu0 0.0
        %2856 = vmatpush1.msra.mxu0 0.0
        %2857 = vmatprep.subr.mxu0 0.0
        %2858 = vmatpush1.msra.mxu0 0.0
        %2859 = vmatprep.subr.mxu0 0.0
        %2860 = vmatpush1.msra.mxu0 0.0
        %2861 = vmatprep.subr.mxu0 0.0
        %2862 = vmatpush1.msra.mxu0 0.0
        %2863 = vmatprep.subr.mxu0 0.0
        %2864 = vmatpush1.msra.mxu0 0.0
        %2865 = vmatprep.subr.mxu0 0.0
        %2866 = vmatpush1.msra.mxu0 0.0
        %2867 = vmatprep.subr.mxu0 0.0
        %2868 = vmatpush1.msra.mxu0 0.0
        %2869 = vmatprep.subr.mxu0 0.0
        %2870 = vmatpush1.msra.mxu0 0.0
        %2871 = vmatprep.subr.mxu0 0.0
        %2872 = vmatpush1.msra.mxu0 0.0
        %2873 = vmatprep.subr.mxu0 0.0
        %2874 = vmatpush1.msra.mxu0 0.0
        %2875 = vmatprep.subr.mxu0 0.0
        %2876 = vmatpush1.msra.mxu0 0.0
        %2877 = vmatprep.subr.mxu0 0.0
        %2878 = vmatpush1.msra.mxu0 0.0
        %2879 = vmatprep.subr.mxu0 0.0
        %2880 = vmatpush1.msra.mxu0 0.0
        %2881 = vmatprep.subr.mxu0 0.0
        %2882 = vmatpush1.msra.mxu0 0.0
        %2883 = vmatprep.subr.mxu0 0.0
        %2884 = vmatpush1.msra.mxu0 0.0
        %2885 = vmatprep.subr.mxu0 0.0
        %2886 = vmatpush1.msra.mxu0 0.0
        %2887 = vmatprep.subr.mxu0 0.0
        %2888 = vmatpush1.msra.mxu0 0.0
        %2889 = vmatprep.subr.mxu0 0.0
        %2890 = vmatpush1.msra.mxu0 0.0
        %2891 = vmatprep.subr.mxu0 0.0
        %2892 = vmatpush1.msra.mxu0 0.0
        %2893 = vmatprep.subr.mxu0 0.0
        %2894 = vmatpush1.msra.mxu0 0.0
        %2895 = vmatprep.subr.mxu0 0.0
        %2896 = vmatpush1.msra.mxu0 0.0
        %2897 = vmatprep.subr.mxu0 0.0
        %2898 = vmatpush1.msra.mxu0 0.0
        %2899 = vmatprep.mubr.f32.mxu0 0.0
        %2900 = vmatmul.mubr.f32.gmra.mrb[0].mxu0 %v2830
        %v2901 = vpop.f32.mrb[0].mxu0
        %v2902 = vadd.f32 0.0, %v2901
        %v2903 = vpop.f32.mrb[0].mxu0
        %v2904 = vadd.f32 0.0, %v2903
        %2905 = vmatprep.mubr.f32.mxu0 0.0
        %2906 = vmatmul.mubr.f32.gmra.mrb[0].mxu0 %v2833
        %v2907 = vpop.f32.mrb[0].mxu0
        %v2908 = vadd.f32 0.0, %v2907
        %v2909 = vpop.f32.mrb[0].mxu0
        %v2910 = vadd.f32 0.0, %v2909
        %2911 = vdwg.mxu0
        %v2914 = vrot.slane %v2902, 4
        %v2915 = vrot.slane %v2904, 4
        %v2920 = vrot.slane %v2908, 4
        %v2921 = vrot.slane %v2910, 4
        %v2924 = vld [vmem:[#allocation8] sm:$0xff]
        %v2925 = vld [vmem:[#allocation8 + $0x8] sm:$0xff]
        %v2926 = vld [vmem:[#allocation8 + $0x10] sm:$0xff]
        %v2927 = vld [vmem:[#allocation8 + $0x18] sm:$0xff]
        %v2928 = vld [vmem:[#allocation8 + $0x20] sm:$0xff]
        %v2929 = vld [vmem:[#allocation8 + $0x28] sm:$0xff]
        %v2930 = vld [vmem:[#allocation8 + $0x30] sm:$0xff]
        %v2931 = vld [vmem:[#allocation8 + $0x38] sm:$0xff]
        %v2932 = vld [vmem:[#allocation8 + $0x40] sm:$0xff]
        %v2933 = vld [vmem:[#allocation8 + $0x48] sm:$0xff]
        %v2934 = vld [vmem:[#allocation8 + $0x50] sm:$0xff]
        %v2935 = vld [vmem:[#allocation8 + $0x58] sm:$0xff]
        %v2936 = vld [vmem:[#allocation8 + $0x60] sm:$0xff]
        %v2937 = vld [vmem:[#allocation8 + $0x68] sm:$0xff]
        %v2938 = vld [vmem:[#allocation8 + $0x70] sm:$0xff]
        %v2939 = vld [vmem:[#allocation8 + $0x78] sm:$0xff]
        %v2940 = vld [vmem:[#allocation8 + $0x80] sm:$0xff]
        %v2941 = vld [vmem:[#allocation8 + $0x88] sm:$0xff]
        %v2942 = vld [vmem:[#allocation8 + $0x90] sm:$0xff]
        %v2943 = vld [vmem:[#allocation8 + $0x98] sm:$0xff]
        %v2944 = vld [vmem:[#allocation8 + $0xa0] sm:$0xff]
        %v2945 = vld [vmem:[#allocation8 + $0xa8] sm:$0xff]
        %v2946 = vld [vmem:[#allocation8 + $0xb0] sm:$0xff]
        %v2947 = vld [vmem:[#allocation8 + $0xb8] sm:$0xff]
        %v2948 = vld [vmem:[#allocation8 + $0xc0] sm:$0xff]
        %v2949 = vld [vmem:[#allocation8 + $0xc8] sm:$0xff]
        %v2950 = vld [vmem:[#allocation8 + $0xd0] sm:$0xff]
        %v2951 = vld [vmem:[#allocation8 + $0xd8] sm:$0xff]
        %v2952 = vld [vmem:[#allocation8 + $0xe0] sm:$0xff]
        %v2953 = vld [vmem:[#allocation8 + $0xe8] sm:$0xff]
        %v2954 = vld [vmem:[#allocation8 + $0xf0] sm:$0xff]
        %v2955 = vld [vmem:[#allocation8 + $0xf8] sm:$0xff]
        %v2956 = vld [vmem:[#allocation8 + $0x100] sm:$0xff]
        %v2957 = vld [vmem:[#allocation8 + $0x108] sm:$0xff]
        %v2958 = vld [vmem:[#allocation8 + $0x110] sm:$0xff]
        %v2959 = vld [vmem:[#allocation8 + $0x118] sm:$0xff]
        %v2960 = vld [vmem:[#allocation8 + $0x120] sm:$0xff]
        %v2961 = vld [vmem:[#allocation8 + $0x128] sm:$0xff]
        %v2962 = vld [vmem:[#allocation8 + $0x130] sm:$0xff]
        %v2963 = vld [vmem:[#allocation8 + $0x138] sm:$0xff]
        %v2964 = vld [vmem:[#allocation8 + $0x140] sm:$0xff]
        %v2965 = vld [vmem:[#allocation8 + $0x148] sm:$0xff]
        %v2966 = vld [vmem:[#allocation8 + $0x150] sm:$0xff]
        %v2967 = vld [vmem:[#allocation8 + $0x158] sm:$0xff]
        %v2968 = vld [vmem:[#allocation8 + $0x160] sm:$0xff]
        %v2969 = vld [vmem:[#allocation8 + $0x168] sm:$0xff]
        %v2970 = vld [vmem:[#allocation8 + $0x170] sm:$0xff]
        %v2971 = vld [vmem:[#allocation8 + $0x178] sm:$0xff]
        %v2972 = vld [vmem:[#allocation8 + $0x180] sm:$0xff]
        %v2973 = vld [vmem:[#allocation8 + $0x188] sm:$0xff]
        %v2974 = vld [vmem:[#allocation8 + $0x190] sm:$0xff]
        %v2975 = vld [vmem:[#allocation8 + $0x198] sm:$0xff]
        %v2976 = vld [vmem:[#allocation8 + $0x1a0] sm:$0xff]
        %v2977 = vld [vmem:[#allocation8 + $0x1a8] sm:$0xff]
        %v2978 = vld [vmem:[#allocation8 + $0x1b0] sm:$0xff]
        %v2979 = vld [vmem:[#allocation8 + $0x1b8] sm:$0xff]
        %v2980 = vld [vmem:[#allocation8 + $0x1c0] sm:$0xff]
        %v2981 = vld [vmem:[#allocation8 + $0x1c8] sm:$0xff]
        %v2982 = vld [vmem:[#allocation8 + $0x1d0] sm:$0xff]
        %v2983 = vld [vmem:[#allocation8 + $0x1d8] sm:$0xff]
        %v2984 = vld [vmem:[#allocation8 + $0x1e0] sm:$0xff]
        %v2985 = vld [vmem:[#allocation8 + $0x1e8] sm:$0xff]
        %v2986 = vld [vmem:[#allocation8 + $0x1f0] sm:$0xff]
        %v2987 = vld [vmem:[#allocation8 + $0x1f8] sm:$0xff]
        %v2988 = vld [vmem:[#allocation8 + $0x200] sm:$0xff]
        %v2989 = vld [vmem:[#allocation8 + $0x208] sm:$0xff]
        %v2990 = vld [vmem:[#allocation8 + $0x210] sm:$0xff]
        %v2991 = vld [vmem:[#allocation8 + $0x218] sm:$0xff]
        %v2992 = vld [vmem:[#allocation8 + $0x220] sm:$0xff]
        %v2993 = vld [vmem:[#allocation8 + $0x228] sm:$0xff]
        %v2994 = vld [vmem:[#allocation8 + $0x230] sm:$0xff]
        %v2995 = vld [vmem:[#allocation8 + $0x238] sm:$0xff]
        %v2996 = vld [vmem:[#allocation8 + $0x240] sm:$0xff]
        %v2997 = vld [vmem:[#allocation8 + $0x248] sm:$0xff]
        %v2998 = vld [vmem:[#allocation8 + $0x250] sm:$0xff]
        %v2999 = vld [vmem:[#allocation8 + $0x258] sm:$0xff]
        %v3000 = vld [vmem:[#allocation8 + $0x260] sm:$0xff]
        %v3001 = vld [vmem:[#allocation8 + $0x268] sm:$0xff]
        %v3002 = vld [vmem:[#allocation8 + $0x270] sm:$0xff]
        %v3003 = vld [vmem:[#allocation8 + $0x278] sm:$0xff]
        %v3004 = vld [vmem:[#allocation8 + $0x280] sm:$0xff]
        %v3005 = vld [vmem:[#allocation8 + $0x288] sm:$0xff]
        %v3006 = vld [vmem:[#allocation8 + $0x290] sm:$0xff]
        %v3007 = vld [vmem:[#allocation8 + $0x298] sm:$0xff]
        %v3008 = vld [vmem:[#allocation8 + $0x2a0] sm:$0xff]
        %v3009 = vld [vmem:[#allocation8 + $0x2a8] sm:$0xff]
        %v3010 = vld [vmem:[#allocation8 + $0x2b0] sm:$0xff]
        %v3011 = vld [vmem:[#allocation8 + $0x2b8] sm:$0xff]
        %v3012 = vld [vmem:[#allocation8 + $0x2c0] sm:$0xff]
        %v3013 = vld [vmem:[#allocation8 + $0x2c8] sm:$0xff]
        %v3014 = vld [vmem:[#allocation8 + $0x2d0] sm:$0xff]
        %v3015 = vld [vmem:[#allocation8 + $0x2d8] sm:$0xff]
        %v3016 = vld [vmem:[#allocation8 + $0x2e0] sm:$0xff]
        %v3017 = vld [vmem:[#allocation8 + $0x2e8] sm:$0xff]
        %v3018 = vld [vmem:[#allocation8 + $0x2f0] sm:$0xff]
        %v3019 = vld [vmem:[#allocation8 + $0x2f8] sm:$0xff]
        %v3020 = vld [vmem:[#allocation8 + $0x300] sm:$0xff]
        %v3021 = vld [vmem:[#allocation8 + $0x308] sm:$0xff]
        %v3022 = vld [vmem:[#allocation8 + $0x310] sm:$0xff]
        %v3023 = vld [vmem:[#allocation8 + $0x318] sm:$0xff]
        %v3024 = vld [vmem:[#allocation8 + $0x320] sm:$0xff]
        %v3025 = vld [vmem:[#allocation8 + $0x328] sm:$0xff]
        %v3026 = vld [vmem:[#allocation8 + $0x330] sm:$0xff]
        %v3027 = vld [vmem:[#allocation8 + $0x338] sm:$0xff]
        %v3028 = vld [vmem:[#allocation8 + $0x340] sm:$0xff]
        %v3029 = vld [vmem:[#allocation8 + $0x348] sm:$0xff]
        %v3030 = vld [vmem:[#allocation8 + $0x350] sm:$0xff]
        %v3031 = vld [vmem:[#allocation8 + $0x358] sm:$0xff]
        %v3032 = vld [vmem:[#allocation8 + $0x360] sm:$0xff]
        %v3033 = vld [vmem:[#allocation8 + $0x368] sm:$0xff]
        %v3034 = vld [vmem:[#allocation8 + $0x370] sm:$0xff]
        %v3035 = vld [vmem:[#allocation8 + $0x378] sm:$0xff]
        %v3036 = vld [vmem:[#allocation8 + $0x380] sm:$0xff]
        %v3037 = vld [vmem:[#allocation8 + $0x388] sm:$0xff]
        %v3038 = vld [vmem:[#allocation8 + $0x390] sm:$0xff]
        %v3039 = vld [vmem:[#allocation8 + $0x398] sm:$0xff]
        %v3040 = vld [vmem:[#allocation8 + $0x3a0] sm:$0xff]
        %v3041 = vld [vmem:[#allocation8 + $0x3a8] sm:$0xff]
        %v3042 = vld [vmem:[#allocation8 + $0x3b0] sm:$0xff]
        %v3043 = vld [vmem:[#allocation8 + $0x3b8] sm:$0xff]
        %v3044 = vld [vmem:[#allocation8 + $0x3c0] sm:$0xff]
        %v3045 = vld [vmem:[#allocation8 + $0x3c8] sm:$0xff]
        %v3046 = vld [vmem:[#allocation8 + $0x3d0] sm:$0xff]
        %v3047 = vld [vmem:[#allocation8 + $0x3d8] sm:$0xff]
        %v3048 = vld [vmem:[#allocation8 + $0x3e0] sm:$0xff]
        %v3049 = vld [vmem:[#allocation8 + $0x3e8] sm:$0xff]
        %v3050 = vld [vmem:[#allocation8 + $0x3f0] sm:$0xff]
        %v3051 = vld [vmem:[#allocation8 + $0x3f8] sm:$0xff]
        %v3052 = vld [vmem:[#allocation8 + $0x400] sm:$0xff]
        %v3053 = vld [vmem:[#allocation8 + $0x408] sm:$0xff]
        %v3054 = vld [vmem:[#allocation8 + $0x410] sm:$0xff]
        %v3055 = vld [vmem:[#allocation8 + $0x418] sm:$0xff]
        %v3056 = vld [vmem:[#allocation8 + $0x420] sm:$0xff]
        %v3057 = vld [vmem:[#allocation8 + $0x428] sm:$0xff]
        %v3058 = vld [vmem:[#allocation8 + $0x430] sm:$0xff]
        %v3059 = vld [vmem:[#allocation8 + $0x438] sm:$0xff]
        %v3060 = vld [vmem:[#allocation8 + $0x440] sm:$0xff]
        %v3061 = vld [vmem:[#allocation8 + $0x448] sm:$0xff]
        %v3062 = vld [vmem:[#allocation8 + $0x450] sm:$0xff]
        %v3063 = vld [vmem:[#allocation8 + $0x458] sm:$0xff]
        %v3064 = vld [vmem:[#allocation8 + $0x460] sm:$0xff]
        %v3065 = vld [vmem:[#allocation8 + $0x468] sm:$0xff]
        %v3066 = vld [vmem:[#allocation8 + $0x470] sm:$0xff]
        %v3067 = vld [vmem:[#allocation8 + $0x478] sm:$0xff]
        %v3068 = vld [vmem:[#allocation8 + $0x480] sm:$0xff]
        %v3069 = vld [vmem:[#allocation8 + $0x488] sm:$0xff]
        %v3070 = vld [vmem:[#allocation8 + $0x490] sm:$0xff]
        %v3071 = vld [vmem:[#allocation8 + $0x498] sm:$0xff]
        %v3072 = vld [vmem:[#allocation8 + $0x4a0] sm:$0xff]
        %v3073 = vld [vmem:[#allocation8 + $0x4a8] sm:$0xff]
        %v3074 = vld [vmem:[#allocation8 + $0x4b0] sm:$0xff]
        %v3075 = vld [vmem:[#allocation8 + $0x4b8] sm:$0xff]
        %v3076 = vld [vmem:[#allocation8 + $0x4c0] sm:$0xff]
        %v3077 = vld [vmem:[#allocation8 + $0x4c8] sm:$0xff]
        %v3078 = vld [vmem:[#allocation8 + $0x4d0] sm:$0xff]
        %v3079 = vld [vmem:[#allocation8 + $0x4d8] sm:$0xff]
        %v3080 = vld [vmem:[#allocation8 + $0x4e0] sm:$0xff]
        %v3081 = vld [vmem:[#allocation8 + $0x4e8] sm:$0xff]
        %v3082 = vld [vmem:[#allocation8 + $0x4f0] sm:$0xff]
        %v3083 = vld [vmem:[#allocation8 + $0x4f8] sm:$0xff]
        %v3084 = vld [vmem:[#allocation8 + $0x500] sm:$0xff]
        %v3085 = vld [vmem:[#allocation8 + $0x508] sm:$0xff]
        %v3086 = vld [vmem:[#allocation8 + $0x510] sm:$0xff]
        %v3087 = vld [vmem:[#allocation8 + $0x518] sm:$0xff]
        %v3088 = vld [vmem:[#allocation8 + $0x520] sm:$0xff]
        %v3089 = vld [vmem:[#allocation8 + $0x528] sm:$0xff]
        %v3090 = vld [vmem:[#allocation8 + $0x530] sm:$0xff]
        %v3091 = vld [vmem:[#allocation8 + $0x538] sm:$0xff]
        %v3092 = vld [vmem:[#allocation8 + $0x540] sm:$0xff]
        %v3093 = vld [vmem:[#allocation8 + $0x548] sm:$0xff]
        %v3094 = vld [vmem:[#allocation8 + $0x550] sm:$0xff]
        %v3095 = vld [vmem:[#allocation8 + $0x558] sm:$0xff]
        %v3096 = vld [vmem:[#allocation8 + $0x560] sm:$0xff]
        %v3097 = vld [vmem:[#allocation8 + $0x568] sm:$0xff]
        %v3098 = vld [vmem:[#allocation8 + $0x570] sm:$0xff]
        %v3099 = vld [vmem:[#allocation8 + $0x578] sm:$0xff]
        %v3100 = vld [vmem:[#allocation8 + $0x580] sm:$0xff]
        %v3101 = vld [vmem:[#allocation8 + $0x588] sm:$0xff]
        %v3102 = vld [vmem:[#allocation8 + $0x590] sm:$0xff]
        %v3103 = vld [vmem:[#allocation8 + $0x598] sm:$0xff]
        %v3104 = vld [vmem:[#allocation8 + $0x5a0] sm:$0xff]
        %v3105 = vld [vmem:[#allocation8 + $0x5a8] sm:$0xff]
        %v3106 = vld [vmem:[#allocation8 + $0x5b0] sm:$0xff]
        %v3107 = vld [vmem:[#allocation8 + $0x5b8] sm:$0xff]
        %v3108 = vld [vmem:[#allocation8 + $0x5c0] sm:$0xff]
        %v3109 = vld [vmem:[#allocation8 + $0x5c8] sm:$0xff]
        %v3110 = vld [vmem:[#allocation8 + $0x5d0] sm:$0xff]
        %v3111 = vld [vmem:[#allocation8 + $0x5d8] sm:$0xff]
        %v3112 = vld [vmem:[#allocation8 + $0x5e0] sm:$0xff]
        %v3113 = vld [vmem:[#allocation8 + $0x5e8] sm:$0xff]
        %v3114 = vld [vmem:[#allocation8 + $0x5f0] sm:$0xff]
        %v3115 = vld [vmem:[#allocation8 + $0x5f8] sm:$0xff]
        %v3116 = vld [vmem:[#allocation8 + $0x600] sm:$0xff]
        %v3117 = vld [vmem:[#allocation8 + $0x608] sm:$0xff]
        %v3118 = vld [vmem:[#allocation8 + $0x610] sm:$0xff]
        %v3119 = vld [vmem:[#allocation8 + $0x618] sm:$0xff]
        %v3120 = vld [vmem:[#allocation8 + $0x620] sm:$0xff]
        %v3121 = vld [vmem:[#allocation8 + $0x628] sm:$0xff]
        %v3122 = vld [vmem:[#allocation8 + $0x630] sm:$0xff]
        %v3123 = vld [vmem:[#allocation8 + $0x638] sm:$0xff]
        %v3124 = vld [vmem:[#allocation8 + $0x640] sm:$0xff]
        %v3125 = vld [vmem:[#allocation8 + $0x648] sm:$0xff]
        %v3126 = vld [vmem:[#allocation8 + $0x650] sm:$0xff]
        %v3127 = vld [vmem:[#allocation8 + $0x658] sm:$0xff]
        %v3128 = vld [vmem:[#allocation8 + $0x660] sm:$0xff]
        %v3129 = vld [vmem:[#allocation8 + $0x668] sm:$0xff]
        %v3130 = vld [vmem:[#allocation8 + $0x670] sm:$0xff]
        %v3131 = vld [vmem:[#allocation8 + $0x678] sm:$0xff]
        %v3132 = vld [vmem:[#allocation8 + $0x680] sm:$0xff]
        %v3133 = vld [vmem:[#allocation8 + $0x688] sm:$0xff]
        %v3134 = vld [vmem:[#allocation8 + $0x690] sm:$0xff]
        %v3135 = vld [vmem:[#allocation8 + $0x698] sm:$0xff]
        %v3136 = vld [vmem:[#allocation8 + $0x6a0] sm:$0xff]
        %v3137 = vld [vmem:[#allocation8 + $0x6a8] sm:$0xff]
        %v3138 = vld [vmem:[#allocation8 + $0x6b0] sm:$0xff]
        %v3139 = vld [vmem:[#allocation8 + $0x6b8] sm:$0xff]
        %v3140 = vld [vmem:[#allocation8 + $0x6c0] sm:$0xff]
        %v3141 = vld [vmem:[#allocation8 + $0x6c8] sm:$0xff]
        %v3142 = vld [vmem:[#allocation8 + $0x6d0] sm:$0xff]
        %v3143 = vld [vmem:[#allocation8 + $0x6d8] sm:$0xff]
        %v3144 = vld [vmem:[#allocation8 + $0x6e0] sm:$0xff]
        %v3145 = vld [vmem:[#allocation8 + $0x6e8] sm:$0xff]
        %v3146 = vld [vmem:[#allocation8 + $0x6f0] sm:$0xff]
        %v3147 = vld [vmem:[#allocation8 + $0x6f8] sm:$0xff]
        %v3148 = vld [vmem:[#allocation8 + $0x700] sm:$0xff]
        %v3149 = vld [vmem:[#allocation8 + $0x708] sm:$0xff]
        %v3150 = vld [vmem:[#allocation8 + $0x710] sm:$0xff]
        %v3151 = vld [vmem:[#allocation8 + $0x718] sm:$0xff]
        %v3152 = vld [vmem:[#allocation8 + $0x720] sm:$0xff]
        %v3153 = vld [vmem:[#allocation8 + $0x728] sm:$0xff]
        %v3154 = vld [vmem:[#allocation8 + $0x730] sm:$0xff]
        %v3155 = vld [vmem:[#allocation8 + $0x738] sm:$0xff]
        %v3156 = vld [vmem:[#allocation8 + $0x740] sm:$0xff]
        %v3157 = vld [vmem:[#allocation8 + $0x748] sm:$0xff]
        %v3158 = vld [vmem:[#allocation8 + $0x750] sm:$0xff]
        %v3159 = vld [vmem:[#allocation8 + $0x758] sm:$0xff]
        %v3160 = vld [vmem:[#allocation8 + $0x760] sm:$0xff]
        %v3161 = vld [vmem:[#allocation8 + $0x768] sm:$0xff]
        %v3162 = vld [vmem:[#allocation8 + $0x770] sm:$0xff]
        %v3163 = vld [vmem:[#allocation8 + $0x778] sm:$0xff]
        %v3164 = vld [vmem:[#allocation8 + $0x780] sm:$0xff]
        %v3165 = vld [vmem:[#allocation8 + $0x788] sm:$0xff]
        %v3166 = vld [vmem:[#allocation8 + $0x790] sm:$0xff]
        %v3167 = vld [vmem:[#allocation8 + $0x798] sm:$0xff]
        %v3168 = vld [vmem:[#allocation8 + $0x7a0] sm:$0xff]
        %v3169 = vld [vmem:[#allocation8 + $0x7a8] sm:$0xff]
        %v3170 = vld [vmem:[#allocation8 + $0x7b0] sm:$0xff]
        %v3171 = vld [vmem:[#allocation8 + $0x7b8] sm:$0xff]
        %v3172 = vld [vmem:[#allocation8 + $0x7c0] sm:$0xff]
        %v3173 = vld [vmem:[#allocation8 + $0x7c8] sm:$0xff]
        %v3174 = vld [vmem:[#allocation8 + $0x7d0] sm:$0xff]
        %v3175 = vld [vmem:[#allocation8 + $0x7d8] sm:$0xff]
        %v3176 = vld [vmem:[#allocation8 + $0x7e0] sm:$0xff]
        %v3177 = vld [vmem:[#allocation8 + $0x7e8] sm:$0xff]
        %v3178 = vld [vmem:[#allocation8 + $0x7f0] sm:$0xff]
        %v3179 = vld [vmem:[#allocation8 + $0x7f8] sm:$0xff]
        %v3180 = vld [vmem:[%s12] sm:$0x3]
        %v3182 = vlaneseq
        %v3183 = vshrl.u32 %v3182, 7
        %v3184 = vsub.s32 0, %v3183
        %v3185 = vrot.slane %v3180, %v3184
        %v3186 = vlaneseq
        %v3187 = vshrl.u32 %v3186, 7
        %v3188 = vsub.s32 1, %v3187
        %v3189 = vrot.slane %v3180, %v3188
        %3192 = vmatprep.subr.mxu0 %v2925
        %3193 = vmatpush1.msra.mxu0 %v2924
        %3194 = vmatprep.subr.mxu0 %v2927
        %3195 = vmatpush1.msra.mxu0 %v2926
        %3196 = vmatprep.subr.mxu0 %v2929
        %3197 = vmatpush1.msra.mxu0 %v2928
        %3198 = vmatprep.subr.mxu0 %v2931
        %3199 = vmatpush1.msra.mxu0 %v2930
        %3200 = vmatprep.subr.mxu0 %v2933
        %3201 = vmatpush1.msra.mxu0 %v2932
        %3202 = vmatprep.subr.mxu0 %v2935
        %3203 = vmatpush1.msra.mxu0 %v2934
        %3204 = vmatprep.subr.mxu0 %v2937
        %3205 = vmatpush1.msra.mxu0 %v2936
        %3206 = vmatprep.subr.mxu0 %v2939
        %3207 = vmatpush1.msra.mxu0 %v2938
        %3208 = vmatprep.subr.mxu0 %v2941
        %3209 = vmatpush1.msra.mxu0 %v2940
        %3210 = vmatprep.subr.mxu0 %v2943
        %3211 = vmatpush1.msra.mxu0 %v2942
        %3212 = vmatprep.subr.mxu0 %v2945
        %3213 = vmatpush1.msra.mxu0 %v2944
        %3214 = vmatprep.subr.mxu0 %v2947
        %3215 = vmatpush1.msra.mxu0 %v2946
        %3216 = vmatprep.subr.mxu0 %v2949
        %3217 = vmatpush1.msra.mxu0 %v2948
        %3218 = vmatprep.subr.mxu0 %v2951
        %3219 = vmatpush1.msra.mxu0 %v2950
        %3220 = vmatprep.subr.mxu0 %v2953
        %3221 = vmatpush1.msra.mxu0 %v2952
        %3222 = vmatprep.subr.mxu0 %v2955
        %3223 = vmatpush1.msra.mxu0 %v2954
        %3224 = vmatprep.subr.mxu0 %v2957
        %3225 = vmatpush1.msra.mxu0 %v2956
        %3226 = vmatprep.subr.mxu0 %v2959
        %3227 = vmatpush1.msra.mxu0 %v2958
        %3228 = vmatprep.subr.mxu0 %v2961
        %3229 = vmatpush1.msra.mxu0 %v2960
        %3230 = vmatprep.subr.mxu0 %v2963
        %3231 = vmatpush1.msra.mxu0 %v2962
        %3232 = vmatprep.subr.mxu0 %v2965
        %3233 = vmatpush1.msra.mxu0 %v2964
        %3234 = vmatprep.subr.mxu0 %v2967
        %3235 = vmatpush1.msra.mxu0 %v2966
        %3236 = vmatprep.subr.mxu0 %v2969
        %3237 = vmatpush1.msra.mxu0 %v2968
        %3238 = vmatprep.subr.mxu0 %v2971
        %3239 = vmatpush1.msra.mxu0 %v2970
        %3240 = vmatprep.subr.mxu0 %v2973
        %3241 = vmatpush1.msra.mxu0 %v2972
        %3242 = vmatprep.subr.mxu0 %v2975
        %3243 = vmatpush1.msra.mxu0 %v2974
        %3244 = vmatprep.subr.mxu0 %v2977
        %3245 = vmatpush1.msra.mxu0 %v2976
        %3246 = vmatprep.subr.mxu0 %v2979
        %3247 = vmatpush1.msra.mxu0 %v2978
        %3248 = vmatprep.subr.mxu0 %v2981
        %3249 = vmatpush1.msra.mxu0 %v2980
        %3250 = vmatprep.subr.mxu0 %v2983
        %3251 = vmatpush1.msra.mxu0 %v2982
        %3252 = vmatprep.subr.mxu0 %v2985
        %3253 = vmatpush1.msra.mxu0 %v2984
        %3254 = vmatprep.subr.mxu0 %v2987
        %3255 = vmatpush1.msra.mxu0 %v2986
        %3256 = vmatprep.mubr.f32.mxu0 %v2904
        %3257 = vmatmul.mubr.f32.gmra.mrb[0].mxu0 %v2902
        %v3258 = vpop.f32.mrb[0].mxu0
        %v3259 = vadd.f32 %v3185, %v3258
        %v3260 = vpop.f32.mrb[0].mxu0
        %v3261 = vadd.f32 %v3189, %v3260
        %3262 = vdwg.mxu0
        %3263 = vmatprep.subr.mxu0 %v2989
        %3264 = vmatpush1.msra.mxu0 %v2988
        %3265 = vmatprep.subr.mxu0 %v2991
        %3266 = vmatpush1.msra.mxu0 %v2990
        %3267 = vmatprep.subr.mxu0 %v2993
        %3268 = vmatpush1.msra.mxu0 %v2992
        %3269 = vmatprep.subr.mxu0 %v2995
        %3270 = vmatpush1.msra.mxu0 %v2994
        %3271 = vmatprep.subr.mxu0 %v2997
        %3272 = vmatpush1.msra.mxu0 %v2996
        %3273 = vmatprep.subr.mxu0 %v2999
        %3274 = vmatpush1.msra.mxu0 %v2998
        %3275 = vmatprep.subr.mxu0 %v3001
        %3276 = vmatpush1.msra.mxu0 %v3000
        %3277 = vmatprep.subr.mxu0 %v3003
        %3278 = vmatpush1.msra.mxu0 %v3002
        %3279 = vmatprep.subr.mxu0 %v3005
        %3280 = vmatpush1.msra.mxu0 %v3004
        %3281 = vmatprep.subr.mxu0 %v3007
        %3282 = vmatpush1.msra.mxu0 %v3006
        %3283 = vmatprep.subr.mxu0 %v3009
        %3284 = vmatpush1.msra.mxu0 %v3008
        %3285 = vmatprep.subr.mxu0 %v3011
        %3286 = vmatpush1.msra.mxu0 %v3010
        %3287 = vmatprep.subr.mxu0 %v3013
        %3288 = vmatpush1.msra.mxu0 %v3012
        %3289 = vmatprep.subr.mxu0 %v3015
        %3290 = vmatpush1.msra.mxu0 %v3014
        %3291 = vmatprep.subr.mxu0 %v3017
        %3292 = vmatpush1.msra.mxu0 %v3016
        %3293 = vmatprep.subr.mxu0 %v3019
        %3294 = vmatpush1.msra.mxu0 %v3018
        %3295 = vmatprep.subr.mxu0 %v3021
        %3296 = vmatpush1.msra.mxu0 %v3020
        %3297 = vmatprep.subr.mxu0 %v3023
        %3298 = vmatpush1.msra.mxu0 %v3022
        %3299 = vmatprep.subr.mxu0 %v3025
        %3300 = vmatpush1.msra.mxu0 %v3024
        %3301 = vmatprep.subr.mxu0 %v3027
        %3302 = vmatpush1.msra.mxu0 %v3026
        %3303 = vmatprep.subr.mxu0 %v3029
        %3304 = vmatpush1.msra.mxu0 %v3028
        %3305 = vmatprep.subr.mxu0 %v3031
        %3306 = vmatpush1.msra.mxu0 %v3030
        %3307 = vmatprep.subr.mxu0 %v3033
        %3308 = vmatpush1.msra.mxu0 %v3032
        %3309 = vmatprep.subr.mxu0 %v3035
        %3310 = vmatpush1.msra.mxu0 %v3034
        %3311 = vmatprep.subr.mxu0 %v3037
        %3312 = vmatpush1.msra.mxu0 %v3036
        %3313 = vmatprep.subr.mxu0 %v3039
        %3314 = vmatpush1.msra.mxu0 %v3038
        %3315 = vmatprep.subr.mxu0 %v3041
        %3316 = vmatpush1.msra.mxu0 %v3040
        %3317 = vmatprep.subr.mxu0 %v3043
        %3318 = vmatpush1.msra.mxu0 %v3042
        %3319 = vmatprep.subr.mxu0 %v3045
        %3320 = vmatpush1.msra.mxu0 %v3044
        %3321 = vmatprep.subr.mxu0 %v3047
        %3322 = vmatpush1.msra.mxu0 %v3046
        %3323 = vmatprep.subr.mxu0 %v3049
        %3324 = vmatpush1.msra.mxu0 %v3048
        %3325 = vmatprep.subr.mxu0 %v3051
        %3326 = vmatpush1.msra.mxu0 %v3050
        %3327 = vmatprep.mubr.f32.mxu0 %v2915
        %3328 = vmatmul.mubr.f32.gmra.mrb[0].mxu0 %v2914
        %v3329 = vpop.f32.mrb[0].mxu0
        %v3330 = vadd.f32 %v3259, %v3329
        %v3331 = vpop.f32.mrb[0].mxu0
        %v3332 = vadd.f32 %v3261, %v3331
        %3333 = vdwg.mxu0
        %3334 = vmatprep.subr.mxu0 %v3053
        %3335 = vmatpush1.msra.mxu0 %v3052
        %3336 = vmatprep.subr.mxu0 %v3055
        %3337 = vmatpush1.msra.mxu0 %v3054
        %3338 = vmatprep.subr.mxu0 %v3057
        %3339 = vmatpush1.msra.mxu0 %v3056
        %3340 = vmatprep.subr.mxu0 %v3059
        %3341 = vmatpush1.msra.mxu0 %v3058
        %3342 = vmatprep.subr.mxu0 %v3061
        %3343 = vmatpush1.msra.mxu0 %v3060
        %3344 = vmatprep.subr.mxu0 %v3063
        %3345 = vmatpush1.msra.mxu0 %v3062
        %3346 = vmatprep.subr.mxu0 %v3065
        %3347 = vmatpush1.msra.mxu0 %v3064
        %3348 = vmatprep.subr.mxu0 %v3067
        %3349 = vmatpush1.msra.mxu0 %v3066
        %3350 = vmatprep.subr.mxu0 %v3069
        %3351 = vmatpush1.msra.mxu0 %v3068
        %3352 = vmatprep.subr.mxu0 %v3071
        %3353 = vmatpush1.msra.mxu0 %v3070
        %3354 = vmatprep.subr.mxu0 %v3073
        %3355 = vmatpush1.msra.mxu0 %v3072
        %3356 = vmatprep.subr.mxu0 %v3075
        %3357 = vmatpush1.msra.mxu0 %v3074
        %3358 = vmatprep.subr.mxu0 %v3077
        %3359 = vmatpush1.msra.mxu0 %v3076
        %3360 = vmatprep.subr.mxu0 %v3079
        %3361 = vmatpush1.msra.mxu0 %v3078
        %3362 = vmatprep.subr.mxu0 %v3081
        %3363 = vmatpush1.msra.mxu0 %v3080
        %3364 = vmatprep.subr.mxu0 %v3083
        %3365 = vmatpush1.msra.mxu0 %v3082
        %3366 = vmatprep.subr.mxu0 %v3085
        %3367 = vmatpush1.msra.mxu0 %v3084
        %3368 = vmatprep.subr.mxu0 %v3087
        %3369 = vmatpush1.msra.mxu0 %v3086
        %3370 = vmatprep.subr.mxu0 %v3089
        %3371 = vmatpush1.msra.mxu0 %v3088
        %3372 = vmatprep.subr.mxu0 %v3091
        %3373 = vmatpush1.msra.mxu0 %v3090
        %3374 = vmatprep.subr.mxu0 %v3093
        %3375 = vmatpush1.msra.mxu0 %v3092
        %3376 = vmatprep.subr.mxu0 %v3095
        %3377 = vmatpush1.msra.mxu0 %v3094
        %3378 = vmatprep.subr.mxu0 %v3097
        %3379 = vmatpush1.msra.mxu0 %v3096
        %3380 = vmatprep.subr.mxu0 %v3099
        %3381 = vmatpush1.msra.mxu0 %v3098
        %3382 = vmatprep.subr.mxu0 %v3101
        %3383 = vmatpush1.msra.mxu0 %v3100
        %3384 = vmatprep.subr.mxu0 %v3103
        %3385 = vmatpush1.msra.mxu0 %v3102
        %3386 = vmatprep.subr.mxu0 %v3105
        %3387 = vmatpush1.msra.mxu0 %v3104
        %3388 = vmatprep.subr.mxu0 %v3107
        %3389 = vmatpush1.msra.mxu0 %v3106
        %3390 = vmatprep.subr.mxu0 %v3109
        %3391 = vmatpush1.msra.mxu0 %v3108
        %3392 = vmatprep.subr.mxu0 %v3111
        %3393 = vmatpush1.msra.mxu0 %v3110
        %3394 = vmatprep.subr.mxu0 %v3113
        %3395 = vmatpush1.msra.mxu0 %v3112
        %3396 = vmatprep.subr.mxu0 %v3115
        %3397 = vmatpush1.msra.mxu0 %v3114
        %3398 = vmatprep.mubr.f32.mxu0 %v2910
        %3399 = vmatmul.mubr.f32.gmra.mrb[0].mxu0 %v2908
        %v3400 = vpop.f32.mrb[0].mxu0
        %v3401 = vadd.f32 %v3330, %v3400
        %v3402 = vpop.f32.mrb[0].mxu0
        %v3403 = vadd.f32 %v3332, %v3402
        %3404 = vdwg.mxu0
        %3405 = vmatprep.subr.mxu0 %v3117
        %3406 = vmatpush1.msra.mxu0 %v3116
        %3407 = vmatprep.subr.mxu0 %v3119
        %3408 = vmatpush1.msra.mxu0 %v3118
        %3409 = vmatprep.subr.mxu0 %v3121
        %3410 = vmatpush1.msra.mxu0 %v3120
        %3411 = vmatprep.subr.mxu0 %v3123
        %3412 = vmatpush1.msra.mxu0 %v3122
        %3413 = vmatprep.subr.mxu0 %v3125
        %3414 = vmatpush1.msra.mxu0 %v3124
        %3415 = vmatprep.subr.mxu0 %v3127
        %3416 = vmatpush1.msra.mxu0 %v3126
        %3417 = vmatprep.subr.mxu0 %v3129
        %3418 = vmatpush1.msra.mxu0 %v3128
        %3419 = vmatprep.subr.mxu0 %v3131
        %3420 = vmatpush1.msra.mxu0 %v3130
        %3421 = vmatprep.subr.mxu0 %v3133
        %3422 = vmatpush1.msra.mxu0 %v3132
        %3423 = vmatprep.subr.mxu0 %v3135
        %3424 = vmatpush1.msra.mxu0 %v3134
        %3425 = vmatprep.subr.mxu0 %v3137
        %3426 = vmatpush1.msra.mxu0 %v3136
        %3427 = vmatprep.subr.mxu0 %v3139
        %3428 = vmatpush1.msra.mxu0 %v3138
        %3429 = vmatprep.subr.mxu0 %v3141
        %3430 = vmatpush1.msra.mxu0 %v3140
        %3431 = vmatprep.subr.mxu0 %v3143
        %3432 = vmatpush1.msra.mxu0 %v3142
        %3433 = vmatprep.subr.mxu0 %v3145
        %3434 = vmatpush1.msra.mxu0 %v3144
        %3435 = vmatprep.subr.mxu0 %v3147
        %3436 = vmatpush1.msra.mxu0 %v3146
        %3437 = vmatprep.subr.mxu0 %v3149
        %3438 = vmatpush1.msra.mxu0 %v3148
        %3439 = vmatprep.subr.mxu0 %v3151
        %3440 = vmatpush1.msra.mxu0 %v3150
        %3441 = vmatprep.subr.mxu0 %v3153
        %3442 = vmatpush1.msra.mxu0 %v3152
        %3443 = vmatprep.subr.mxu0 %v3155
        %3444 = vmatpush1.msra.mxu0 %v3154
        %3445 = vmatprep.subr.mxu0 %v3157
        %3446 = vmatpush1.msra.mxu0 %v3156
        %3447 = vmatprep.subr.mxu0 %v3159
        %3448 = vmatpush1.msra.mxu0 %v3158
        %3449 = vmatprep.subr.mxu0 %v3161
        %3450 = vmatpush1.msra.mxu0 %v3160
        %3451 = vmatprep.subr.mxu0 %v3163
        %3452 = vmatpush1.msra.mxu0 %v3162
        %3453 = vmatprep.subr.mxu0 %v3165
        %3454 = vmatpush1.msra.mxu0 %v3164
        %3455 = vmatprep.subr.mxu0 %v3167
        %3456 = vmatpush1.msra.mxu0 %v3166
        %3457 = vmatprep.subr.mxu0 %v3169
        %3458 = vmatpush1.msra.mxu0 %v3168
        %3459 = vmatprep.subr.mxu0 %v3171
        %3460 = vmatpush1.msra.mxu0 %v3170
        %3461 = vmatprep.subr.mxu0 %v3173
        %3462 = vmatpush1.msra.mxu0 %v3172
        %3463 = vmatprep.subr.mxu0 %v3175
        %3464 = vmatpush1.msra.mxu0 %v3174
        %3465 = vmatprep.subr.mxu0 %v3177
        %3466 = vmatpush1.msra.mxu0 %v3176
        %3467 = vmatprep.subr.mxu0 %v3179
        %3468 = vmatpush1.msra.mxu0 %v3178
        %3469 = vmatprep.mubr.f32.mxu0 %v2921
        %3470 = vmatmul.mubr.f32.gmra.mrb[0].mxu0 %v2920
        %v3471 = vpop.f32.mrb[0].mxu0
        %v3472 = vadd.f32 %v3401, %v3471
        %v3473 = vpop.f32.mrb[0].mxu0
        %v3474 = vadd.f32 %v3403, %v3473
        %3475 = vdwg.mxu0
        %v3476 = vmul.f32 %v3472, 0.2
        %v3477 = vmul.f32 %v3474, 0.2
        %v3478 = vmax.f32 %v3472, %v3476
        %v3479 = vmax.f32 %v3474, %v3477
        %v3480 = vld [vmem:[%s13] sm:$0xff]
        %v3482 = vcombine.high %v3480, %v3480
        %v3484 = vmul.f32 %v3478, %v3480
        %v3485 = vmul.f32 %v3479, %v3482
        %vm3486 = vcmask 1043456
        %v3487 = vsel %vm3486, %v3484, 0.0
        %v3488 = vsel %vm3486, %v3485, 0.0
        %v3489 = vadd.f32 %v3487, %v3488
        %3490 = vadd.xlane.f32.xlu0 %v3489
        %v3491 = vpop.xlane.xlu0 %3490
        %v3492 = vsel %vm3486, %v3491, 0.0
        %v3493 = vrot.slane %v3492, 4
        %v3494 = vadd.f32 %v3492, %v3493
        %v3495 = vrot.slane %v3494, 2
        %v3496 = vadd.f32 %v3494, %v3495
        %v3497 = vrot.slane %v3496, 1
        %v3498 = vadd.f32 %v3496, %v3497
        %v3499 = vld [vmem:[#allocation2] sm:$0x1]
        %v3500 = vadd.f32 %v3498, %v3499
        %v3501 = vmul.f32 %v3500, 0.2
        %v3502 = vmax.f32 %v3500, %v3501
        %vm3503 = vcmask 0
        %3504 = vst.msk [vmem:[%s551] sm:$0x1] %vm3503, %v3502
        %p3505 = scmp.lt.s32.totalorder %s31, 1
        %s3506 = scalar_select %p3505, %s31, 1
        %s3507 = scalar_lea.vmem %s15, %s3506
        // Predicated region
        $region97: #{discriminator_forward.1} parent=79 // pred_check
          %p3508 = pneg %p369
        $region98: #{discriminator_forward.1} parent=79 // pred_check_branch
          %3510 = sbr.rel (%p3508) target = $region100
        $region99: #{discriminator_forward.1} parent=79 // pred_region
          _
        $region100: #{discriminator_forward.1} parent=79 // pred_fallthru
          _
      $region80: #{discriminator_forward.1} parent=5 // pred_fallthru
        _
      %p3511 = scmp.le.s32.totalorder 2, %s26
      // Predicated region
      $region101: #{discriminator_forward.1} parent=5 // pred_check
        %p3512 = pneg %p3511
      $region102: #{discriminator_forward.1} parent=5 // pred_check_branch
        %3514 = sbr.rel (%p3512) target = $region104
      $region103: #{discriminator_forward.1} parent=5 // pred_region
        %s3515 = ssub.s32 %s26, 2
        // Predicated region
        $region105: #{discriminator_forward.1} parent=103 // pred_check
          %p3516 = pneg %p375
        $region106: #{discriminator_forward.1} parent=103 // pred_check_branch
          %3518 = sbr.rel (%p3516) target = $region108
        $region107: #{discriminator_forward.1} parent=103 // pred_region
          %p3519 = scmp.lt.s32.totalorder %s32, 1
          %s3520 = scalar_select %p3519, %s32, 1
          %s3521 = scalar_lea.vmem %s15, %s3520
        $region108: #{discriminator_forward.1} parent=103 // pred_fallthru
          _
      $region104: #{discriminator_forward.1} parent=5 // pred_fallthru
        _
    $region6: #{discriminator_forward.1} parent=1 // loop_footer
      %s30 = sadd.s32 1, %s26
    $region7: #{discriminator_forward.1} parent=1 // loop_footer_branch
      %25 = sbr.rel target = $region3
    $region8: #{discriminator_forward.1} parent=1 // loop_exit
      _
    %3522 = vsyncpa [#allocation4], 1
    %s3523 = scalar_lea.sflag [#allocation4], 1
    %3524 = vsyncpa %s3523, 1
    %3525 = vsyncpa [#allocation6], 1
    %3526 = vsyncpa [#allocation9], 1

</llo_original>
